<compile_context>
chip_gen: v7x
topology: tpu7x:2x2x1
jax: 0.10.0
libtpu: 0.0.40
codegen_flags: <defaults>
</compile_context>

<pallas_src>
import functools

import jax
import jax.numpy as jnp
import numpy as np
from jax import lax
from jax.experimental import pallas as pl
from jax.experimental.pallas import tpu as pltpu

RNN_IN = 256     # self._rnn_input_size
RNN_OUT = 128    # self._rnn_output_size
HIDDEN = 256     # hidden_size
GROUP = 8        # LSTM unroll / block-store group size (one sublane tile)


def _sigmoid(x):
    # Single-EUP sigmoid: sigmoid(x) == 0.5 * tanh(0.5 * x) + 0.5 (exact identity).
    return 0.5 * jnp.tanh(0.5 * x) + 0.5


def _silu(x):
    return x * _sigmoid(x)


def _dot(a, b):
    return jnp.dot(a, b, preferred_element_type=jnp.float32)


def _model_kernel(
    # inputs
    x_ref,
    enc_w_ref, enc_b_ref,
    wih_ref, whh_ref, bg_ref,                  # gate order [i, f, o, g], bias pre-summed
    lin_w_ref, lin_b_ref, lin2_w_ref, lin2_b_ref,
    h1_w_ref, h1_b_ref,                        # fused actor|critic hidden layer 1
    h2a_w_ref, h2a_b_ref, h2b_w_ref, h2b_b_ref,  # head-2 split into two dense 256^2
    outa_w_ref, outb_w_ref, out_b_ref,         # per-head lane-padded final projection
    h0_ref, c0_ref,
    # outputs
    fused_ref, hT_ref, cT_ref,
    # scratch
    xg_ref, x2_ref,
):
    T = x_ref.shape[0]
    H = RNN_OUT
    hsz = HIDDEN

    # ---- encoder + SiLU :  (T, I) @ (I, 256) ----
    enc = _silu(_dot(x_ref[...], enc_w_ref[...]) + enc_b_ref[...])

    # ---- input-to-hidden gate pre-activations for all steps: (T, 4H) ----
    xg_ref[...] = _dot(enc, wih_ref[...]) + bg_ref[...]

    # ---- sequential LSTM recurrence (batch = 1), gate order [i, f, o, g] ----
    def cell(xg_row, h, c):
        # TODO(synk): MXU weight residency for w_hh (matmul_push_rhs et al.).
        g = xg_row + _dot(h, whh_ref[...])          # (1, 4H)
        s = _sigmoid(g[:, 0:3 * H])                 # one wide tanh-sigmoid: i|f|o
        i_g = s[:, 0:H]
        f_g = s[:, H:2 * H]
        o_g = s[:, 2 * H:3 * H]
        g_g = jnp.tanh(g[:, 3 * H:4 * H])           # one tanh: g
        c_new = f_g * c + i_g * g_g
        h_new = o_g * jnp.tanh(c_new)
        return h_new, c_new

    def lstm_group(base, n, h, c):
        # One (n, 4H) block load; the per-row views below should lower to vreg
        # sublane selects (XLU), not per-row VMEM reloads.
        xg_blk = xg_ref[pl.ds(base, n), :]
        hs = []
        for j in range(n):                          # static unroll
            h, c = cell(xg_blk[j:j + 1, :], h, c)
            hs.append(h)
        h_blk = jnp.concatenate(hs, axis=0)         # (n, H)
        # Fused per-group trunk: T-parallel matmuls issued inside the loop body
        # so they can hide under the next group's serial recurrence bubbles.
        x1 = _silu(_dot(h_blk, lin_w_ref[...]) + lin_b_ref[...])     # (n, 256)
        x2 = _silu(_dot(x1, lin2_w_ref[...]) + lin2_b_ref[...])      # (n, 256)
        x2_ref[pl.ds(base, n), :] = x2
        return h, c

    n_groups = T // GROUP
    rem = T - n_groups * GROUP

    def group_body(gidx, carry):
        h, c = carry
        base = pl.multiple_of(gidx * GROUP, GROUP)
        return lstm_group(base, GROUP, h, c)

    carry = (h0_ref[...], c0_ref[...])
    if n_groups > 0:
        unroll = n_groups if n_groups <= 4 else 2   # cross-group scheduler window
        carry = lax.fori_loop(0, n_groups, group_body, carry, unroll=unroll)
    h, c = carry

    if rem > 0:                                     # static remainder (< 8 steps)
        h, c = lstm_group(n_groups * GROUP, rem, h, c)

    hT_ref[...] = h
    cT_ref[...] = c

    # ---- fused actor + critic heads (T-parallel, wide matmuls) ----
    x2 = x2_ref[...]                                                  # (T, 256)
    y1 = _silu(_dot(x2, h1_w_ref[...]) + h1_b_ref[...])               # (T, 512)
    y2a = _silu(_dot(y1[:, 0:hsz], h2a_w_ref[...]) + h2a_b_ref[...])  # (T, 256)
    y2b = _silu(_dot(y1[:, hsz:2 * hsz], h2b_w_ref[...]) + h2b_b_ref[...])
    fused_ref[...] = (_dot(y2a, outa_w_ref[...]) + _dot(y2b, outb_w_ref[...])
                      + out_b_ref[...])                               # (T, OUT_PAD)


def _reorder_gates(a):
    """Reorder last-axis gate blocks from PyTorch [i,f,g,o] to kernel [i,f,o,g]."""
    i, f, g, o = jnp.split(a, 4, axis=-1)
    return jnp.concatenate([i, f, o, g], axis=-1)


def lstm_actor_critic_forward(x, hidden, params, output_size):
    """Returns (p, v, (h_n, c_n)) with the same shapes as the PyTorch module:
       p: (T, 1, output_size), v: (T, 1, 1), h_n/c_n: (1, 1, 128)."""
    h0, c0 = hidden
    T = x.shape[0]
    hs = HIDDEN
    out_pad = max(128, -(-(output_size + 1) // 128) * 128)

    # ---- host-side weight plumbing (layout only; math unchanged) ----
    w_ih = _reorder_gates(params["w_ih"])
    w_hh = _reorder_gates(params["w_hh"])
    b_gates = _reorder_gates(params["b_ih"] + params["b_hh"])

    # fused head layer 1: shared input x2 -> [actor | critic]
    head1_w = jnp.concatenate([params["ah_w"], params["ch_w"]], axis=1)    # (256, 512)
    head1_b = jnp.concatenate([params["ah_b"], params["ch_b"]], axis=1)    # (1, 512)

    # per-head final projection, lane-padded: actor cols [0:out), critic col out
    outa_w = jnp.zeros((hs, out_pad), jnp.float32)
    outa_w = outa_w.at[:, 0:output_size].set(params["act_w"])
    outb_w = jnp.zeros((hs, out_pad), jnp.float32)
    outb_w = outb_w.at[:, output_size:output_size + 1].set(params["cr_w"])
    out_b = jnp.zeros((1, out_pad), jnp.float32)
    out_b = out_b.at[:, 0:output_size].set(params["act_b"])
    out_b = out_b.at[:, output_size:output_size + 1].set(params["cr_b"])

    inputs = (
        x,
        params["enc_w"], params["enc_b"],
        w_ih, w_hh, b_gates,
        params["lin_w"], params["lin_b"], params["lin2_w"], params["lin2_b"],
        head1_w, head1_b,
        params["ah2_w"], params["ah2_b"], params["ch2_w"], params["ch2_b"],
        outa_w, outb_w, out_b,
        h0.reshape(1, RNN_OUT), c0.reshape(1, RNN_OUT),
    )

    # size the VMEM request from the actual footprint; cap at 60% of this
    # chip's per-core VMEM (fallback: assume v7x's 64 MiB, the smallest)
    footprint = sum(int(np.prod(a.shape)) * jnp.dtype(a.dtype).itemsize
                    for a in inputs)
    footprint += T * out_pad * 4 + 2 * RNN_OUT * 4                  # outputs
    footprint += T * 4 * RNN_OUT * 4 + T * HIDDEN * 4               # scratch
    try:
        vmem_cap = int(pltpu.get_tpu_info().vmem_capacity_bytes)
    except Exception:
        vmem_cap = 64 << 20
    vmem_limit = int(min(int(0.6 * vmem_cap), max(8 << 20, 2 * footprint)))

    vmem_spec = pl.BlockSpec(memory_space=pltpu.MemorySpace.VMEM)

    fused, h_n, c_n = pl.pallas_call(
        _model_kernel,
        out_shape=(
            jax.ShapeDtypeStruct((T, out_pad), jnp.float32),
            jax.ShapeDtypeStruct((1, RNN_OUT), jnp.float32),
            jax.ShapeDtypeStruct((1, RNN_OUT), jnp.float32),
        ),
        in_specs=[vmem_spec] * len(inputs),
        out_specs=(vmem_spec, vmem_spec, vmem_spec),
        scratch_shapes=[
            pltpu.VMEM((T, 4 * RNN_OUT), jnp.float32),   # precomputed input gates
            pltpu.VMEM((T, HIDDEN), jnp.float32),        # fused trunk output x2
        ],
        compiler_params=pltpu.CompilerParams(vmem_limit_bytes=vmem_limit),
    )(*inputs)

    p = fused[:, 0:output_size].reshape(T, 1, output_size)
    v = fused[:, output_size:output_size + 1].reshape(T, 1, 1)
    return (p, v, (h_n.reshape(1, 1, RNN_OUT), c_n.reshape(1, 1, RNN_OUT)))


# ----------------------------------------------------------------------------
# Deterministic parameter construction (shapes from the module's __init__).
# Linear weights: Xavier-normal, biases zero (weights_init_).  LSTM params:
# PyTorch-default uniform(-1/sqrt(H), 1/sqrt(H)).  Gate order i,f,g,o.
# ----------------------------------------------------------------------------
def make_params(key, input_size, output_size, hidden_size=HIDDEN):
    ks = jax.random.split(key, 16)

    def xavier(k, fan_in, fan_out):
        std = np.sqrt(2.0 / (fan_in + fan_out))
        # stored transposed: (in_features, out_features)
        return std * jax.random.normal(k, (fan_in, fan_out), jnp.float32)

    def zeros_b(n):
        return jnp.zeros((1, n), jnp.float32)

    bound = 1.0 / np.sqrt(RNN_OUT)

    def lstm_u(k, shape):
        return jax.random.uniform(k, shape, jnp.float32, -bound, bound)

    params = dict(
        enc_w=xavier(ks[0], input_size, RNN_IN), enc_b=zeros_b(RNN_IN),
        # LSTM weights transposed: (in, 4H) and (H, 4H); gate order i,f,g,o
        w_ih=lstm_u(ks[1], (RNN_IN, 4 * RNN_OUT)),
        w_hh=lstm_u(ks[2], (RNN_OUT, 4 * RNN_OUT)),
        b_ih=lstm_u(ks[3], (1, 4 * RNN_OUT)),
        b_hh=lstm_u(ks[4], (1, 4 * RNN_OUT)),
        lin_w=xavier(ks[5], RNN_OUT, hidden_size), lin_b=zeros_b(hidden_size),
        lin2_w=xavier(ks[6], hidden_size, hidden_size), lin2_b=zeros_b(hidden_size),
        ah_w=xavier(ks[7], hidden_size, hidden_size), ah_b=zeros_b(hidden_size),
        ah2_w=xavier(ks[8], hidden_size, hidden_size), ah2_b=zeros_b(hidden_size),
        act_w=xavier(ks[9], hidden_size, output_size), act_b=zeros_b(output_size),
        ch_w=xavier(ks[10], hidden_size, hidden_size), ch_b=zeros_b(hidden_size),
        ch2_w=xavier(ks[11], hidden_size, hidden_size), ch2_b=zeros_b(hidden_size),
        cr_w=xavier(ks[12], hidden_size, 1), cr_b=zeros_b(1),
    )
    return params


# ----------------------------------------------------------------------------
# Pure-JAX reference (PyTorch semantics, original gate order / separate heads).
# ----------------------------------------------------------------------------
def reference_forward(x, hidden, params, output_size):
    h, c = hidden[0].reshape(1, RNN_OUT), hidden[1].reshape(1, RNN_OUT)

    def silu(z):
        return z * jax.nn.sigmoid(z)

    enc = silu(x @ params["enc_w"] + params["enc_b"])
    xg = enc @ params["w_ih"] + params["b_ih"] + params["b_hh"]
    H = RNN_OUT
    hs = []
    for t in range(x.shape[0]):
        g = xg[t:t + 1] + h @ params["w_hh"]
        i_g = jax.nn.sigmoid(g[:, 0:H])
        f_g = jax.nn.sigmoid(g[:, H:2 * H])
        g_g = jnp.tanh(g[:, 2 * H:3 * H])
        o_g = jax.nn.sigmoid(g[:, 3 * H:4 * H])
        c = f_g * c + i_g * g_g
        h = o_g * jnp.tanh(c)
        hs.append(h)
    hall = jnp.concatenate(hs, axis=0)
    x1 = silu(hall @ params["lin_w"] + params["lin_b"])
    x2 = silu(x1 @ params["lin2_w"] + params["lin2_b"])
    pa = silu(x2 @ params["ah_w"] + params["ah_b"])
    pa = silu(pa @ params["ah2_w"] + params["ah2_b"])
    p = pa @ params["act_w"] + params["act_b"]
    va = silu(x2 @ params["ch_w"] + params["ch_b"])
    va = silu(va @ params["ch2_w"] + params["ch2_b"])
    v = va @ params["cr_w"] + params["cr_b"]
    return p, v, h, c


if __name__ == "__main__":
    INPUT_SIZE = 32
    OUTPUT_SIZE = 16

    key = jax.random.PRNGKey(0)
    k_x, k_h, k_c, k_p = jax.random.split(key, 4)

    params = make_params(k_p, INPUT_SIZE, OUTPUT_SIZE)
    h0 = jax.random.normal(k_h, (1, 1, RNN_OUT), jnp.float32) * 0.1
    c0 = jax.random.normal(k_c, (1, 1, RNN_OUT), jnp.float32) * 0.1

    fwd = functools.partial(lstm_actor_critic_forward, output_size=OUTPUT_SIZE)

    # T=8: single full group; T=21: remainder path; T=40: dynamic fori (unroll=2).
    for T in (8, 21, 40):
        kx = jax.random.fold_in(k_x, T)
        x = jax.random.normal(kx, (T, INPUT_SIZE), jnp.float32)

        p, v, (h_n, c_n) = fwd(x, (h0, c0), params)
        jax.block_until_ready((p, v, h_n, c_n))

        p_ref, v_ref, h_ref, c_ref = reference_forward(x, (h0, c0), params, OUTPUT_SIZE)
        np.testing.assert_allclose(np.asarray(p[:, 0, :]), np.asarray(p_ref),
                                   rtol=1e-3, atol=1e-3)
        np.testing.assert_allclose(np.asarray(v[:, 0, :]), np.asarray(v_ref),
                                   rtol=1e-3, atol=1e-3)
        np.testing.assert_allclose(np.asarray(h_n[0]), np.asarray(h_ref),
                                   rtol=1e-3, atol=1e-3)
        np.testing.assert_allclose(np.asarray(c_n[0]), np.asarray(c_ref),
                                   rtol=1e-3, atol=1e-3)

        assert p.shape == (T, 1, OUTPUT_SIZE) and v.shape == (T, 1, 1)
        assert h_n.shape == (1, 1, RNN_OUT) and c_n.shape == (1, 1, RNN_OUT)

    print("KERNEL_OK")
</pallas_src>

<mosaic_0001>
module attributes {stable_mosaic.version = 11 : i64} {
  func.func @_model_kernel(%arg0: memref<8x32xf32, #tpu.memory_space<vmem>>, %arg1: memref<32x256xf32, #tpu.memory_space<vmem>>, %arg2: memref<1x256xf32, #tpu.memory_space<vmem>>, %arg3: memref<256x512xf32, #tpu.memory_space<vmem>>, %arg4: memref<128x512xf32, #tpu.memory_space<vmem>>, %arg5: memref<1x512xf32, #tpu.memory_space<vmem>>, %arg6: memref<128x256xf32, #tpu.memory_space<vmem>>, %arg7: memref<1x256xf32, #tpu.memory_space<vmem>>, %arg8: memref<256x256xf32, #tpu.memory_space<vmem>>, %arg9: memref<1x256xf32, #tpu.memory_space<vmem>>, %arg10: memref<256x512xf32, #tpu.memory_space<vmem>>, %arg11: memref<1x512xf32, #tpu.memory_space<vmem>>, %arg12: memref<256x256xf32, #tpu.memory_space<vmem>>, %arg13: memref<1x256xf32, #tpu.memory_space<vmem>>, %arg14: memref<256x256xf32, #tpu.memory_space<vmem>>, %arg15: memref<1x256xf32, #tpu.memory_space<vmem>>, %arg16: memref<256x128xf32, #tpu.memory_space<vmem>>, %arg17: memref<256x128xf32, #tpu.memory_space<vmem>>, %arg18: memref<1x128xf32, #tpu.memory_space<vmem>>, %arg19: memref<1x128xf32, #tpu.memory_space<vmem>>, %arg20: memref<1x128xf32, #tpu.memory_space<vmem>>, %arg21: memref<8x128xf32, #tpu.memory_space<vmem>>, %arg22: memref<1x128xf32, #tpu.memory_space<vmem>>, %arg23: memref<1x128xf32, #tpu.memory_space<vmem>>, %arg24: memref<8x512xf32, #tpu.memory_space<vmem>>, %arg25: memref<8x256xf32, #tpu.memory_space<vmem>>) attributes {dimension_semantics = [], scalar_prefetch = 0 : i64, scratch_operands = 2 : i64, tpu.core_type = #tpu.core_type<tc>} {
    %c0 = arith.constant 0 : index
    %c0_0 = arith.constant 0 : index
    %0 = vector.load %arg0[%c0, %c0_0] : memref<8x32xf32, #tpu.memory_space<vmem>>, vector<8x32xf32>
    %c0_1 = arith.constant 0 : index
    %c0_2 = arith.constant 0 : index
    %1 = vector.load %arg1[%c0_1, %c0_2] : memref<32x256xf32, #tpu.memory_space<vmem>>, vector<32x256xf32>
    %cst = arith.constant dense<0.000000e+00> : vector<8x256xf32>
    %2 = tpu.matmul %0, %1, %cst {dimension_numbers = #tpu.dot_dimension_numbers<[1], [0], [0], [1], [0, 0, 1, 1], [], []>} : vector<8x32xf32>, vector<32x256xf32>, vector<8x256xf32> -> vector<8x256xf32>
    %c0_3 = arith.constant 0 : index
    %c0_4 = arith.constant 0 : index
    %3 = vector.load %arg2[%c0_3, %c0_4] : memref<1x256xf32, #tpu.memory_space<vmem>>, vector<1x256xf32>
    %4 = vector.broadcast %3 : vector<1x256xf32> to vector<8x256xf32>
    %5 = arith.addf %2, %4 : vector<8x256xf32>
    %cst_5 = arith.constant 5.000000e-01 : f32
    %6 = vector.broadcast %cst_5 : f32 to vector<8x256xf32>
    %7 = arith.mulf %6, %5 : vector<8x256xf32>
    %8 = math.tanh %7 : vector<8x256xf32>
    %cst_6 = arith.constant 5.000000e-01 : f32
    %9 = vector.broadcast %cst_6 : f32 to vector<8x256xf32>
    %10 = arith.mulf %9, %8 : vector<8x256xf32>
    %cst_7 = arith.constant 5.000000e-01 : f32
    %11 = vector.broadcast %cst_7 : f32 to vector<8x256xf32>
    %12 = arith.addf %10, %11 : vector<8x256xf32>
    %13 = arith.mulf %5, %12 : vector<8x256xf32>
    %c0_8 = arith.constant 0 : index
    %c0_9 = arith.constant 0 : index
    %14 = vector.load %arg3[%c0_8, %c0_9] : memref<256x512xf32, #tpu.memory_space<vmem>>, vector<256x512xf32>
    %cst_10 = arith.constant dense<0.000000e+00> : vector<8x512xf32>
    %15 = tpu.matmul %13, %14, %cst_10 {dimension_numbers = #tpu.dot_dimension_numbers<[1], [0], [0], [1], [0, 0, 1, 1], [], []>} : vector<8x256xf32>, vector<256x512xf32>, vector<8x512xf32> -> vector<8x512xf32>
    %c0_11 = arith.constant 0 : index
    %c0_12 = arith.constant 0 : index
    %16 = vector.load %arg5[%c0_11, %c0_12] : memref<1x512xf32, #tpu.memory_space<vmem>>, vector<1x512xf32>
    %17 = vector.broadcast %16 : vector<1x512xf32> to vector<8x512xf32>
    %18 = arith.addf %15, %17 : vector<8x512xf32>
    %c0_13 = arith.constant 0 : index
    %c0_14 = arith.constant 0 : index
    %19 = vector.load %arg24[%c0_13, %c0_14] : memref<8x512xf32, #tpu.memory_space<vmem>>, vector<8x512xf32>
    tpu.vector_store %arg24[%c0_13, %c0_14], %18 {strides = array<i32>} : memref<8x512xf32, #tpu.memory_space<vmem>>, vector<8x512xf32>,
    %c0_15 = arith.constant 0 : index
    %c0_16 = arith.constant 0 : index
    %20 = vector.load %arg19[%c0_15, %c0_16] : memref<1x128xf32, #tpu.memory_space<vmem>>, vector<1x128xf32>
    %c0_17 = arith.constant 0 : index
    %c0_18 = arith.constant 0 : index
    %21 = vector.load %arg20[%c0_17, %c0_18] : memref<1x128xf32, #tpu.memory_space<vmem>>, vector<1x128xf32>
    %c0_i32 = arith.constant 0 : i32
    %c8_i32 = arith.constant 8 : i32
    %22 = arith.muli %c0_i32, %c8_i32 : i32
    %23 = tpu.assume_multiple %22, 8 : i32
    %24 = arith.index_cast %23 : i32 to index
    %c0_19 = arith.constant 0 : index
    %25 = vector.load %arg24[%24, %c0_19] : memref<8x512xf32, #tpu.memory_space<vmem>>, vector<8x512xf32>
    %26 = vector.extract_strided_slice %25 {offsets = [0, 0], sizes = [1, 512], strides = [1, 1]} : vector<8x512xf32> to vector<1x512xf32>
    %c0_20 = arith.constant 0 : index
    %c0_21 = arith.constant 0 : index
    %27 = vector.load %arg4[%c0_20, %c0_21] : memref<128x512xf32, #tpu.memory_space<vmem>>, vector<128x512xf32>
    %cst_22 = arith.constant dense<0.000000e+00> : vector<1x512xf32>
    %28 = tpu.matmul %20, %27, %cst_22 {dimension_numbers = #tpu.dot_dimension_numbers<[1], [0], [0], [1], [0, 0, 1, 1], [], []>} : vector<1x128xf32>, vector<128x512xf32>, vector<1x512xf32> -> vector<1x512xf32>
    %29 = arith.addf %26, %28 : vector<1x512xf32>
    %30 = vector.extract_strided_slice %29 {offsets = [0, 0], sizes = [1, 384], strides = [1, 1]} : vector<1x512xf32> to vector<1x384xf32>
    %cst_23 = arith.constant 5.000000e-01 : f32
    %31 = vector.broadcast %cst_23 : f32 to vector<1x384xf32>
    %32 = arith.mulf %31, %30 : vector<1x384xf32>
    %33 = math.tanh %32 : vector<1x384xf32>
    %cst_24 = arith.constant 5.000000e-01 : f32
    %34 = vector.broadcast %cst_24 : f32 to vector<1x384xf32>
    %35 = arith.mulf %34, %33 : vector<1x384xf32>
    %cst_25 = arith.constant 5.000000e-01 : f32
    %36 = vector.broadcast %cst_25 : f32 to vector<1x384xf32>
    %37 = arith.addf %35, %36 : vector<1x384xf32>
    %38 = vector.extract_strided_slice %37 {offsets = [0, 0], sizes = [1, 128], strides = [1, 1]} : vector<1x384xf32> to vector<1x128xf32>
    %39 = vector.extract_strided_slice %37 {offsets = [0, 128], sizes = [1, 128], strides = [1, 1]} : vector<1x384xf32> to vector<1x128xf32>
    %40 = vector.extract_strided_slice %37 {offsets = [0, 256], sizes = [1, 128], strides = [1, 1]} : vector<1x384xf32> to vector<1x128xf32>
    %41 = vector.extract_strided_slice %29 {offsets = [0, 384], sizes = [1, 128], strides = [1, 1]} : vector<1x512xf32> to vector<1x128xf32>
    %42 = math.tanh %41 : vector<1x128xf32>
    %43 = arith.mulf %39, %21 : vector<1x128xf32>
    %44 = arith.mulf %38, %42 : vector<1x128xf32>
    %45 = arith.addf %43, %44 : vector<1x128xf32>
    %46 = math.tanh %45 : vector<1x128xf32>
    %47 = arith.mulf %40, %46 : vector<1x128xf32>
    %48 = vector.extract_strided_slice %25 {offsets = [1, 0], sizes = [1, 512], strides = [1, 1]} : vector<8x512xf32> to vector<1x512xf32>
    %c0_26 = arith.constant 0 : index
    %c0_27 = arith.constant 0 : index
    %49 = vector.load %arg4[%c0_26, %c0_27] : memref<128x512xf32, #tpu.memory_space<vmem>>, vector<128x512xf32>
    %cst_28 = arith.constant dense<0.000000e+00> : vector<1x512xf32>
    %50 = tpu.matmul %47, %49, %cst_28 {dimension_numbers = #tpu.dot_dimension_numbers<[1], [0], [0], [1], [0, 0, 1, 1], [], []>} : vector<1x128xf32>, vector<128x512xf32>, vector<1x512xf32> -> vector<1x512xf32>
    %51 = arith.addf %48, %50 : vector<1x512xf32>
    %52 = vector.extract_strided_slice %51 {offsets = [0, 0], sizes = [1, 384], strides = [1, 1]} : vector<1x512xf32> to vector<1x384xf32>
    %cst_29 = arith.constant 5.000000e-01 : f32
    %53 = vector.broadcast %cst_29 : f32 to vector<1x384xf32>
    %54 = arith.mulf %53, %52 : vector<1x384xf32>
    %55 = math.tanh %54 : vector<1x384xf32>
    %cst_30 = arith.constant 5.000000e-01 : f32
    %56 = vector.broadcast %cst_30 : f32 to vector<1x384xf32>
    %57 = arith.mulf %56, %55 : vector<1x384xf32>
    %cst_31 = arith.constant 5.000000e-01 : f32
    %58 = vector.broadcast %cst_31 : f32 to vector<1x384xf32>
    %59 = arith.addf %57, %58 : vector<1x384xf32>
    %60 = vector.extract_strided_slice %59 {offsets = [0, 0], sizes = [1, 128], strides = [1, 1]} : vector<1x384xf32> to vector<1x128xf32>
    %61 = vector.extract_strided_slice %59 {offsets = [0, 128], sizes = [1, 128], strides = [1, 1]} : vector<1x384xf32> to vector<1x128xf32>
    %62 = vector.extract_strided_slice %59 {offsets = [0, 256], sizes = [1, 128], strides = [1, 1]} : vector<1x384xf32> to vector<1x128xf32>
    %63 = vector.extract_strided_slice %51 {offsets = [0, 384], sizes = [1, 128], strides = [1, 1]} : vector<1x512xf32> to vector<1x128xf32>
    %64 = math.tanh %63 : vector<1x128xf32>
    %65 = arith.mulf %61, %45 : vector<1x128xf32>
    %66 = arith.mulf %60, %64 : vector<1x128xf32>
    %67 = arith.addf %65, %66 : vector<1x128xf32>
    %68 = math.tanh %67 : vector<1x128xf32>
    %69 = arith.mulf %62, %68 : vector<1x128xf32>
    %70 = vector.extract_strided_slice %25 {offsets = [2, 0], sizes = [1, 512], strides = [1, 1]} : vector<8x512xf32> to vector<1x512xf32>
    %c0_32 = arith.constant 0 : index
    %c0_33 = arith.constant 0 : index
    %71 = vector.load %arg4[%c0_32, %c0_33] : memref<128x512xf32, #tpu.memory_space<vmem>>, vector<128x512xf32>
    %cst_34 = arith.constant dense<0.000000e+00> : vector<1x512xf32>
    %72 = tpu.matmul %69, %71, %cst_34 {dimension_numbers = #tpu.dot_dimension_numbers<[1], [0], [0], [1], [0, 0, 1, 1], [], []>} : vector<1x128xf32>, vector<128x512xf32>, vector<1x512xf32> -> vector<1x512xf32>
    %73 = arith.addf %70, %72 : vector<1x512xf32>
    %74 = vector.extract_strided_slice %73 {offsets = [0, 0], sizes = [1, 384], strides = [1, 1]} : vector<1x512xf32> to vector<1x384xf32>
    %cst_35 = arith.constant 5.000000e-01 : f32
    %75 = vector.broadcast %cst_35 : f32 to vector<1x384xf32>
    %76 = arith.mulf %75, %74 : vector<1x384xf32>
    %77 = math.tanh %76 : vector<1x384xf32>
    %cst_36 = arith.constant 5.000000e-01 : f32
    %78 = vector.broadcast %cst_36 : f32 to vector<1x384xf32>
    %79 = arith.mulf %78, %77 : vector<1x384xf32>
    %cst_37 = arith.constant 5.000000e-01 : f32
    %80 = vector.broadcast %cst_37 : f32 to vector<1x384xf32>
    %81 = arith.addf %79, %80 : vector<1x384xf32>
    %82 = vector.extract_strided_slice %81 {offsets = [0, 0], sizes = [1, 128], strides = [1, 1]} : vector<1x384xf32> to vector<1x128xf32>
    %83 = vector.extract_strided_slice %81 {offsets = [0, 128], sizes = [1, 128], strides = [1, 1]} : vector<1x384xf32> to vector<1x128xf32>
    %84 = vector.extract_strided_slice %81 {offsets = [0, 256], sizes = [1, 128], strides = [1, 1]} : vector<1x384xf32> to vector<1x128xf32>
    %85 = vector.extract_strided_slice %73 {offsets = [0, 384], sizes = [1, 128], strides = [1, 1]} : vector<1x512xf32> to vector<1x128xf32>
    %86 = math.tanh %85 : vector<1x128xf32>
    %87 = arith.mulf %83, %67 : vector<1x128xf32>
    %88 = arith.mulf %82, %86 : vector<1x128xf32>
    %89 = arith.addf %87, %88 : vector<1x128xf32>
    %90 = math.tanh %89 : vector<1x128xf32>
    %91 = arith.mulf %84, %90 : vector<1x128xf32>
    %92 = vector.extract_strided_slice %25 {offsets = [3, 0], sizes = [1, 512], strides = [1, 1]} : vector<8x512xf32> to vector<1x512xf32>
    %c0_38 = arith.constant 0 : index
    %c0_39 = arith.constant 0 : index
    %93 = vector.load %arg4[%c0_38, %c0_39] : memref<128x512xf32, #tpu.memory_space<vmem>>, vector<128x512xf32>
    %cst_40 = arith.constant dense<0.000000e+00> : vector<1x512xf32>
    %94 = tpu.matmul %91, %93, %cst_40 {dimension_numbers = #tpu.dot_dimension_numbers<[1], [0], [0], [1], [0, 0, 1, 1], [], []>} : vector<1x128xf32>, vector<128x512xf32>, vector<1x512xf32> -> vector<1x512xf32>
    %95 = arith.addf %92, %94 : vector<1x512xf32>
    %96 = vector.extract_strided_slice %95 {offsets = [0, 0], sizes = [1, 384], strides = [1, 1]} : vector<1x512xf32> to vector<1x384xf32>
    %cst_41 = arith.constant 5.000000e-01 : f32
    %97 = vector.broadcast %cst_41 : f32 to vector<1x384xf32>
    %98 = arith.mulf %97, %96 : vector<1x384xf32>
    %99 = math.tanh %98 : vector<1x384xf32>
    %cst_42 = arith.constant 5.000000e-01 : f32
    %100 = vector.broadcast %cst_42 : f32 to vector<1x384xf32>
    %101 = arith.mulf %100, %99 : vector<1x384xf32>
    %cst_43 = arith.constant 5.000000e-01 : f32
    %102 = vector.broadcast %cst_43 : f32 to vector<1x384xf32>
    %103 = arith.addf %101, %102 : vector<1x384xf32>
    %104 = vector.extract_strided_slice %103 {offsets = [0, 0], sizes = [1, 128], strides = [1, 1]} : vector<1x384xf32> to vector<1x128xf32>
    %105 = vector.extract_strided_slice %103 {offsets = [0, 128], sizes = [1, 128], strides = [1, 1]} : vector<1x384xf32> to vector<1x128xf32>
    %106 = vector.extract_strided_slice %103 {offsets = [0, 256], sizes = [1, 128], strides = [1, 1]} : vector<1x384xf32> to vector<1x128xf32>
    %107 = vector.extract_strided_slice %95 {offsets = [0, 384], sizes = [1, 128], strides = [1, 1]} : vector<1x512xf32> to vector<1x128xf32>
    %108 = math.tanh %107 : vector<1x128xf32>
    %109 = arith.mulf %105, %89 : vector<1x128xf32>
    %110 = arith.mulf %104, %108 : vector<1x128xf32>
    %111 = arith.addf %109, %110 : vector<1x128xf32>
    %112 = math.tanh %111 : vector<1x128xf32>
    %113 = arith.mulf %106, %112 : vector<1x128xf32>
    %114 = vector.extract_strided_slice %25 {offsets = [4, 0], sizes = [1, 512], strides = [1, 1]} : vector<8x512xf32> to vector<1x512xf32>
    %c0_44 = arith.constant 0 : index
    %c0_45 = arith.constant 0 : index
    %115 = vector.load %arg4[%c0_44, %c0_45] : memref<128x512xf32, #tpu.memory_space<vmem>>, vector<128x512xf32>
    %cst_46 = arith.constant dense<0.000000e+00> : vector<1x512xf32>
    %116 = tpu.matmul %113, %115, %cst_46 {dimension_numbers = #tpu.dot_dimension_numbers<[1], [0], [0], [1], [0, 0, 1, 1], [], []>} : vector<1x128xf32>, vector<128x512xf32>, vector<1x512xf32> -> vector<1x512xf32>
    %117 = arith.addf %114, %116 : vector<1x512xf32>
    %118 = vector.extract_strided_slice %117 {offsets = [0, 0], sizes = [1, 384], strides = [1, 1]} : vector<1x512xf32> to vector<1x384xf32>
    %cst_47 = arith.constant 5.000000e-01 : f32
    %119 = vector.broadcast %cst_47 : f32 to vector<1x384xf32>
    %120 = arith.mulf %119, %118 : vector<1x384xf32>
    %121 = math.tanh %120 : vector<1x384xf32>
    %cst_48 = arith.constant 5.000000e-01 : f32
    %122 = vector.broadcast %cst_48 : f32 to vector<1x384xf32>
    %123 = arith.mulf %122, %121 : vector<1x384xf32>
    %cst_49 = arith.constant 5.000000e-01 : f32
    %124 = vector.broadcast %cst_49 : f32 to vector<1x384xf32>
    %125 = arith.addf %123, %124 : vector<1x384xf32>
    %126 = vector.extract_strided_slice %125 {offsets = [0, 0], sizes = [1, 128], strides = [1, 1]} : vector<1x384xf32> to vector<1x128xf32>
    %127 = vector.extract_strided_slice %125 {offsets = [0, 128], sizes = [1, 128], strides = [1, 1]} : vector<1x384xf32> to vector<1x128xf32>
    %128 = vector.extract_strided_slice %125 {offsets = [0, 256], sizes = [1, 128], strides = [1, 1]} : vector<1x384xf32> to vector<1x128xf32>
    %129 = vector.extract_strided_slice %117 {offsets = [0, 384], sizes = [1, 128], strides = [1, 1]} : vector<1x512xf32> to vector<1x128xf32>
    %130 = math.tanh %129 : vector<1x128xf32>
    %131 = arith.mulf %127, %111 : vector<1x128xf32>
    %132 = arith.mulf %126, %130 : vector<1x128xf32>
    %133 = arith.addf %131, %132 : vector<1x128xf32>
    %134 = math.tanh %133 : vector<1x128xf32>
    %135 = arith.mulf %128, %134 : vector<1x128xf32>
    %136 = vector.extract_strided_slice %25 {offsets = [5, 0], sizes = [1, 512], strides = [1, 1]} : vector<8x512xf32> to vector<1x512xf32>
    %c0_50 = arith.constant 0 : index
    %c0_51 = arith.constant 0 : index
    %137 = vector.load %arg4[%c0_50, %c0_51] : memref<128x512xf32, #tpu.memory_space<vmem>>, vector<128x512xf32>
    %cst_52 = arith.constant dense<0.000000e+00> : vector<1x512xf32>
    %138 = tpu.matmul %135, %137, %cst_52 {dimension_numbers = #tpu.dot_dimension_numbers<[1], [0], [0], [1], [0, 0, 1, 1], [], []>} : vector<1x128xf32>, vector<128x512xf32>, vector<1x512xf32> -> vector<1x512xf32>
    %139 = arith.addf %136, %138 : vector<1x512xf32>
    %140 = vector.extract_strided_slice %139 {offsets = [0, 0], sizes = [1, 384], strides = [1, 1]} : vector<1x512xf32> to vector<1x384xf32>
    %cst_53 = arith.constant 5.000000e-01 : f32
    %141 = vector.broadcast %cst_53 : f32 to vector<1x384xf32>
    %142 = arith.mulf %141, %140 : vector<1x384xf32>
    %143 = math.tanh %142 : vector<1x384xf32>
    %cst_54 = arith.constant 5.000000e-01 : f32
    %144 = vector.broadcast %cst_54 : f32 to vector<1x384xf32>
    %145 = arith.mulf %144, %143 : vector<1x384xf32>
    %cst_55 = arith.constant 5.000000e-01 : f32
    %146 = vector.broadcast %cst_55 : f32 to vector<1x384xf32>
    %147 = arith.addf %145, %146 : vector<1x384xf32>
    %148 = vector.extract_strided_slice %147 {offsets = [0, 0], sizes = [1, 128], strides = [1, 1]} : vector<1x384xf32> to vector<1x128xf32>
    %149 = vector.extract_strided_slice %147 {offsets = [0, 128], sizes = [1, 128], strides = [1, 1]} : vector<1x384xf32> to vector<1x128xf32>
    %150 = vector.extract_strided_slice %147 {offsets = [0, 256], sizes = [1, 128], strides = [1, 1]} : vector<1x384xf32> to vector<1x128xf32>
    %151 = vector.extract_strided_slice %139 {offsets = [0, 384], sizes = [1, 128], strides = [1, 1]} : vector<1x512xf32> to vector<1x128xf32>
    %152 = math.tanh %151 : vector<1x128xf32>
    %153 = arith.mulf %149, %133 : vector<1x128xf32>
    %154 = arith.mulf %148, %152 : vector<1x128xf32>
    %155 = arith.addf %153, %154 : vector<1x128xf32>
    %156 = math.tanh %155 : vector<1x128xf32>
    %157 = arith.mulf %150, %156 : vector<1x128xf32>
    %158 = vector.extract_strided_slice %25 {offsets = [6, 0], sizes = [1, 512], strides = [1, 1]} : vector<8x512xf32> to vector<1x512xf32>
    %c0_56 = arith.constant 0 : index
    %c0_57 = arith.constant 0 : index
    %159 = vector.load %arg4[%c0_56, %c0_57] : memref<128x512xf32, #tpu.memory_space<vmem>>, vector<128x512xf32>
    %cst_58 = arith.constant dense<0.000000e+00> : vector<1x512xf32>
    %160 = tpu.matmul %157, %159, %cst_58 {dimension_numbers = #tpu.dot_dimension_numbers<[1], [0], [0], [1], [0, 0, 1, 1], [], []>} : vector<1x128xf32>, vector<128x512xf32>, vector<1x512xf32> -> vector<1x512xf32>
    %161 = arith.addf %158, %160 : vector<1x512xf32>
    %162 = vector.extract_strided_slice %161 {offsets = [0, 0], sizes = [1, 384], strides = [1, 1]} : vector<1x512xf32> to vector<1x384xf32>
    %cst_59 = arith.constant 5.000000e-01 : f32
    %163 = vector.broadcast %cst_59 : f32 to vector<1x384xf32>
    %164 = arith.mulf %163, %162 : vector<1x384xf32>
    %165 = math.tanh %164 : vector<1x384xf32>
    %cst_60 = arith.constant 5.000000e-01 : f32
    %166 = vector.broadcast %cst_60 : f32 to vector<1x384xf32>
    %167 = arith.mulf %166, %165 : vector<1x384xf32>
    %cst_61 = arith.constant 5.000000e-01 : f32
    %168 = vector.broadcast %cst_61 : f32 to vector<1x384xf32>
    %169 = arith.addf %167, %168 : vector<1x384xf32>
    %170 = vector.extract_strided_slice %169 {offsets = [0, 0], sizes = [1, 128], strides = [1, 1]} : vector<1x384xf32> to vector<1x128xf32>
    %171 = vector.extract_strided_slice %169 {offsets = [0, 128], sizes = [1, 128], strides = [1, 1]} : vector<1x384xf32> to vector<1x128xf32>
    %172 = vector.extract_strided_slice %169 {offsets = [0, 256], sizes = [1, 128], strides = [1, 1]} : vector<1x384xf32> to vector<1x128xf32>
    %173 = vector.extract_strided_slice %161 {offsets = [0, 384], sizes = [1, 128], strides = [1, 1]} : vector<1x512xf32> to vector<1x128xf32>
    %174 = math.tanh %173 : vector<1x128xf32>
    %175 = arith.mulf %171, %155 : vector<1x128xf32>
    %176 = arith.mulf %170, %174 : vector<1x128xf32>
    %177 = arith.addf %175, %176 : vector<1x128xf32>
    %178 = math.tanh %177 : vector<1x128xf32>
    %179 = arith.mulf %172, %178 : vector<1x128xf32>
    %180 = vector.extract_strided_slice %25 {offsets = [7, 0], sizes = [1, 512], strides = [1, 1]} : vector<8x512xf32> to vector<1x512xf32>
    %c0_62 = arith.constant 0 : index
    %c0_63 = arith.constant 0 : index
    %181 = vector.load %arg4[%c0_62, %c0_63] : memref<128x512xf32, #tpu.memory_space<vmem>>, vector<128x512xf32>
    %cst_64 = arith.constant dense<0.000000e+00> : vector<1x512xf32>
    %182 = tpu.matmul %179, %181, %cst_64 {dimension_numbers = #tpu.dot_dimension_numbers<[1], [0], [0], [1], [0, 0, 1, 1], [], []>} : vector<1x128xf32>, vector<128x512xf32>, vector<1x512xf32> -> vector<1x512xf32>
    %183 = arith.addf %180, %182 : vector<1x512xf32>
    %184 = vector.extract_strided_slice %183 {offsets = [0, 0], sizes = [1, 384], strides = [1, 1]} : vector<1x512xf32> to vector<1x384xf32>
    %cst_65 = arith.constant 5.000000e-01 : f32
    %185 = vector.broadcast %cst_65 : f32 to vector<1x384xf32>
    %186 = arith.mulf %185, %184 : vector<1x384xf32>
    %187 = math.tanh %186 : vector<1x384xf32>
    %cst_66 = arith.constant 5.000000e-01 : f32
    %188 = vector.broadcast %cst_66 : f32 to vector<1x384xf32>
    %189 = arith.mulf %188, %187 : vector<1x384xf32>
    %cst_67 = arith.constant 5.000000e-01 : f32
    %190 = vector.broadcast %cst_67 : f32 to vector<1x384xf32>
    %191 = arith.addf %189, %190 : vector<1x384xf32>
    %192 = vector.extract_strided_slice %191 {offsets = [0, 0], sizes = [1, 128], strides = [1, 1]} : vector<1x384xf32> to vector<1x128xf32>
    %193 = vector.extract_strided_slice %191 {offsets = [0, 128], sizes = [1, 128], strides = [1, 1]} : vector<1x384xf32> to vector<1x128xf32>
    %194 = vector.extract_strided_slice %191 {offsets = [0, 256], sizes = [1, 128], strides = [1, 1]} : vector<1x384xf32> to vector<1x128xf32>
    %195 = vector.extract_strided_slice %183 {offsets = [0, 384], sizes = [1, 128], strides = [1, 1]} : vector<1x512xf32> to vector<1x128xf32>
    %196 = math.tanh %195 : vector<1x128xf32>
    %197 = arith.mulf %193, %177 : vector<1x128xf32>
    %198 = arith.mulf %192, %196 : vector<1x128xf32>
    %199 = arith.addf %197, %198 : vector<1x128xf32>
    %200 = math.tanh %199 : vector<1x128xf32>
    %201 = arith.mulf %194, %200 : vector<1x128xf32>
    %202 = tpu.concatenate %47, %69, %91, %113, %135, %157, %179, %201 in 0 : vector<1x128xf32>, vector<1x128xf32>, vector<1x128xf32>, vector<1x128xf32>, vector<1x128xf32>, vector<1x128xf32>, vector<1x128xf32>, vector<1x128xf32> -> vector<8x128xf32>
    %c0_68 = arith.constant 0 : index
    %c0_69 = arith.constant 0 : index
    %203 = vector.load %arg6[%c0_68, %c0_69] : memref<128x256xf32, #tpu.memory_space<vmem>>, vector<128x256xf32>
    %cst_70 = arith.constant dense<0.000000e+00> : vector<8x256xf32>
    %204 = tpu.matmul %202, %203, %cst_70 {dimension_numbers = #tpu.dot_dimension_numbers<[1], [0], [0], [1], [0, 0, 1, 1], [], []>} : vector<8x128xf32>, vector<128x256xf32>, vector<8x256xf32> -> vector<8x256xf32>
    %c0_71 = arith.constant 0 : index
    %c0_72 = arith.constant 0 : index
    %205 = vector.load %arg7[%c0_71, %c0_72] : memref<1x256xf32, #tpu.memory_space<vmem>>, vector<1x256xf32>
    %206 = vector.broadcast %205 : vector<1x256xf32> to vector<8x256xf32>
    %207 = arith.addf %204, %206 : vector<8x256xf32>
    %cst_73 = arith.constant 5.000000e-01 : f32
    %208 = vector.broadcast %cst_73 : f32 to vector<8x256xf32>
    %209 = arith.mulf %208, %207 : vector<8x256xf32>
    %210 = math.tanh %209 : vector<8x256xf32>
    %cst_74 = arith.constant 5.000000e-01 : f32
    %211 = vector.broadcast %cst_74 : f32 to vector<8x256xf32>
    %212 = arith.mulf %211, %210 : vector<8x256xf32>
    %cst_75 = arith.constant 5.000000e-01 : f32
    %213 = vector.broadcast %cst_75 : f32 to vector<8x256xf32>
    %214 = arith.addf %212, %213 : vector<8x256xf32>
    %215 = arith.mulf %207, %214 : vector<8x256xf32>
    %c0_76 = arith.constant 0 : index
    %c0_77 = arith.constant 0 : index
    %216 = vector.load %arg8[%c0_76, %c0_77] : memref<256x256xf32, #tpu.memory_space<vmem>>, vector<256x256xf32>
    %cst_78 = arith.constant dense<0.000000e+00> : vector<8x256xf32>
    %217 = tpu.matmul %215, %216, %cst_78 {dimension_numbers = #tpu.dot_dimension_numbers<[1], [0], [0], [1], [0, 0, 1, 1], [], []>} : vector<8x256xf32>, vector<256x256xf32>, vector<8x256xf32> -> vector<8x256xf32>
    %c0_79 = arith.constant 0 : index
    %c0_80 = arith.constant 0 : index
    %218 = vector.load %arg9[%c0_79, %c0_80] : memref<1x256xf32, #tpu.memory_space<vmem>>, vector<1x256xf32>
    %219 = vector.broadcast %218 : vector<1x256xf32> to vector<8x256xf32>
    %220 = arith.addf %217, %219 : vector<8x256xf32>
    %cst_81 = arith.constant 5.000000e-01 : f32
    %221 = vector.broadcast %cst_81 : f32 to vector<8x256xf32>
    %222 = arith.mulf %221, %220 : vector<8x256xf32>
    %223 = math.tanh %222 : vector<8x256xf32>
    %cst_82 = arith.constant 5.000000e-01 : f32
    %224 = vector.broadcast %cst_82 : f32 to vector<8x256xf32>
    %225 = arith.mulf %224, %223 : vector<8x256xf32>
    %cst_83 = arith.constant 5.000000e-01 : f32
    %226 = vector.broadcast %cst_83 : f32 to vector<8x256xf32>
    %227 = arith.addf %225, %226 : vector<8x256xf32>
    %228 = arith.mulf %220, %227 : vector<8x256xf32>
    %229 = arith.index_cast %23 : i32 to index
    %c0_84 = arith.constant 0 : index
    %230 = vector.load %arg25[%229, %c0_84] : memref<8x256xf32, #tpu.memory_space<vmem>>, vector<8x256xf32>
    tpu.vector_store %arg25[%229, %c0_84], %228 {strides = array<i32>} : memref<8x256xf32, #tpu.memory_space<vmem>>, vector<8x256xf32>,
    %c1_i32 = arith.constant 1 : i32
    %c0_85 = arith.constant 0 : index
    %c0_86 = arith.constant 0 : index
    %231 = vector.load %arg22[%c0_85, %c0_86] : memref<1x128xf32, #tpu.memory_space<vmem>>, vector<1x128xf32>
    tpu.vector_store %arg22[%c0_85, %c0_86], %201 {strides = array<i32>} : memref<1x128xf32, #tpu.memory_space<vmem>>, vector<1x128xf32>,
    %c0_87 = arith.constant 0 : index
    %c0_88 = arith.constant 0 : index
    %232 = vector.load %arg23[%c0_87, %c0_88] : memref<1x128xf32, #tpu.memory_space<vmem>>, vector<1x128xf32>
    tpu.vector_store %arg23[%c0_87, %c0_88], %199 {strides = array<i32>} : memref<1x128xf32, #tpu.memory_space<vmem>>, vector<1x128xf32>,
    %c0_89 = arith.constant 0 : index
    %c0_90 = arith.constant 0 : index
    %233 = vector.load %arg25[%c0_89, %c0_90] : memref<8x256xf32, #tpu.memory_space<vmem>>, vector<8x256xf32>
    %c0_91 = arith.constant 0 : index
    %c0_92 = arith.constant 0 : index
    %234 = vector.load %arg10[%c0_91, %c0_92] : memref<256x512xf32, #tpu.memory_space<vmem>>, vector<256x512xf32>
    %cst_93 = arith.constant dense<0.000000e+00> : vector<8x512xf32>
    %235 = tpu.matmul %233, %234, %cst_93 {dimension_numbers = #tpu.dot_dimension_numbers<[1], [0], [0], [1], [0, 0, 1, 1], [], []>} : vector<8x256xf32>, vector<256x512xf32>, vector<8x512xf32> -> vector<8x512xf32>
    %c0_94 = arith.constant 0 : index
    %c0_95 = arith.constant 0 : index
    %236 = vector.load %arg11[%c0_94, %c0_95] : memref<1x512xf32, #tpu.memory_space<vmem>>, vector<1x512xf32>
    %237 = vector.broadcast %236 : vector<1x512xf32> to vector<8x512xf32>
    %238 = arith.addf %235, %237 : vector<8x512xf32>
    %cst_96 = arith.constant 5.000000e-01 : f32
    %239 = vector.broadcast %cst_96 : f32 to vector<8x512xf32>
    %240 = arith.mulf %239, %238 : vector<8x512xf32>
    %241 = math.tanh %240 : vector<8x512xf32>
    %cst_97 = arith.constant 5.000000e-01 : f32
    %242 = vector.broadcast %cst_97 : f32 to vector<8x512xf32>
    %243 = arith.mulf %242, %241 : vector<8x512xf32>
    %cst_98 = arith.constant 5.000000e-01 : f32
    %244 = vector.broadcast %cst_98 : f32 to vector<8x512xf32>
    %245 = arith.addf %243, %244 : vector<8x512xf32>
    %246 = arith.mulf %238, %245 : vector<8x512xf32>
    %247 = vector.extract_strided_slice %246 {offsets = [0, 0], sizes = [8, 256], strides = [1, 1]} : vector<8x512xf32> to vector<8x256xf32>
    %c0_99 = arith.constant 0 : index
    %c0_100 = arith.constant 0 : index
    %248 = vector.load %arg12[%c0_99, %c0_100] : memref<256x256xf32, #tpu.memory_space<vmem>>, vector<256x256xf32>
    %cst_101 = arith.constant dense<0.000000e+00> : vector<8x256xf32>
    %249 = tpu.matmul %247, %248, %cst_101 {dimension_numbers = #tpu.dot_dimension_numbers<[1], [0], [0], [1], [0, 0, 1, 1], [], []>} : vector<8x256xf32>, vector<256x256xf32>, vector<8x256xf32> -> vector<8x256xf32>
    %c0_102 = arith.constant 0 : index
    %c0_103 = arith.constant 0 : index
    %250 = vector.load %arg13[%c0_102, %c0_103] : memref<1x256xf32, #tpu.memory_space<vmem>>, vector<1x256xf32>
    %251 = vector.broadcast %250 : vector<1x256xf32> to vector<8x256xf32>
    %252 = arith.addf %249, %251 : vector<8x256xf32>
    %cst_104 = arith.constant 5.000000e-01 : f32
    %253 = vector.broadcast %cst_104 : f32 to vector<8x256xf32>
    %254 = arith.mulf %253, %252 : vector<8x256xf32>
    %255 = math.tanh %254 : vector<8x256xf32>
    %cst_105 = arith.constant 5.000000e-01 : f32
    %256 = vector.broadcast %cst_105 : f32 to vector<8x256xf32>
    %257 = arith.mulf %256, %255 : vector<8x256xf32>
    %cst_106 = arith.constant 5.000000e-01 : f32
    %258 = vector.broadcast %cst_106 : f32 to vector<8x256xf32>
    %259 = arith.addf %257, %258 : vector<8x256xf32>
    %260 = arith.mulf %252, %259 : vector<8x256xf32>
    %261 = vector.extract_strided_slice %246 {offsets = [0, 256], sizes = [8, 256], strides = [1, 1]} : vector<8x512xf32> to vector<8x256xf32>
    %c0_107 = arith.constant 0 : index
    %c0_108 = arith.constant 0 : index
    %262 = vector.load %arg14[%c0_107, %c0_108] : memref<256x256xf32, #tpu.memory_space<vmem>>, vector<256x256xf32>
    %cst_109 = arith.constant dense<0.000000e+00> : vector<8x256xf32>
    %263 = tpu.matmul %261, %262, %cst_109 {dimension_numbers = #tpu.dot_dimension_numbers<[1], [0], [0], [1], [0, 0, 1, 1], [], []>} : vector<8x256xf32>, vector<256x256xf32>, vector<8x256xf32> -> vector<8x256xf32>
    %c0_110 = arith.constant 0 : index
    %c0_111 = arith.constant 0 : index
    %264 = vector.load %arg15[%c0_110, %c0_111] : memref<1x256xf32, #tpu.memory_space<vmem>>, vector<1x256xf32>
    %265 = vector.broadcast %264 : vector<1x256xf32> to vector<8x256xf32>
    %266 = arith.addf %263, %265 : vector<8x256xf32>
    %cst_112 = arith.constant 5.000000e-01 : f32
    %267 = vector.broadcast %cst_112 : f32 to vector<8x256xf32>
    %268 = arith.mulf %267, %266 : vector<8x256xf32>
    %269 = math.tanh %268 : vector<8x256xf32>
    %cst_113 = arith.constant 5.000000e-01 : f32
    %270 = vector.broadcast %cst_113 : f32 to vector<8x256xf32>
    %271 = arith.mulf %270, %269 : vector<8x256xf32>
    %cst_114 = arith.constant 5.000000e-01 : f32
    %272 = vector.broadcast %cst_114 : f32 to vector<8x256xf32>
    %273 = arith.addf %271, %272 : vector<8x256xf32>
    %274 = arith.mulf %266, %273 : vector<8x256xf32>
    %c0_115 = arith.constant 0 : index
    %c0_116 = arith.constant 0 : index
    %275 = vector.load %arg16[%c0_115, %c0_116] : memref<256x128xf32, #tpu.memory_space<vmem>>, vector<256x128xf32>
    %cst_117 = arith.constant dense<0.000000e+00> : vector<8x128xf32>
    %276 = tpu.matmul %260, %275, %cst_117 {dimension_numbers = #tpu.dot_dimension_numbers<[1], [0], [0], [1], [0, 0, 1, 1], [], []>} : vector<8x256xf32>, vector<256x128xf32>, vector<8x128xf32> -> vector<8x128xf32>
    %c0_118 = arith.constant 0 : index
    %c0_119 = arith.constant 0 : index
    %277 = vector.load %arg17[%c0_118, %c0_119] : memref<256x128xf32, #tpu.memory_space<vmem>>, vector<256x128xf32>
    %cst_120 = arith.constant dense<0.000000e+00> : vector<8x128xf32>
    %278 = tpu.matmul %274, %277, %cst_120 {dimension_numbers = #tpu.dot_dimension_numbers<[1], [0], [0], [1], [0, 0, 1, 1], [], []>} : vector<8x256xf32>, vector<256x128xf32>, vector<8x128xf32> -> vector<8x128xf32>
    %279 = arith.addf %276, %278 : vector<8x128xf32>
    %c0_121 = arith.constant 0 : index
    %c0_122 = arith.constant 0 : index
    %280 = vector.load %arg18[%c0_121, %c0_122] : memref<1x128xf32, #tpu.memory_space<vmem>>, vector<1x128xf32>
    %281 = vector.broadcast %280 : vector<1x128xf32> to vector<8x128xf32>
    %282 = arith.addf %279, %281 : vector<8x128xf32>
    %c0_123 = arith.constant 0 : index
    %c0_124 = arith.constant 0 : index
    %283 = vector.load %arg21[%c0_123, %c0_124] : memref<8x128xf32, #tpu.memory_space<vmem>>, vector<8x128xf32>
    tpu.vector_store %arg21[%c0_123, %c0_124], %282 {strides = array<i32>} : memref<8x128xf32, #tpu.memory_space<vmem>>, vector<8x128xf32>,
    return
  }
}

</mosaic_0001>

<llo_original>
// kernel: tpu_custom_call.1
$region0: #{tpu_custom_call.1}
  #allocation0 [shape = 'u32[]', space=smem, size = 0x4, offset = 0x4, fixed_abs, tag = 'smem constant byte address 0x4 - core index']
  #allocation1 [shape = 'u32[144,128]{1,0:T(1,128)}', space=vmem, size = 0x12000, scoped, tag = 'internal scratch']
  #allocation2 [shape = 'f32[8,512]{1,0:T(8,128)}', space=vmem, size = 0x4000, scoped, tag = 'scratch operand']
  #allocation3 [shape = 'f32[8,256]{1,0:T(8,128)}', space=vmem, size = 0x2000, scoped, tag = 'scratch operand']
  %s0 = inlined_call_operand.hbm [shape: f32[8,32], index: 0, kind: input, shape index: {}]
  %s1 = inlined_call_operand.hbm [shape: f32[32,256], index: 1, kind: input, shape index: {}]
  %s2 = inlined_call_operand.vmem [shape: f32[1,256], index: 2, kind: input, shape index: {}]
  %s3 = inlined_call_operand.hbm [shape: f32[256,512], index: 3, kind: input, shape index: {}]
  %s4 = inlined_call_operand.hbm [shape: f32[128,512], index: 4, kind: input, shape index: {}]
  %s5 = inlined_call_operand.vmem [shape: f32[1,512], index: 5, kind: input, shape index: {}]
  %s6 = inlined_call_operand.hbm [shape: f32[128,256], index: 6, kind: input, shape index: {}]
  %s7 = inlined_call_operand.vmem [shape: f32[1,256], index: 7, kind: input, shape index: {}]
  %s8 = inlined_call_operand.hbm [shape: f32[256,256], index: 8, kind: input, shape index: {}]
  %s9 = inlined_call_operand.vmem [shape: f32[1,256], index: 9, kind: input, shape index: {}]
  %s10 = inlined_call_operand.hbm [shape: f32[256,512], index: 10, kind: input, shape index: {}]
  %s11 = inlined_call_operand.vmem [shape: f32[1,512], index: 11, kind: input, shape index: {}]
  %s12 = inlined_call_operand.hbm [shape: f32[256,256], index: 12, kind: input, shape index: {}]
  %s13 = inlined_call_operand.vmem [shape: f32[1,256], index: 13, kind: input, shape index: {}]
  %s14 = inlined_call_operand.hbm [shape: f32[256,256], index: 14, kind: input, shape index: {}]
  %s15 = inlined_call_operand.vmem [shape: f32[1,256], index: 15, kind: input, shape index: {}]
  %s16 = inlined_call_operand.hbm [shape: f32[256,128], index: 16, kind: input, shape index: {}]
  %s17 = inlined_call_operand.hbm [shape: f32[256,128], index: 17, kind: input, shape index: {}]
  %s18 = inlined_call_operand.vmem [shape: f32[1,128], index: 18, kind: input, shape index: {}]
  %s19 = inlined_call_operand.vmem [shape: f32[1,128], index: 19, kind: input, shape index: {}]
  %s20 = inlined_call_operand.vmem [shape: f32[1,128], index: 20, kind: input, shape index: {}]
  %s21 = inlined_call_operand.hbm [shape: f32[8,128], index: 21, kind: output, shape index: {0}]
  %s22 = inlined_call_operand.hbm [shape: f32[1,128], index: 22, kind: output, shape index: {1}]
  %s23 = inlined_call_operand.hbm [shape: f32[1,128], index: 23, kind: output, shape index: {2}]
  %24 = xla_tuple %s21, %s22, %s23
  %s25 = sld [smem:[#allocation0]]
  $region154: #{tpu_custom_call.1} parent=0
    _
  %s27 = ssub.s32 1, %s25
  %s28 = scalar_select 0, %s27, %s25
  $region1: #{tpu_custom_call.1} parent=0
    #allocation4 [shape = 'u8[4096]{0}', space=vmem, size = 0x1000, scoped, tag = 'input window, operand 0, single buffered']
    #allocation5 [shape = 's32[1]{0}', space=sflag, size = 0x4, scoped, tag = 'scoped memory for tpu_custom_call.1']
    #allocation6 [shape = 's32[1]{0}', space=sflag, size = 0x4, scoped, tag = 'scoped memory for tpu_custom_call.1']
    #allocation7 [shape = 'u8[32768]{0}', space=vmem, size = 0x8000, scoped, tag = 'input window, operand 1, single buffered']
    #allocation8 [shape = 's32[1]{0}', space=sflag, size = 0x4, scoped, tag = 'scoped memory for tpu_custom_call.1']
    #allocation9 [shape = 'u8[524288]{0}', space=vmem, size = 0x80000, scoped, tag = 'input window, operand 3, single buffered']
    #allocation10 [shape = 'u8[262144]{0}', space=vmem, size = 0x40000, scoped, tag = 'input window, operand 4, single buffered']
    #allocation11 [shape = 's32[1]{0}', space=sflag, size = 0x4, scoped, tag = 'scoped memory for tpu_custom_call.1']
    #allocation12 [shape = 'u8[131072]{0}', space=vmem, size = 0x20000, scoped, tag = 'input window, operand 6, single buffered']
    #allocation13 [shape = 'u8[262144]{0}', space=vmem, size = 0x40000, scoped, tag = 'input window, operand 8, single buffered']
    #allocation14 [shape = 's32[1]{0}', space=sflag, size = 0x4, scoped, tag = 'scoped memory for tpu_custom_call.1']
    #allocation15 [shape = 'u8[524288]{0}', space=vmem, size = 0x80000, scoped, tag = 'input window, operand 10, single buffered']
    #allocation16 [shape = 'u8[262144]{0}', space=vmem, size = 0x40000, scoped, tag = 'input window, operand 12, single buffered']
    #allocation17 [shape = 's32[1]{0}', space=sflag, size = 0x4, scoped, tag = 'scoped memory for tpu_custom_call.1']
    #allocation18 [shape = 'u8[262144]{0}', space=vmem, size = 0x40000, scoped, tag = 'input window, operand 14, single buffered']
    #allocation19 [shape = 'u8[131072]{0}', space=vmem, size = 0x20000, scoped, tag = 'input window, operand 16, single buffered']
    #allocation20 [shape = 's32[1]{0}', space=sflag, size = 0x4, scoped, tag = 'scoped memory for tpu_custom_call.1']
    #allocation21 [shape = 'u8[131072]{0}', space=vmem, size = 0x20000, scoped, tag = 'input window, operand 17, single buffered']
    #allocation22 [shape = 'u8[4096]{0}', space=vmem, size = 0x1000, scoped, tag = 'output window, operand 0, single buffered']
    #allocation23 [shape = 'u8[512]{0}', space=vmem, size = 0x400, scoped, tag = 'output window, operand 1, single buffered']
    #allocation24 [shape = 's32[1]{0}', space=sflag, size = 0x4, scoped, tag = 'scoped memory for tpu_custom_call.1']
    #allocation25 [shape = 'u8[512]{0}', space=vmem, size = 0x400, scoped, tag = 'output window, operand 2, single buffered']
    %29 = vsyncpa [#allocation5], 0
    %30 = vsyncpa [#allocation8], 0
    %31 = vsyncpa [#allocation11], 0
    %32 = vsyncpa [#allocation14], 0
    %33 = vsyncpa [#allocation17], 0
    %34 = vsyncpa [#allocation20], 0
    %35 = vsyncpa [#allocation6], 0
    %36 = vsyncpa [#allocation24], 0
    // Predicated region
    $region2: #{tpu_custom_call.1} parent=1 // pred_check
      _
    $region3: #{tpu_custom_call.1} parent=1 // pred_check_branch
      %38 = sbr.rel (0) target = $region5
    $region4: #{tpu_custom_call.1} parent=1 // pred_region
      %s40 = ssub.s32 128, 128
      %41 = vsyncadd [#allocation5], %s40
      %s43 = sshll.u32 [#allocation4], 4
      %s44 = int_to_ptr.vmem [resolvable:$true] %s43
      %46 = dma.hbm_to_vmem [thread:$0]  %s0, 128, %s44, [#allocation5]
    $region5: #{tpu_custom_call.1} parent=1 // pred_fallthru
      _
    // Predicated region
    $region6: #{tpu_custom_call.1} parent=1 // pred_check
      _
    $region7: #{tpu_custom_call.1} parent=1 // pred_check_branch
      %48 = sbr.rel (0) target = $region9
    $region8: #{tpu_custom_call.1} parent=1 // pred_region
      %s50 = ssub.s32 1024, 1024
      %51 = vsyncadd [#allocation8], %s50
      %s52 = sshll.u32 [#allocation7], 4
      %s53 = int_to_ptr.vmem [resolvable:$true] %s52
      %58 = dma.hbm_to_vmem [thread:$0]  %s1, 1024, %s53, [#allocation8], 256, 256, 16
    $region9: #{tpu_custom_call.1} parent=1 // pred_fallthru
      _
    // Predicated region
    $region10: #{tpu_custom_call.1} parent=1 // pred_check
      _
    $region11: #{tpu_custom_call.1} parent=1 // pred_check_branch
      %60 = sbr.rel (0) target = $region13
    $region12: #{tpu_custom_call.1} parent=1 // pred_region
      _
    $region13: #{tpu_custom_call.1} parent=1 // pred_fallthru
      _
    // Predicated region
    $region14: #{tpu_custom_call.1} parent=1 // pred_check
      _
    $region15: #{tpu_custom_call.1} parent=1 // pred_check_branch
      %62 = sbr.rel (0) target = $region17
    $region16: #{tpu_custom_call.1} parent=1 // pred_region
      %s64 = ssub.s32 16384, 16384
      %65 = vsyncadd [#allocation8], %s64
      %s66 = sshll.u32 [#allocation9], 4
      %s67 = int_to_ptr.vmem [resolvable:$true] %s66
      %72 = dma.hbm_to_vmem [thread:$0]  %s3, 16384, %s67, [#allocation8], 512, 512, 32
    $region17: #{tpu_custom_call.1} parent=1 // pred_fallthru
      _
    // Predicated region
    $region18: #{tpu_custom_call.1} parent=1 // pred_check
      _
    $region19: #{tpu_custom_call.1} parent=1 // pred_check_branch
      %74 = sbr.rel (0) target = $region21
    $region20: #{tpu_custom_call.1} parent=1 // pred_region
      %s76 = ssub.s32 8192, 8192
      %77 = vsyncadd [#allocation11], %s76
      %s78 = sshll.u32 [#allocation10], 4
      %s79 = int_to_ptr.vmem [resolvable:$true] %s78
      %84 = dma.hbm_to_vmem [thread:$0]  %s4, 8192, %s79, [#allocation11], 512, 512, 32
    $region21: #{tpu_custom_call.1} parent=1 // pred_fallthru
      _
    // Predicated region
    $region22: #{tpu_custom_call.1} parent=1 // pred_check
      _
    $region23: #{tpu_custom_call.1} parent=1 // pred_check_branch
      %86 = sbr.rel (0) target = $region25
    $region24: #{tpu_custom_call.1} parent=1 // pred_region
      _
    $region25: #{tpu_custom_call.1} parent=1 // pred_fallthru
      _
    // Predicated region
    $region26: #{tpu_custom_call.1} parent=1 // pred_check
      _
    $region27: #{tpu_custom_call.1} parent=1 // pred_check_branch
      %88 = sbr.rel (0) target = $region29
    $region28: #{tpu_custom_call.1} parent=1 // pred_region
      %s90 = ssub.s32 4096, 4096
      %91 = vsyncadd [#allocation11], %s90
      %s92 = sshll.u32 [#allocation12], 4
      %s93 = int_to_ptr.vmem [resolvable:$true] %s92
      %98 = dma.hbm_to_vmem [thread:$0]  %s6, 4096, %s93, [#allocation11], 256, 256, 16
    $region29: #{tpu_custom_call.1} parent=1 // pred_fallthru
      _
    // Predicated region
    $region30: #{tpu_custom_call.1} parent=1 // pred_check
      _
    $region31: #{tpu_custom_call.1} parent=1 // pred_check_branch
      %100 = sbr.rel (0) target = $region33
    $region32: #{tpu_custom_call.1} parent=1 // pred_region
      _
    $region33: #{tpu_custom_call.1} parent=1 // pred_fallthru
      _
    // Predicated region
    $region34: #{tpu_custom_call.1} parent=1 // pred_check
      _
    $region35: #{tpu_custom_call.1} parent=1 // pred_check_branch
      %102 = sbr.rel (0) target = $region37
    $region36: #{tpu_custom_call.1} parent=1 // pred_region
      %s104 = ssub.s32 8192, 8192
      %105 = vsyncadd [#allocation14], %s104
      %s106 = sshll.u32 [#allocation13], 4
      %s107 = int_to_ptr.vmem [resolvable:$true] %s106
      %112 = dma.hbm_to_vmem [thread:$0]  %s8, 8192, %s107, [#allocation14], 256, 256, 16
    $region37: #{tpu_custom_call.1} parent=1 // pred_fallthru
      _
    // Predicated region
    $region38: #{tpu_custom_call.1} parent=1 // pred_check
      _
    $region39: #{tpu_custom_call.1} parent=1 // pred_check_branch
      %114 = sbr.rel (0) target = $region41
    $region40: #{tpu_custom_call.1} parent=1 // pred_region
      _
    $region41: #{tpu_custom_call.1} parent=1 // pred_fallthru
      _
    // Predicated region
    $region42: #{tpu_custom_call.1} parent=1 // pred_check
      _
    $region43: #{tpu_custom_call.1} parent=1 // pred_check_branch
      %116 = sbr.rel (0) target = $region45
    $region44: #{tpu_custom_call.1} parent=1 // pred_region
      %s118 = ssub.s32 16384, 16384
      %119 = vsyncadd [#allocation14], %s118
      %s120 = sshll.u32 [#allocation15], 4
      %s121 = int_to_ptr.vmem [resolvable:$true] %s120
      %126 = dma.hbm_to_vmem [thread:$0]  %s10, 16384, %s121, [#allocation14], 512, 512, 32
    $region45: #{tpu_custom_call.1} parent=1 // pred_fallthru
      _
    // Predicated region
    $region46: #{tpu_custom_call.1} parent=1 // pred_check
      _
    $region47: #{tpu_custom_call.1} parent=1 // pred_check_branch
      %128 = sbr.rel (0) target = $region49
    $region48: #{tpu_custom_call.1} parent=1 // pred_region
      _
    $region49: #{tpu_custom_call.1} parent=1 // pred_fallthru
      _
    // Predicated region
    $region50: #{tpu_custom_call.1} parent=1 // pred_check
      _
    $region51: #{tpu_custom_call.1} parent=1 // pred_check_branch
      %130 = sbr.rel (0) target = $region53
    $region52: #{tpu_custom_call.1} parent=1 // pred_region
      %s132 = ssub.s32 8192, 8192
      %133 = vsyncadd [#allocation17], %s132
      %s134 = sshll.u32 [#allocation16], 4
      %s135 = int_to_ptr.vmem [resolvable:$true] %s134
      %140 = dma.hbm_to_vmem [thread:$0]  %s12, 8192, %s135, [#allocation17], 256, 256, 16
    $region53: #{tpu_custom_call.1} parent=1 // pred_fallthru
      _
    // Predicated region
    $region54: #{tpu_custom_call.1} parent=1 // pred_check
      _
    $region55: #{tpu_custom_call.1} parent=1 // pred_check_branch
      %142 = sbr.rel (0) target = $region57
    $region56: #{tpu_custom_call.1} parent=1 // pred_region
      _
    $region57: #{tpu_custom_call.1} parent=1 // pred_fallthru
      _
    // Predicated region
    $region58: #{tpu_custom_call.1} parent=1 // pred_check
      _
    $region59: #{tpu_custom_call.1} parent=1 // pred_check_branch
      %144 = sbr.rel (0) target = $region61
    $region60: #{tpu_custom_call.1} parent=1 // pred_region
      %s146 = ssub.s32 8192, 8192
      %147 = vsyncadd [#allocation17], %s146
      %s148 = sshll.u32 [#allocation18], 4
      %s149 = int_to_ptr.vmem [resolvable:$true] %s148
      %154 = dma.hbm_to_vmem [thread:$0]  %s14, 8192, %s149, [#allocation17], 256, 256, 16
    $region61: #{tpu_custom_call.1} parent=1 // pred_fallthru
      _
    // Predicated region
    $region62: #{tpu_custom_call.1} parent=1 // pred_check
      _
    $region63: #{tpu_custom_call.1} parent=1 // pred_check_branch
      %156 = sbr.rel (0) target = $region65
    $region64: #{tpu_custom_call.1} parent=1 // pred_region
      _
    $region65: #{tpu_custom_call.1} parent=1 // pred_fallthru
      _
    // Predicated region
    $region66: #{tpu_custom_call.1} parent=1 // pred_check
      _
    $region67: #{tpu_custom_call.1} parent=1 // pred_check_branch
      %158 = sbr.rel (0) target = $region69
    $region68: #{tpu_custom_call.1} parent=1 // pred_region
      %s160 = ssub.s32 4096, 4096
      %161 = vsyncadd [#allocation20], %s160
      %s162 = sshll.u32 [#allocation19], 4
      %s163 = int_to_ptr.vmem [resolvable:$true] %s162
      %168 = dma.hbm_to_vmem [thread:$0]  %s16, 4096, %s163, [#allocation20], 128, 128, 8
    $region69: #{tpu_custom_call.1} parent=1 // pred_fallthru
      _
    // Predicated region
    $region70: #{tpu_custom_call.1} parent=1 // pred_check
      _
    $region71: #{tpu_custom_call.1} parent=1 // pred_check_branch
      %170 = sbr.rel (0) target = $region73
    $region72: #{tpu_custom_call.1} parent=1 // pred_region
      %s172 = ssub.s32 4096, 4096
      %173 = vsyncadd [#allocation20], %s172
      %s174 = sshll.u32 [#allocation21], 4
      %s175 = int_to_ptr.vmem [resolvable:$true] %s174
      %180 = dma.hbm_to_vmem [thread:$0]  %s17, 4096, %s175, [#allocation20], 128, 128, 8
    $region73: #{tpu_custom_call.1} parent=1 // pred_fallthru
      _
    // Predicated region
    $region74: #{tpu_custom_call.1} parent=1 // pred_check
      _
    $region75: #{tpu_custom_call.1} parent=1 // pred_check_branch
      %182 = sbr.rel (0) target = $region77
    $region76: #{tpu_custom_call.1} parent=1 // pred_region
      _
    $region77: #{tpu_custom_call.1} parent=1 // pred_fallthru
      _
    // Predicated region
    $region78: #{tpu_custom_call.1} parent=1 // pred_check
      _
    $region79: #{tpu_custom_call.1} parent=1 // pred_check_branch
      %184 = sbr.rel (0) target = $region81
    $region80: #{tpu_custom_call.1} parent=1 // pred_region
      _
    $region81: #{tpu_custom_call.1} parent=1 // pred_fallthru
      _
    // Predicated region
    $region82: #{tpu_custom_call.1} parent=1 // pred_check
      _
    $region83: #{tpu_custom_call.1} parent=1 // pred_check_branch
      %186 = sbr.rel (0) target = $region85
    $region84: #{tpu_custom_call.1} parent=1 // pred_region
      _
    $region85: #{tpu_custom_call.1} parent=1 // pred_fallthru
      _
    // Predicated region
    $region86: #{tpu_custom_call.1} parent=1 // pred_check
      _
    $region87: #{tpu_custom_call.1} parent=1 // pred_check_branch
      %188 = sbr.rel (0) target = $region89
    $region88: #{tpu_custom_call.1} parent=1 // pred_region
      %189 = dma.done [#allocation5], 128
    $region89: #{tpu_custom_call.1} parent=1 // pred_fallthru
      _
    // Predicated region
    $region90: #{tpu_custom_call.1} parent=1 // pred_check
      _
    $region91: #{tpu_custom_call.1} parent=1 // pred_check_branch
      %191 = sbr.rel (0) target = $region93
    $region92: #{tpu_custom_call.1} parent=1 // pred_region
      %192 = dma.done [#allocation8], 1024
    $region93: #{tpu_custom_call.1} parent=1 // pred_fallthru
      _
    // Predicated region
    $region94: #{tpu_custom_call.1} parent=1 // pred_check
      _
    $region95: #{tpu_custom_call.1} parent=1 // pred_check_branch
      %194 = sbr.rel (0) target = $region97
    $region96: #{tpu_custom_call.1} parent=1 // pred_region
      %195 = dma.done [#allocation8], 16384
    $region97: #{tpu_custom_call.1} parent=1 // pred_fallthru
      _
    // Predicated region
    $region98: #{tpu_custom_call.1} parent=1 // pred_check
      _
    $region99: #{tpu_custom_call.1} parent=1 // pred_check_branch
      %197 = sbr.rel (0) target = $region101
    $region100: #{tpu_custom_call.1} parent=1 // pred_region
      %198 = dma.done [#allocation11], 8192
    $region101: #{tpu_custom_call.1} parent=1 // pred_fallthru
      _
    // Predicated region
    $region102: #{tpu_custom_call.1} parent=1 // pred_check
      _
    $region103: #{tpu_custom_call.1} parent=1 // pred_check_branch
      %200 = sbr.rel (0) target = $region105
    $region104: #{tpu_custom_call.1} parent=1 // pred_region
      %201 = dma.done [#allocation11], 4096
    $region105: #{tpu_custom_call.1} parent=1 // pred_fallthru
      _
    // Predicated region
    $region106: #{tpu_custom_call.1} parent=1 // pred_check
      _
    $region107: #{tpu_custom_call.1} parent=1 // pred_check_branch
      %203 = sbr.rel (0) target = $region109
    $region108: #{tpu_custom_call.1} parent=1 // pred_region
      %204 = dma.done [#allocation14], 8192
    $region109: #{tpu_custom_call.1} parent=1 // pred_fallthru
      _
    // Predicated region
    $region110: #{tpu_custom_call.1} parent=1 // pred_check
      _
    $region111: #{tpu_custom_call.1} parent=1 // pred_check_branch
      %206 = sbr.rel (0) target = $region113
    $region112: #{tpu_custom_call.1} parent=1 // pred_region
      %207 = dma.done [#allocation14], 16384
    $region113: #{tpu_custom_call.1} parent=1 // pred_fallthru
      _
    // Predicated region
    $region114: #{tpu_custom_call.1} parent=1 // pred_check
      _
    $region115: #{tpu_custom_call.1} parent=1 // pred_check_branch
      %209 = sbr.rel (0) target = $region117
    $region116: #{tpu_custom_call.1} parent=1 // pred_region
      %210 = dma.done [#allocation17], 8192
    $region117: #{tpu_custom_call.1} parent=1 // pred_fallthru
      _
    // Predicated region
    $region118: #{tpu_custom_call.1} parent=1 // pred_check
      _
    $region119: #{tpu_custom_call.1} parent=1 // pred_check_branch
      %212 = sbr.rel (0) target = $region121
    $region120: #{tpu_custom_call.1} parent=1 // pred_region
      %213 = dma.done [#allocation17], 8192
    $region121: #{tpu_custom_call.1} parent=1 // pred_fallthru
      _
    // Predicated region
    $region122: #{tpu_custom_call.1} parent=1 // pred_check
      _
    $region123: #{tpu_custom_call.1} parent=1 // pred_check_branch
      %215 = sbr.rel (0) target = $region125
    $region124: #{tpu_custom_call.1} parent=1 // pred_region
      %216 = dma.done [#allocation20], 4096
    $region125: #{tpu_custom_call.1} parent=1 // pred_fallthru
      _
    // Predicated region
    $region126: #{tpu_custom_call.1} parent=1 // pred_check
      _
    $region127: #{tpu_custom_call.1} parent=1 // pred_check_branch
      %218 = sbr.rel (0) target = $region129
    $region128: #{tpu_custom_call.1} parent=1 // pred_region
      %219 = dma.done [#allocation20], 4096
    $region129: #{tpu_custom_call.1} parent=1 // pred_fallthru
      _
    %v220 = vld [vmem:[#allocation4] sm:$0xff]
    %v221 = vld [vmem:[#allocation7] sm:$0xff]
    %v222 = vld [vmem:[#allocation7 + $0x8] sm:$0xff]
    %v223 = vld [vmem:[#allocation7 + $0x10] sm:$0xff]
    %v224 = vld [vmem:[#allocation7 + $0x18] sm:$0xff]
    %v225 = vld [vmem:[#allocation7 + $0x20] sm:$0xff]
    %v226 = vld [vmem:[#allocation7 + $0x28] sm:$0xff]
    %v227 = vld [vmem:[#allocation7 + $0x30] sm:$0xff]
    %v228 = vld [vmem:[#allocation7 + $0x38] sm:$0xff]
    %v229 = vld [vmem:[%s2] sm:$0x3]
    %v231 = vlaneseq
    %v232 = vshrl.u32 %v231, 7
    %v233 = vsub.s32 0, %v232
    %v234 = vrot.slane %v229, %v233
    %v235 = vlaneseq
    %v236 = vshrl.u32 %v235, 7
    %v237 = vsub.s32 1, %v236
    %v238 = vrot.slane %v229, %v237
    %vm241 = vcmask 261120
    %v243 = vsel %vm241, %v220, 0
    %245 = vmatprep.subr.mxu0 %v222
    %246 = vmatpush1.msra.mxu0 %v221
    %247 = vmatprep.subr.mxu0 %v224
    %248 = vmatpush1.msra.mxu0 %v223
    %249 = vmatprep.subr.mxu0 %v226
    %250 = vmatpush1.msra.mxu0 %v225
    %251 = vmatprep.subr.mxu0 %v228
    %252 = vmatpush1.msra.mxu0 %v227
    %253 = vmatprep.subr.mxu0 0.0
    %254 = vmatpush1.msra.mxu0 0.0
    %255 = vmatprep.subr.mxu0 0.0
    %256 = vmatpush1.msra.mxu0 0.0
    %257 = vmatprep.subr.mxu0 0.0
    %258 = vmatpush1.msra.mxu0 0.0
    %259 = vmatprep.subr.mxu0 0.0
    %260 = vmatpush1.msra.mxu0 0.0
    %261 = vmatprep.subr.mxu0 0.0
    %262 = vmatpush1.msra.mxu0 0.0
    %263 = vmatprep.subr.mxu0 0.0
    %264 = vmatpush1.msra.mxu0 0.0
    %265 = vmatprep.subr.mxu0 0.0
    %266 = vmatpush1.msra.mxu0 0.0
    %267 = vmatprep.subr.mxu0 0.0
    %268 = vmatpush1.msra.mxu0 0.0
    %269 = vmatprep.subr.mxu0 0.0
    %270 = vmatpush1.msra.mxu0 0.0
    %271 = vmatprep.subr.mxu0 0.0
    %272 = vmatpush1.msra.mxu0 0.0
    %273 = vmatprep.subr.mxu0 0.0
    %274 = vmatpush1.msra.mxu0 0.0
    %275 = vmatprep.subr.mxu0 0.0
    %276 = vmatpush1.msra.mxu0 0.0
    %277 = vmatprep.subr.mxu0 0.0
    %278 = vmatpush1.msra.mxu0 0.0
    %279 = vmatprep.subr.mxu0 0.0
    %280 = vmatpush1.msra.mxu0 0.0
    %281 = vmatprep.subr.mxu0 0.0
    %282 = vmatpush1.msra.mxu0 0.0
    %283 = vmatprep.subr.mxu0 0.0
    %284 = vmatpush1.msra.mxu0 0.0
    %285 = vmatprep.subr.mxu0 0.0
    %286 = vmatpush1.msra.mxu0 0.0
    %287 = vmatprep.subr.mxu0 0.0
    %288 = vmatpush1.msra.mxu0 0.0
    %289 = vmatprep.subr.mxu0 0.0
    %290 = vmatpush1.msra.mxu0 0.0
    %291 = vmatprep.subr.mxu0 0.0
    %292 = vmatpush1.msra.mxu0 0.0
    %293 = vmatprep.subr.mxu0 0.0
    %294 = vmatpush1.msra.mxu0 0.0
    %295 = vmatprep.subr.mxu0 0.0
    %296 = vmatpush1.msra.mxu0 0.0
    %297 = vmatprep.subr.mxu0 0.0
    %298 = vmatpush1.msra.mxu0 0.0
    %299 = vmatprep.subr.mxu0 0.0
    %300 = vmatpush1.msra.mxu0 0.0
    %301 = vmatprep.subr.mxu0 0.0
    %302 = vmatpush1.msra.mxu0 0.0
    %303 = vmatprep.subr.mxu0 0.0
    %304 = vmatpush1.msra.mxu0 0.0
    %305 = vmatprep.subr.mxu0 0.0
    %306 = vmatpush1.msra.mxu0 0.0
    %307 = vmatprep.subr.mxu0 0.0
    %308 = vmatpush1.msra.mxu0 0.0
    %309 = vmatprep.mubr.f32.mxu0 0.0
    %310 = vmatmul.mubr.f32.gmra.mrb[0].mxu0 %v243
    %v311 = vpop.f32.mrb[0].mxu0
    %v312 = vadd.f32 %v234, %v311
    %v313 = vpop.f32.mrb[0].mxu0
    %v314 = vadd.f32 %v238, %v313
    %315 = vdwg.mxu0
    %v316 = vmul.f32 %v312, 0.5
    %v317 = vmul.f32 %v314, 0.5
    %v318 = vtanh.pop %v316
    %v319 = vtanh.pop %v317
    %v320 = vmul.f32 %v318, 0.5
    %v321 = vmul.f32 %v319, 0.5
    %v322 = vadd.f32 %v320, 0.5
    %v323 = vadd.f32 %v321, 0.5
    %v324 = vmul.f32 %v312, %v322
    %v325 = vmul.f32 %v314, %v323
    %v326 = vld [vmem:[#allocation9] sm:$0xff]
    %v327 = vld [vmem:[#allocation9 + $0x8] sm:$0xff]
    %v328 = vld [vmem:[#allocation9 + $0x10] sm:$0xff]
    %v329 = vld [vmem:[#allocation9 + $0x18] sm:$0xff]
    %v330 = vld [vmem:[#allocation9 + $0x20] sm:$0xff]
    %v331 = vld [vmem:[#allocation9 + $0x28] sm:$0xff]
    %v332 = vld [vmem:[#allocation9 + $0x30] sm:$0xff]
    %v333 = vld [vmem:[#allocation9 + $0x38] sm:$0xff]
    %v334 = vld [vmem:[#allocation9 + $0x40] sm:$0xff]
    %v335 = vld [vmem:[#allocation9 + $0x48] sm:$0xff]
    %v336 = vld [vmem:[#allocation9 + $0x50] sm:$0xff]
    %v337 = vld [vmem:[#allocation9 + $0x58] sm:$0xff]
    %v338 = vld [vmem:[#allocation9 + $0x60] sm:$0xff]
    %v339 = vld [vmem:[#allocation9 + $0x68] sm:$0xff]
    %v340 = vld [vmem:[#allocation9 + $0x70] sm:$0xff]
    %v341 = vld [vmem:[#allocation9 + $0x78] sm:$0xff]
    %v342 = vld [vmem:[#allocation9 + $0x80] sm:$0xff]
    %v343 = vld [vmem:[#allocation9 + $0x88] sm:$0xff]
    %v344 = vld [vmem:[#allocation9 + $0x90] sm:$0xff]
    %v345 = vld [vmem:[#allocation9 + $0x98] sm:$0xff]
    %v346 = vld [vmem:[#allocation9 + $0xa0] sm:$0xff]
    %v347 = vld [vmem:[#allocation9 + $0xa8] sm:$0xff]
    %v348 = vld [vmem:[#allocation9 + $0xb0] sm:$0xff]
    %v349 = vld [vmem:[#allocation9 + $0xb8] sm:$0xff]
    %v350 = vld [vmem:[#allocation9 + $0xc0] sm:$0xff]
    %v351 = vld [vmem:[#allocation9 + $0xc8] sm:$0xff]
    %v352 = vld [vmem:[#allocation9 + $0xd0] sm:$0xff]
    %v353 = vld [vmem:[#allocation9 + $0xd8] sm:$0xff]
    %v354 = vld [vmem:[#allocation9 + $0xe0] sm:$0xff]
    %v355 = vld [vmem:[#allocation9 + $0xe8] sm:$0xff]
    %v356 = vld [vmem:[#allocation9 + $0xf0] sm:$0xff]
    %v357 = vld [vmem:[#allocation9 + $0xf8] sm:$0xff]
    %v358 = vld [vmem:[#allocation9 + $0x100] sm:$0xff]
    %v359 = vld [vmem:[#allocation9 + $0x108] sm:$0xff]
    %v360 = vld [vmem:[#allocation9 + $0x110] sm:$0xff]
    %v361 = vld [vmem:[#allocation9 + $0x118] sm:$0xff]
    %v362 = vld [vmem:[#allocation9 + $0x120] sm:$0xff]
    %v363 = vld [vmem:[#allocation9 + $0x128] sm:$0xff]
    %v364 = vld [vmem:[#allocation9 + $0x130] sm:$0xff]
    %v365 = vld [vmem:[#allocation9 + $0x138] sm:$0xff]
    %v366 = vld [vmem:[#allocation9 + $0x140] sm:$0xff]
    %v367 = vld [vmem:[#allocation9 + $0x148] sm:$0xff]
    %v368 = vld [vmem:[#allocation9 + $0x150] sm:$0xff]
    %v369 = vld [vmem:[#allocation9 + $0x158] sm:$0xff]
    %v370 = vld [vmem:[#allocation9 + $0x160] sm:$0xff]
    %v371 = vld [vmem:[#allocation9 + $0x168] sm:$0xff]
    %v372 = vld [vmem:[#allocation9 + $0x170] sm:$0xff]
    %v373 = vld [vmem:[#allocation9 + $0x178] sm:$0xff]
    %v374 = vld [vmem:[#allocation9 + $0x180] sm:$0xff]
    %v375 = vld [vmem:[#allocation9 + $0x188] sm:$0xff]
    %v376 = vld [vmem:[#allocation9 + $0x190] sm:$0xff]
    %v377 = vld [vmem:[#allocation9 + $0x198] sm:$0xff]
    %v378 = vld [vmem:[#allocation9 + $0x1a0] sm:$0xff]
    %v379 = vld [vmem:[#allocation9 + $0x1a8] sm:$0xff]
    %v380 = vld [vmem:[#allocation9 + $0x1b0] sm:$0xff]
    %v381 = vld [vmem:[#allocation9 + $0x1b8] sm:$0xff]
    %v382 = vld [vmem:[#allocation9 + $0x1c0] sm:$0xff]
    %v383 = vld [vmem:[#allocation9 + $0x1c8] sm:$0xff]
    %v384 = vld [vmem:[#allocation9 + $0x1d0] sm:$0xff]
    %v385 = vld [vmem:[#allocation9 + $0x1d8] sm:$0xff]
    %v386 = vld [vmem:[#allocation9 + $0x1e0] sm:$0xff]
    %v387 = vld [vmem:[#allocation9 + $0x1e8] sm:$0xff]
    %v388 = vld [vmem:[#allocation9 + $0x1f0] sm:$0xff]
    %v389 = vld [vmem:[#allocation9 + $0x1f8] sm:$0xff]
    %v390 = vld [vmem:[#allocation9 + $0x200] sm:$0xff]
    %v391 = vld [vmem:[#allocation9 + $0x208] sm:$0xff]
    %v392 = vld [vmem:[#allocation9 + $0x210] sm:$0xff]
    %v393 = vld [vmem:[#allocation9 + $0x218] sm:$0xff]
    %v394 = vld [vmem:[#allocation9 + $0x220] sm:$0xff]
    %v395 = vld [vmem:[#allocation9 + $0x228] sm:$0xff]
    %v396 = vld [vmem:[#allocation9 + $0x230] sm:$0xff]
    %v397 = vld [vmem:[#allocation9 + $0x238] sm:$0xff]
    %v398 = vld [vmem:[#allocation9 + $0x240] sm:$0xff]
    %v399 = vld [vmem:[#allocation9 + $0x248] sm:$0xff]
    %v400 = vld [vmem:[#allocation9 + $0x250] sm:$0xff]
    %v401 = vld [vmem:[#allocation9 + $0x258] sm:$0xff]
    %v402 = vld [vmem:[#allocation9 + $0x260] sm:$0xff]
    %v403 = vld [vmem:[#allocation9 + $0x268] sm:$0xff]
    %v404 = vld [vmem:[#allocation9 + $0x270] sm:$0xff]
    %v405 = vld [vmem:[#allocation9 + $0x278] sm:$0xff]
    %v406 = vld [vmem:[#allocation9 + $0x280] sm:$0xff]
    %v407 = vld [vmem:[#allocation9 + $0x288] sm:$0xff]
    %v408 = vld [vmem:[#allocation9 + $0x290] sm:$0xff]
    %v409 = vld [vmem:[#allocation9 + $0x298] sm:$0xff]
    %v410 = vld [vmem:[#allocation9 + $0x2a0] sm:$0xff]
    %v411 = vld [vmem:[#allocation9 + $0x2a8] sm:$0xff]
    %v412 = vld [vmem:[#allocation9 + $0x2b0] sm:$0xff]
    %v413 = vld [vmem:[#allocation9 + $0x2b8] sm:$0xff]
    %v414 = vld [vmem:[#allocation9 + $0x2c0] sm:$0xff]
    %v415 = vld [vmem:[#allocation9 + $0x2c8] sm:$0xff]
    %v416 = vld [vmem:[#allocation9 + $0x2d0] sm:$0xff]
    %v417 = vld [vmem:[#allocation9 + $0x2d8] sm:$0xff]
    %v418 = vld [vmem:[#allocation9 + $0x2e0] sm:$0xff]
    %v419 = vld [vmem:[#allocation9 + $0x2e8] sm:$0xff]
    %v420 = vld [vmem:[#allocation9 + $0x2f0] sm:$0xff]
    %v421 = vld [vmem:[#allocation9 + $0x2f8] sm:$0xff]
    %v422 = vld [vmem:[#allocation9 + $0x300] sm:$0xff]
    %v423 = vld [vmem:[#allocation9 + $0x308] sm:$0xff]
    %v424 = vld [vmem:[#allocation9 + $0x310] sm:$0xff]
    %v425 = vld [vmem:[#allocation9 + $0x318] sm:$0xff]
    %v426 = vld [vmem:[#allocation9 + $0x320] sm:$0xff]
    %v427 = vld [vmem:[#allocation9 + $0x328] sm:$0xff]
    %v428 = vld [vmem:[#allocation9 + $0x330] sm:$0xff]
    %v429 = vld [vmem:[#allocation9 + $0x338] sm:$0xff]
    %v430 = vld [vmem:[#allocation9 + $0x340] sm:$0xff]
    %v431 = vld [vmem:[#allocation9 + $0x348] sm:$0xff]
    %v432 = vld [vmem:[#allocation9 + $0x350] sm:$0xff]
    %v433 = vld [vmem:[#allocation9 + $0x358] sm:$0xff]
    %v434 = vld [vmem:[#allocation9 + $0x360] sm:$0xff]
    %v435 = vld [vmem:[#allocation9 + $0x368] sm:$0xff]
    %v436 = vld [vmem:[#allocation9 + $0x370] sm:$0xff]
    %v437 = vld [vmem:[#allocation9 + $0x378] sm:$0xff]
    %v438 = vld [vmem:[#allocation9 + $0x380] sm:$0xff]
    %v439 = vld [vmem:[#allocation9 + $0x388] sm:$0xff]
    %v440 = vld [vmem:[#allocation9 + $0x390] sm:$0xff]
    %v441 = vld [vmem:[#allocation9 + $0x398] sm:$0xff]
    %v442 = vld [vmem:[#allocation9 + $0x3a0] sm:$0xff]
    %v443 = vld [vmem:[#allocation9 + $0x3a8] sm:$0xff]
    %v444 = vld [vmem:[#allocation9 + $0x3b0] sm:$0xff]
    %v445 = vld [vmem:[#allocation9 + $0x3b8] sm:$0xff]
    %v446 = vld [vmem:[#allocation9 + $0x3c0] sm:$0xff]
    %v447 = vld [vmem:[#allocation9 + $0x3c8] sm:$0xff]
    %v448 = vld [vmem:[#allocation9 + $0x3d0] sm:$0xff]
    %v449 = vld [vmem:[#allocation9 + $0x3d8] sm:$0xff]
    %v450 = vld [vmem:[#allocation9 + $0x3e0] sm:$0xff]
    %v451 = vld [vmem:[#allocation9 + $0x3e8] sm:$0xff]
    %v452 = vld [vmem:[#allocation9 + $0x3f0] sm:$0xff]
    %v453 = vld [vmem:[#allocation9 + $0x3f8] sm:$0xff]
    %v454 = vld [vmem:[%s5] sm:$0xf]
    %v456 = vlaneseq
    %v457 = vshrl.u32 %v456, 7
    %v458 = vsub.s32 0, %v457
    %v459 = vrot.slane %v454, %v458
    %v460 = vlaneseq
    %v461 = vshrl.u32 %v460, 7
    %v462 = vsub.s32 1, %v461
    %v463 = vrot.slane %v454, %v462
    %v464 = vlaneseq
    %v465 = vshrl.u32 %v464, 7
    %v466 = vsub.s32 2, %v465
    %v467 = vrot.slane %v454, %v466
    %v468 = vlaneseq
    %v469 = vshrl.u32 %v468, 7
    %v470 = vsub.s32 3, %v469
    %v471 = vrot.slane %v454, %v470
    %476 = vmatprep.subr.mxu0 %v327
    %477 = vmatpush1.msra.mxu0 %v326
    %478 = vmatprep.subr.mxu0 %v331
    %479 = vmatpush1.msra.mxu0 %v330
    %480 = vmatprep.subr.mxu0 %v335
    %481 = vmatpush1.msra.mxu0 %v334
    %482 = vmatprep.subr.mxu0 %v339
    %483 = vmatpush1.msra.mxu0 %v338
    %484 = vmatprep.subr.mxu0 %v343
    %485 = vmatpush1.msra.mxu0 %v342
    %486 = vmatprep.subr.mxu0 %v347
    %487 = vmatpush1.msra.mxu0 %v346
    %488 = vmatprep.subr.mxu0 %v351
    %489 = vmatpush1.msra.mxu0 %v350
    %490 = vmatprep.subr.mxu0 %v355
    %491 = vmatpush1.msra.mxu0 %v354
    %492 = vmatprep.subr.mxu0 %v359
    %493 = vmatpush1.msra.mxu0 %v358
    %494 = vmatprep.subr.mxu0 %v363
    %495 = vmatpush1.msra.mxu0 %v362
    %496 = vmatprep.subr.mxu0 %v367
    %497 = vmatpush1.msra.mxu0 %v366
    %498 = vmatprep.subr.mxu0 %v371
    %499 = vmatpush1.msra.mxu0 %v370
    %500 = vmatprep.subr.mxu0 %v375
    %501 = vmatpush1.msra.mxu0 %v374
    %502 = vmatprep.subr.mxu0 %v379
    %503 = vmatpush1.msra.mxu0 %v378
    %504 = vmatprep.subr.mxu0 %v383
    %505 = vmatpush1.msra.mxu0 %v382
    %506 = vmatprep.subr.mxu0 %v387
    %507 = vmatpush1.msra.mxu0 %v386
    %508 = vmatprep.subr.mxu0 %v391
    %509 = vmatpush1.msra.mxu0 %v390
    %510 = vmatprep.subr.mxu0 %v395
    %511 = vmatpush1.msra.mxu0 %v394
    %512 = vmatprep.subr.mxu0 %v399
    %513 = vmatpush1.msra.mxu0 %v398
    %514 = vmatprep.subr.mxu0 %v403
    %515 = vmatpush1.msra.mxu0 %v402
    %516 = vmatprep.subr.mxu0 %v407
    %517 = vmatpush1.msra.mxu0 %v406
    %518 = vmatprep.subr.mxu0 %v411
    %519 = vmatpush1.msra.mxu0 %v410
    %520 = vmatprep.subr.mxu0 %v415
    %521 = vmatpush1.msra.mxu0 %v414
    %522 = vmatprep.subr.mxu0 %v419
    %523 = vmatpush1.msra.mxu0 %v418
    %524 = vmatprep.subr.mxu0 %v423
    %525 = vmatpush1.msra.mxu0 %v422
    %526 = vmatprep.subr.mxu0 %v427
    %527 = vmatpush1.msra.mxu0 %v426
    %528 = vmatprep.subr.mxu0 %v431
    %529 = vmatpush1.msra.mxu0 %v430
    %530 = vmatprep.subr.mxu0 %v435
    %531 = vmatpush1.msra.mxu0 %v434
    %532 = vmatprep.subr.mxu0 %v439
    %533 = vmatpush1.msra.mxu0 %v438
    %534 = vmatprep.subr.mxu0 %v443
    %535 = vmatpush1.msra.mxu0 %v442
    %536 = vmatprep.subr.mxu0 %v447
    %537 = vmatpush1.msra.mxu0 %v446
    %538 = vmatprep.subr.mxu0 %v451
    %539 = vmatpush1.msra.mxu0 %v450
    %540 = vmatprep.mubr.f32.mxu0 %v325
    %541 = vmatmul.mubr.f32.gmra.mrb[0].mxu0 %v324
    %v542 = vpop.f32.mrb[0].mxu0
    %v543 = vadd.f32 %v459, %v542
    %v544 = vpop.f32.mrb[0].mxu0
    %v545 = vadd.f32 %v463, %v544
    %546 = vdwg.mxu0
    %547 = vmatprep.subr.mxu0 %v329
    %548 = vmatpush1.msra.mxu0 %v328
    %549 = vmatprep.subr.mxu0 %v333
    %550 = vmatpush1.msra.mxu0 %v332
    %551 = vmatprep.subr.mxu0 %v337
    %552 = vmatpush1.msra.mxu0 %v336
    %553 = vmatprep.subr.mxu0 %v341
    %554 = vmatpush1.msra.mxu0 %v340
    %555 = vmatprep.subr.mxu0 %v345
    %556 = vmatpush1.msra.mxu0 %v344
    %557 = vmatprep.subr.mxu0 %v349
    %558 = vmatpush1.msra.mxu0 %v348
    %559 = vmatprep.subr.mxu0 %v353
    %560 = vmatpush1.msra.mxu0 %v352
    %561 = vmatprep.subr.mxu0 %v357
    %562 = vmatpush1.msra.mxu0 %v356
    %563 = vmatprep.subr.mxu0 %v361
    %564 = vmatpush1.msra.mxu0 %v360
    %565 = vmatprep.subr.mxu0 %v365
    %566 = vmatpush1.msra.mxu0 %v364
    %567 = vmatprep.subr.mxu0 %v369
    %568 = vmatpush1.msra.mxu0 %v368
    %569 = vmatprep.subr.mxu0 %v373
    %570 = vmatpush1.msra.mxu0 %v372
    %571 = vmatprep.subr.mxu0 %v377
    %572 = vmatpush1.msra.mxu0 %v376
    %573 = vmatprep.subr.mxu0 %v381
    %574 = vmatpush1.msra.mxu0 %v380
    %575 = vmatprep.subr.mxu0 %v385
    %576 = vmatpush1.msra.mxu0 %v384
    %577 = vmatprep.subr.mxu0 %v389
    %578 = vmatpush1.msra.mxu0 %v388
    %579 = vmatprep.subr.mxu0 %v393
    %580 = vmatpush1.msra.mxu0 %v392
    %581 = vmatprep.subr.mxu0 %v397
    %582 = vmatpush1.msra.mxu0 %v396
    %583 = vmatprep.subr.mxu0 %v401
    %584 = vmatpush1.msra.mxu0 %v400
    %585 = vmatprep.subr.mxu0 %v405
    %586 = vmatpush1.msra.mxu0 %v404
    %587 = vmatprep.subr.mxu0 %v409
    %588 = vmatpush1.msra.mxu0 %v408
    %589 = vmatprep.subr.mxu0 %v413
    %590 = vmatpush1.msra.mxu0 %v412
    %591 = vmatprep.subr.mxu0 %v417
    %592 = vmatpush1.msra.mxu0 %v416
    %593 = vmatprep.subr.mxu0 %v421
    %594 = vmatpush1.msra.mxu0 %v420
    %595 = vmatprep.subr.mxu0 %v425
    %596 = vmatpush1.msra.mxu0 %v424
    %597 = vmatprep.subr.mxu0 %v429
    %598 = vmatpush1.msra.mxu0 %v428
    %599 = vmatprep.subr.mxu0 %v433
    %600 = vmatpush1.msra.mxu0 %v432
    %601 = vmatprep.subr.mxu0 %v437
    %602 = vmatpush1.msra.mxu0 %v436
    %603 = vmatprep.subr.mxu0 %v441
    %604 = vmatpush1.msra.mxu0 %v440
    %605 = vmatprep.subr.mxu0 %v445
    %606 = vmatpush1.msra.mxu0 %v444
    %607 = vmatprep.subr.mxu0 %v449
    %608 = vmatpush1.msra.mxu0 %v448
    %609 = vmatprep.subr.mxu0 %v453
    %610 = vmatpush1.msra.mxu0 %v452
    %611 = vmatprep.mubr.f32.mxu0 %v325
    %612 = vmatmul.mubr.f32.gmra.mrb[0].mxu0 %v324
    %v613 = vpop.f32.mrb[0].mxu0
    %v614 = vadd.f32 %v467, %v613
    %v615 = vpop.f32.mrb[0].mxu0
    %v616 = vadd.f32 %v471, %v615
    %617 = vdwg.mxu0
    %618 = vst [vmem:[#allocation2] sm:$0xff] %v543
    %619 = vst [vmem:[#allocation2 + $0x8] sm:$0xff] %v545
    %620 = vst [vmem:[#allocation2 + $0x10] sm:$0xff] %v614
    %621 = vst [vmem:[#allocation2 + $0x18] sm:$0xff] %v616
    %v622 = vld [vmem:[%s19] sm:$0x1]
    %v623 = vld [vmem:[%s20] sm:$0x1]
    %s624 = smul.u32 0, 4
    %s625 = smul.addr %s624, 8
    %s626 = scalar_lea.vmem [#allocation2], %s625
    %v627 = vld [vmem:[%s626] sm:$0xff]
    %v628 = vld [vmem:[%s626 + $0x8] sm:$0xff]
    %v629 = vld [vmem:[%s626 + $0x10] sm:$0xff]
    %v630 = vld [vmem:[%s626 + $0x18] sm:$0xff]
    %v631 = vld [vmem:[#allocation10] sm:$0xff]
    %v632 = vld [vmem:[#allocation10 + $0x8] sm:$0xff]
    %v633 = vld [vmem:[#allocation10 + $0x10] sm:$0xff]
    %v634 = vld [vmem:[#allocation10 + $0x18] sm:$0xff]
    %v635 = vld [vmem:[#allocation10 + $0x20] sm:$0xff]
    %v636 = vld [vmem:[#allocation10 + $0x28] sm:$0xff]
    %v637 = vld [vmem:[#allocation10 + $0x30] sm:$0xff]
    %v638 = vld [vmem:[#allocation10 + $0x38] sm:$0xff]
    %v639 = vld [vmem:[#allocation10 + $0x40] sm:$0xff]
    %v640 = vld [vmem:[#allocation10 + $0x48] sm:$0xff]
    %v641 = vld [vmem:[#allocation10 + $0x50] sm:$0xff]
    %v642 = vld [vmem:[#allocation10 + $0x58] sm:$0xff]
    %v643 = vld [vmem:[#allocation10 + $0x60] sm:$0xff]
    %v644 = vld [vmem:[#allocation10 + $0x68] sm:$0xff]
    %v645 = vld [vmem:[#allocation10 + $0x70] sm:$0xff]
    %v646 = vld [vmem:[#allocation10 + $0x78] sm:$0xff]
    %v647 = vld [vmem:[#allocation10 + $0x80] sm:$0xff]
    %v648 = vld [vmem:[#allocation10 + $0x88] sm:$0xff]
    %v649 = vld [vmem:[#allocation10 + $0x90] sm:$0xff]
    %v650 = vld [vmem:[#allocation10 + $0x98] sm:$0xff]
    %v651 = vld [vmem:[#allocation10 + $0xa0] sm:$0xff]
    %v652 = vld [vmem:[#allocation10 + $0xa8] sm:$0xff]
    %v653 = vld [vmem:[#allocation10 + $0xb0] sm:$0xff]
    %v654 = vld [vmem:[#allocation10 + $0xb8] sm:$0xff]
    %v655 = vld [vmem:[#allocation10 + $0xc0] sm:$0xff]
    %v656 = vld [vmem:[#allocation10 + $0xc8] sm:$0xff]
    %v657 = vld [vmem:[#allocation10 + $0xd0] sm:$0xff]
    %v658 = vld [vmem:[#allocation10 + $0xd8] sm:$0xff]
    %v659 = vld [vmem:[#allocation10 + $0xe0] sm:$0xff]
    %v660 = vld [vmem:[#allocation10 + $0xe8] sm:$0xff]
    %v661 = vld [vmem:[#allocation10 + $0xf0] sm:$0xff]
    %v662 = vld [vmem:[#allocation10 + $0xf8] sm:$0xff]
    %v663 = vld [vmem:[#allocation10 + $0x100] sm:$0xff]
    %v664 = vld [vmem:[#allocation10 + $0x108] sm:$0xff]
    %v665 = vld [vmem:[#allocation10 + $0x110] sm:$0xff]
    %v666 = vld [vmem:[#allocation10 + $0x118] sm:$0xff]
    %v667 = vld [vmem:[#allocation10 + $0x120] sm:$0xff]
    %v668 = vld [vmem:[#allocation10 + $0x128] sm:$0xff]
    %v669 = vld [vmem:[#allocation10 + $0x130] sm:$0xff]
    %v670 = vld [vmem:[#allocation10 + $0x138] sm:$0xff]
    %v671 = vld [vmem:[#allocation10 + $0x140] sm:$0xff]
    %v672 = vld [vmem:[#allocation10 + $0x148] sm:$0xff]
    %v673 = vld [vmem:[#allocation10 + $0x150] sm:$0xff]
    %v674 = vld [vmem:[#allocation10 + $0x158] sm:$0xff]
    %v675 = vld [vmem:[#allocation10 + $0x160] sm:$0xff]
    %v676 = vld [vmem:[#allocation10 + $0x168] sm:$0xff]
    %v677 = vld [vmem:[#allocation10 + $0x170] sm:$0xff]
    %v678 = vld [vmem:[#allocation10 + $0x178] sm:$0xff]
    %v679 = vld [vmem:[#allocation10 + $0x180] sm:$0xff]
    %v680 = vld [vmem:[#allocation10 + $0x188] sm:$0xff]
    %v681 = vld [vmem:[#allocation10 + $0x190] sm:$0xff]
    %v682 = vld [vmem:[#allocation10 + $0x198] sm:$0xff]
    %v683 = vld [vmem:[#allocation10 + $0x1a0] sm:$0xff]
    %v684 = vld [vmem:[#allocation10 + $0x1a8] sm:$0xff]
    %v685 = vld [vmem:[#allocation10 + $0x1b0] sm:$0xff]
    %v686 = vld [vmem:[#allocation10 + $0x1b8] sm:$0xff]
    %v687 = vld [vmem:[#allocation10 + $0x1c0] sm:$0xff]
    %v688 = vld [vmem:[#allocation10 + $0x1c8] sm:$0xff]
    %v689 = vld [vmem:[#allocation10 + $0x1d0] sm:$0xff]
    %v690 = vld [vmem:[#allocation10 + $0x1d8] sm:$0xff]
    %v691 = vld [vmem:[#allocation10 + $0x1e0] sm:$0xff]
    %v692 = vld [vmem:[#allocation10 + $0x1e8] sm:$0xff]
    %v693 = vld [vmem:[#allocation10 + $0x1f0] sm:$0xff]
    %v694 = vld [vmem:[#allocation10 + $0x1f8] sm:$0xff]
    %695 = vmatprep.subr.mxu0 %v632
    %696 = vmatpush1.msra.mxu0 %v631
    %697 = vmatprep.subr.mxu0 %v636
    %698 = vmatpush1.msra.mxu0 %v635
    %699 = vmatprep.subr.mxu0 %v640
    %700 = vmatpush1.msra.mxu0 %v639
    %701 = vmatprep.subr.mxu0 %v644
    %702 = vmatpush1.msra.mxu0 %v643
    %703 = vmatprep.subr.mxu0 %v648
    %704 = vmatpush1.msra.mxu0 %v647
    %705 = vmatprep.subr.mxu0 %v652
    %706 = vmatpush1.msra.mxu0 %v651
    %707 = vmatprep.subr.mxu0 %v656
    %708 = vmatpush1.msra.mxu0 %v655
    %709 = vmatprep.subr.mxu0 %v660
    %710 = vmatpush1.msra.mxu0 %v659
    %711 = vmatprep.subr.mxu0 %v664
    %712 = vmatpush1.msra.mxu0 %v663
    %713 = vmatprep.subr.mxu0 %v668
    %714 = vmatpush1.msra.mxu0 %v667
    %715 = vmatprep.subr.mxu0 %v672
    %716 = vmatpush1.msra.mxu0 %v671
    %717 = vmatprep.subr.mxu0 %v676
    %718 = vmatpush1.msra.mxu0 %v675
    %719 = vmatprep.subr.mxu0 %v680
    %720 = vmatpush1.msra.mxu0 %v679
    %721 = vmatprep.subr.mxu0 %v684
    %722 = vmatpush1.msra.mxu0 %v683
    %723 = vmatprep.subr.mxu0 %v688
    %724 = vmatpush1.msra.mxu0 %v687
    %725 = vmatprep.subr.mxu0 %v692
    %726 = vmatpush1.msra.mxu0 %v691
    %727 = vmatprep.subr.mxu0 0.0
    %728 = vmatpush1.msra.mxu0 0.0
    %729 = vmatprep.subr.mxu0 0.0
    %730 = vmatpush1.msra.mxu0 0.0
    %731 = vmatprep.subr.mxu0 0.0
    %732 = vmatpush1.msra.mxu0 0.0
    %733 = vmatprep.subr.mxu0 0.0
    %734 = vmatpush1.msra.mxu0 0.0
    %735 = vmatprep.subr.mxu0 0.0
    %736 = vmatpush1.msra.mxu0 0.0
    %737 = vmatprep.subr.mxu0 0.0
    %738 = vmatpush1.msra.mxu0 0.0
    %739 = vmatprep.subr.mxu0 0.0
    %740 = vmatpush1.msra.mxu0 0.0
    %741 = vmatprep.subr.mxu0 0.0
    %742 = vmatpush1.msra.mxu0 0.0
    %743 = vmatprep.subr.mxu0 0.0
    %744 = vmatpush1.msra.mxu0 0.0
    %745 = vmatprep.subr.mxu0 0.0
    %746 = vmatpush1.msra.mxu0 0.0
    %747 = vmatprep.subr.mxu0 0.0
    %748 = vmatpush1.msra.mxu0 0.0
    %749 = vmatprep.subr.mxu0 0.0
    %750 = vmatpush1.msra.mxu0 0.0
    %751 = vmatprep.subr.mxu0 0.0
    %752 = vmatpush1.msra.mxu0 0.0
    %753 = vmatprep.subr.mxu0 0.0
    %754 = vmatpush1.msra.mxu0 0.0
    %755 = vmatprep.subr.mxu0 0.0
    %756 = vmatpush1.msra.mxu0 0.0
    %757 = vmatprep.subr.mxu0 0.0
    %758 = vmatpush1.msra.mxu0 0.0
    %759 = vmatprep.mubr.f32.mxu0 0.0
    %760 = vmatmul.mubr.f32.gmra.mrb[0].mxu0 %v622
    %v761 = vpop.f32.mrb[0].mxu0
    %v762 = vadd.f32 0.0, %v761
    %v763 = vpop.f32.mrb[0].mxu0
    %v764 = vadd.f32 0.0, %v763
    %765 = vdwg.mxu0
    %766 = vmatprep.subr.mxu0 %v634
    %767 = vmatpush1.msra.mxu0 %v633
    %768 = vmatprep.subr.mxu0 %v638
    %769 = vmatpush1.msra.mxu0 %v637
    %770 = vmatprep.subr.mxu0 %v642
    %771 = vmatpush1.msra.mxu0 %v641
    %772 = vmatprep.subr.mxu0 %v646
    %773 = vmatpush1.msra.mxu0 %v645
    %774 = vmatprep.subr.mxu0 %v650
    %775 = vmatpush1.msra.mxu0 %v649
    %776 = vmatprep.subr.mxu0 %v654
    %777 = vmatpush1.msra.mxu0 %v653
    %778 = vmatprep.subr.mxu0 %v658
    %779 = vmatpush1.msra.mxu0 %v657
    %780 = vmatprep.subr.mxu0 %v662
    %781 = vmatpush1.msra.mxu0 %v661
    %782 = vmatprep.subr.mxu0 %v666
    %783 = vmatpush1.msra.mxu0 %v665
    %784 = vmatprep.subr.mxu0 %v670
    %785 = vmatpush1.msra.mxu0 %v669
    %786 = vmatprep.subr.mxu0 %v674
    %787 = vmatpush1.msra.mxu0 %v673
    %788 = vmatprep.subr.mxu0 %v678
    %789 = vmatpush1.msra.mxu0 %v677
    %790 = vmatprep.subr.mxu0 %v682
    %791 = vmatpush1.msra.mxu0 %v681
    %792 = vmatprep.subr.mxu0 %v686
    %793 = vmatpush1.msra.mxu0 %v685
    %794 = vmatprep.subr.mxu0 %v690
    %795 = vmatpush1.msra.mxu0 %v689
    %796 = vmatprep.subr.mxu0 %v694
    %797 = vmatpush1.msra.mxu0 %v693
    %798 = vmatprep.subr.mxu0 0.0
    %799 = vmatpush1.msra.mxu0 0.0
    %800 = vmatprep.subr.mxu0 0.0
    %801 = vmatpush1.msra.mxu0 0.0
    %802 = vmatprep.subr.mxu0 0.0
    %803 = vmatpush1.msra.mxu0 0.0
    %804 = vmatprep.subr.mxu0 0.0
    %805 = vmatpush1.msra.mxu0 0.0
    %806 = vmatprep.subr.mxu0 0.0
    %807 = vmatpush1.msra.mxu0 0.0
    %808 = vmatprep.subr.mxu0 0.0
    %809 = vmatpush1.msra.mxu0 0.0
    %810 = vmatprep.subr.mxu0 0.0
    %811 = vmatpush1.msra.mxu0 0.0
    %812 = vmatprep.subr.mxu0 0.0
    %813 = vmatpush1.msra.mxu0 0.0
    %814 = vmatprep.subr.mxu0 0.0
    %815 = vmatpush1.msra.mxu0 0.0
    %816 = vmatprep.subr.mxu0 0.0
    %817 = vmatpush1.msra.mxu0 0.0
    %818 = vmatprep.subr.mxu0 0.0
    %819 = vmatpush1.msra.mxu0 0.0
    %820 = vmatprep.subr.mxu0 0.0
    %821 = vmatpush1.msra.mxu0 0.0
    %822 = vmatprep.subr.mxu0 0.0
    %823 = vmatpush1.msra.mxu0 0.0
    %824 = vmatprep.subr.mxu0 0.0
    %825 = vmatpush1.msra.mxu0 0.0
    %826 = vmatprep.subr.mxu0 0.0
    %827 = vmatpush1.msra.mxu0 0.0
    %828 = vmatprep.subr.mxu0 0.0
    %829 = vmatpush1.msra.mxu0 0.0
    %830 = vmatprep.mubr.f32.mxu0 0.0
    %831 = vmatmul.mubr.f32.gmra.mrb[0].mxu0 %v622
    %v832 = vpop.f32.mrb[0].mxu0
    %v833 = vadd.f32 0.0, %v832
    %v834 = vpop.f32.mrb[0].mxu0
    %v835 = vadd.f32 0.0, %v834
    %836 = vdwg.mxu0
    %v837 = vadd.f32 %v627, %v762
    %v838 = vadd.f32 %v628, %v764
    %v839 = vadd.f32 %v629, %v833
    %v840 = vadd.f32 %v630, %v835
    %v841 = vmul.f32 %v837, 0.5
    %v842 = vmul.f32 %v838, 0.5
    %v843 = vmul.f32 %v839, 0.5
    %v844 = vtanh.pop %v841
    %v845 = vtanh.pop %v842
    %v846 = vtanh.pop %v843
    %v847 = vmul.f32 %v844, 0.5
    %v848 = vmul.f32 %v845, 0.5
    %v849 = vmul.f32 %v846, 0.5
    %v850 = vadd.f32 %v847, 0.5
    %v851 = vadd.f32 %v848, 0.5
    %v852 = vadd.f32 %v849, 0.5
    %v853 = vtanh.pop %v840
    %v854 = vmul.f32 %v851, %v623
    %v855 = vmul.f32 %v850, %v853
    %v856 = vadd.f32 %v854, %v855
    %v857 = vtanh.pop %v856
    %v858 = vmul.f32 %v852, %v857
    %859 = vmatprep.subr.mxu0 %v632
    %860 = vmatpush1.msra.mxu0 %v631
    %861 = vmatprep.subr.mxu0 %v636
    %862 = vmatpush1.msra.mxu0 %v635
    %863 = vmatprep.subr.mxu0 %v640
    %864 = vmatpush1.msra.mxu0 %v639
    %865 = vmatprep.subr.mxu0 %v644
    %866 = vmatpush1.msra.mxu0 %v643
    %867 = vmatprep.subr.mxu0 %v648
    %868 = vmatpush1.msra.mxu0 %v647
    %869 = vmatprep.subr.mxu0 %v652
    %870 = vmatpush1.msra.mxu0 %v651
    %871 = vmatprep.subr.mxu0 %v656
    %872 = vmatpush1.msra.mxu0 %v655
    %873 = vmatprep.subr.mxu0 %v660
    %874 = vmatpush1.msra.mxu0 %v659
    %875 = vmatprep.subr.mxu0 %v664
    %876 = vmatpush1.msra.mxu0 %v663
    %877 = vmatprep.subr.mxu0 %v668
    %878 = vmatpush1.msra.mxu0 %v667
    %879 = vmatprep.subr.mxu0 %v672
    %880 = vmatpush1.msra.mxu0 %v671
    %881 = vmatprep.subr.mxu0 %v676
    %882 = vmatpush1.msra.mxu0 %v675
    %883 = vmatprep.subr.mxu0 %v680
    %884 = vmatpush1.msra.mxu0 %v679
    %885 = vmatprep.subr.mxu0 %v684
    %886 = vmatpush1.msra.mxu0 %v683
    %887 = vmatprep.subr.mxu0 %v688
    %888 = vmatpush1.msra.mxu0 %v687
    %889 = vmatprep.subr.mxu0 %v692
    %890 = vmatpush1.msra.mxu0 %v691
    %891 = vmatprep.subr.mxu0 0.0
    %892 = vmatpush1.msra.mxu0 0.0
    %893 = vmatprep.subr.mxu0 0.0
    %894 = vmatpush1.msra.mxu0 0.0
    %895 = vmatprep.subr.mxu0 0.0
    %896 = vmatpush1.msra.mxu0 0.0
    %897 = vmatprep.subr.mxu0 0.0
    %898 = vmatpush1.msra.mxu0 0.0
    %899 = vmatprep.subr.mxu0 0.0
    %900 = vmatpush1.msra.mxu0 0.0
    %901 = vmatprep.subr.mxu0 0.0
    %902 = vmatpush1.msra.mxu0 0.0
    %903 = vmatprep.subr.mxu0 0.0
    %904 = vmatpush1.msra.mxu0 0.0
    %905 = vmatprep.subr.mxu0 0.0
    %906 = vmatpush1.msra.mxu0 0.0
    %907 = vmatprep.subr.mxu0 0.0
    %908 = vmatpush1.msra.mxu0 0.0
    %909 = vmatprep.subr.mxu0 0.0
    %910 = vmatpush1.msra.mxu0 0.0
    %911 = vmatprep.subr.mxu0 0.0
    %912 = vmatpush1.msra.mxu0 0.0
    %913 = vmatprep.subr.mxu0 0.0
    %914 = vmatpush1.msra.mxu0 0.0
    %915 = vmatprep.subr.mxu0 0.0
    %916 = vmatpush1.msra.mxu0 0.0
    %917 = vmatprep.subr.mxu0 0.0
    %918 = vmatpush1.msra.mxu0 0.0
    %919 = vmatprep.subr.mxu0 0.0
    %920 = vmatpush1.msra.mxu0 0.0
    %921 = vmatprep.subr.mxu0 0.0
    %922 = vmatpush1.msra.mxu0 0.0
    %923 = vmatprep.mubr.f32.mxu0 0.0
    %924 = vmatmul.mubr.f32.gmra.mrb[0].mxu0 %v858
    %v925 = vpop.f32.mrb[0].mxu0
    %v926 = vadd.f32 0.0, %v925
    %v927 = vpop.f32.mrb[0].mxu0
    %v928 = vadd.f32 0.0, %v927
    %929 = vdwg.mxu0
    %930 = vmatprep.subr.mxu0 %v634
    %931 = vmatpush1.msra.mxu0 %v633
    %932 = vmatprep.subr.mxu0 %v638
    %933 = vmatpush1.msra.mxu0 %v637
    %934 = vmatprep.subr.mxu0 %v642
    %935 = vmatpush1.msra.mxu0 %v641
    %936 = vmatprep.subr.mxu0 %v646
    %937 = vmatpush1.msra.mxu0 %v645
    %938 = vmatprep.subr.mxu0 %v650
    %939 = vmatpush1.msra.mxu0 %v649
    %940 = vmatprep.subr.mxu0 %v654
    %941 = vmatpush1.msra.mxu0 %v653
    %942 = vmatprep.subr.mxu0 %v658
    %943 = vmatpush1.msra.mxu0 %v657
    %944 = vmatprep.subr.mxu0 %v662
    %945 = vmatpush1.msra.mxu0 %v661
    %946 = vmatprep.subr.mxu0 %v666
    %947 = vmatpush1.msra.mxu0 %v665
    %948 = vmatprep.subr.mxu0 %v670
    %949 = vmatpush1.msra.mxu0 %v669
    %950 = vmatprep.subr.mxu0 %v674
    %951 = vmatpush1.msra.mxu0 %v673
    %952 = vmatprep.subr.mxu0 %v678
    %953 = vmatpush1.msra.mxu0 %v677
    %954 = vmatprep.subr.mxu0 %v682
    %955 = vmatpush1.msra.mxu0 %v681
    %956 = vmatprep.subr.mxu0 %v686
    %957 = vmatpush1.msra.mxu0 %v685
    %958 = vmatprep.subr.mxu0 %v690
    %959 = vmatpush1.msra.mxu0 %v689
    %960 = vmatprep.subr.mxu0 %v694
    %961 = vmatpush1.msra.mxu0 %v693
    %962 = vmatprep.subr.mxu0 0.0
    %963 = vmatpush1.msra.mxu0 0.0
    %964 = vmatprep.subr.mxu0 0.0
    %965 = vmatpush1.msra.mxu0 0.0
    %966 = vmatprep.subr.mxu0 0.0
    %967 = vmatpush1.msra.mxu0 0.0
    %968 = vmatprep.subr.mxu0 0.0
    %969 = vmatpush1.msra.mxu0 0.0
    %970 = vmatprep.subr.mxu0 0.0
    %971 = vmatpush1.msra.mxu0 0.0
    %972 = vmatprep.subr.mxu0 0.0
    %973 = vmatpush1.msra.mxu0 0.0
    %974 = vmatprep.subr.mxu0 0.0
    %975 = vmatpush1.msra.mxu0 0.0
    %976 = vmatprep.subr.mxu0 0.0
    %977 = vmatpush1.msra.mxu0 0.0
    %978 = vmatprep.subr.mxu0 0.0
    %979 = vmatpush1.msra.mxu0 0.0
    %980 = vmatprep.subr.mxu0 0.0
    %981 = vmatpush1.msra.mxu0 0.0
    %982 = vmatprep.subr.mxu0 0.0
    %983 = vmatpush1.msra.mxu0 0.0
    %984 = vmatprep.subr.mxu0 0.0
    %985 = vmatpush1.msra.mxu0 0.0
    %986 = vmatprep.subr.mxu0 0.0
    %987 = vmatpush1.msra.mxu0 0.0
    %988 = vmatprep.subr.mxu0 0.0
    %989 = vmatpush1.msra.mxu0 0.0
    %990 = vmatprep.subr.mxu0 0.0
    %991 = vmatpush1.msra.mxu0 0.0
    %992 = vmatprep.subr.mxu0 0.0
    %993 = vmatpush1.msra.mxu0 0.0
    %994 = vmatprep.mubr.f32.mxu0 0.0
    %995 = vmatmul.mubr.f32.gmra.mrb[0].mxu0 %v858
    %v996 = vpop.f32.mrb[0].mxu0
    %v997 = vadd.f32 0.0, %v996
    %v998 = vpop.f32.mrb[0].mxu0
    %v999 = vadd.f32 0.0, %v998
    %1000 = vdwg.mxu0
    %v1005 = vrot.slane %v926, 7
    %v1006 = vrot.slane %v928, 7
    %v1007 = vrot.slane %v997, 7
    %v1008 = vrot.slane %v999, 7
    %v1013 = vadd.f32 %v627, %v1005
    %v1014 = vadd.f32 %v628, %v1006
    %v1015 = vadd.f32 %v629, %v1007
    %v1016 = vadd.f32 %v630, %v1008
    %v1017 = vmul.f32 %v1013, 0.5
    %v1018 = vmul.f32 %v1014, 0.5
    %v1019 = vmul.f32 %v1015, 0.5
    %v1020 = vtanh.pop %v1017
    %v1021 = vtanh.pop %v1018
    %v1022 = vtanh.pop %v1019
    %v1023 = vmul.f32 %v1020, 0.5
    %v1024 = vmul.f32 %v1021, 0.5
    %v1025 = vmul.f32 %v1022, 0.5
    %v1026 = vadd.f32 %v1023, 0.5
    %v1027 = vadd.f32 %v1024, 0.5
    %v1028 = vadd.f32 %v1025, 0.5
    %v1029 = vtanh.pop %v1016
    %v1031 = vrot.slane %v856, 7
    %v1033 = vmul.f32 %v1027, %v1031
    %v1034 = vmul.f32 %v1026, %v1029
    %v1035 = vadd.f32 %v1033, %v1034
    %v1036 = vtanh.pop %v1035
    %v1037 = vmul.f32 %v1028, %v1036
    %v1039 = vrot.slane %v1037, 1
    %1041 = vmatprep.subr.mxu0 %v632
    %1042 = vmatpush1.msra.mxu0 %v631
    %1043 = vmatprep.subr.mxu0 %v636
    %1044 = vmatpush1.msra.mxu0 %v635
    %1045 = vmatprep.subr.mxu0 %v640
    %1046 = vmatpush1.msra.mxu0 %v639
    %1047 = vmatprep.subr.mxu0 %v644
    %1048 = vmatpush1.msra.mxu0 %v643
    %1049 = vmatprep.subr.mxu0 %v648
    %1050 = vmatpush1.msra.mxu0 %v647
    %1051 = vmatprep.subr.mxu0 %v652
    %1052 = vmatpush1.msra.mxu0 %v651
    %1053 = vmatprep.subr.mxu0 %v656
    %1054 = vmatpush1.msra.mxu0 %v655
    %1055 = vmatprep.subr.mxu0 %v660
    %1056 = vmatpush1.msra.mxu0 %v659
    %1057 = vmatprep.subr.mxu0 %v664
    %1058 = vmatpush1.msra.mxu0 %v663
    %1059 = vmatprep.subr.mxu0 %v668
    %1060 = vmatpush1.msra.mxu0 %v667
    %1061 = vmatprep.subr.mxu0 %v672
    %1062 = vmatpush1.msra.mxu0 %v671
    %1063 = vmatprep.subr.mxu0 %v676
    %1064 = vmatpush1.msra.mxu0 %v675
    %1065 = vmatprep.subr.mxu0 %v680
    %1066 = vmatpush1.msra.mxu0 %v679
    %1067 = vmatprep.subr.mxu0 %v684
    %1068 = vmatpush1.msra.mxu0 %v683
    %1069 = vmatprep.subr.mxu0 %v688
    %1070 = vmatpush1.msra.mxu0 %v687
    %1071 = vmatprep.subr.mxu0 %v692
    %1072 = vmatpush1.msra.mxu0 %v691
    %1073 = vmatprep.subr.mxu0 0.0
    %1074 = vmatpush1.msra.mxu0 0.0
    %1075 = vmatprep.subr.mxu0 0.0
    %1076 = vmatpush1.msra.mxu0 0.0
    %1077 = vmatprep.subr.mxu0 0.0
    %1078 = vmatpush1.msra.mxu0 0.0
    %1079 = vmatprep.subr.mxu0 0.0
    %1080 = vmatpush1.msra.mxu0 0.0
    %1081 = vmatprep.subr.mxu0 0.0
    %1082 = vmatpush1.msra.mxu0 0.0
    %1083 = vmatprep.subr.mxu0 0.0
    %1084 = vmatpush1.msra.mxu0 0.0
    %1085 = vmatprep.subr.mxu0 0.0
    %1086 = vmatpush1.msra.mxu0 0.0
    %1087 = vmatprep.subr.mxu0 0.0
    %1088 = vmatpush1.msra.mxu0 0.0
    %1089 = vmatprep.subr.mxu0 0.0
    %1090 = vmatpush1.msra.mxu0 0.0
    %1091 = vmatprep.subr.mxu0 0.0
    %1092 = vmatpush1.msra.mxu0 0.0
    %1093 = vmatprep.subr.mxu0 0.0
    %1094 = vmatpush1.msra.mxu0 0.0
    %1095 = vmatprep.subr.mxu0 0.0
    %1096 = vmatpush1.msra.mxu0 0.0
    %1097 = vmatprep.subr.mxu0 0.0
    %1098 = vmatpush1.msra.mxu0 0.0
    %1099 = vmatprep.subr.mxu0 0.0
    %1100 = vmatpush1.msra.mxu0 0.0
    %1101 = vmatprep.subr.mxu0 0.0
    %1102 = vmatpush1.msra.mxu0 0.0
    %1103 = vmatprep.subr.mxu0 0.0
    %1104 = vmatpush1.msra.mxu0 0.0
    %1105 = vmatprep.mubr.f32.mxu0 0.0
    %1106 = vmatmul.mubr.f32.gmra.mrb[0].mxu0 %v1039
    %v1107 = vpop.f32.mrb[0].mxu0
    %v1108 = vadd.f32 0.0, %v1107
    %v1109 = vpop.f32.mrb[0].mxu0
    %v1110 = vadd.f32 0.0, %v1109
    %1111 = vdwg.mxu0
    %1112 = vmatprep.subr.mxu0 %v634
    %1113 = vmatpush1.msra.mxu0 %v633
    %1114 = vmatprep.subr.mxu0 %v638
    %1115 = vmatpush1.msra.mxu0 %v637
    %1116 = vmatprep.subr.mxu0 %v642
    %1117 = vmatpush1.msra.mxu0 %v641
    %1118 = vmatprep.subr.mxu0 %v646
    %1119 = vmatpush1.msra.mxu0 %v645
    %1120 = vmatprep.subr.mxu0 %v650
    %1121 = vmatpush1.msra.mxu0 %v649
    %1122 = vmatprep.subr.mxu0 %v654
    %1123 = vmatpush1.msra.mxu0 %v653
    %1124 = vmatprep.subr.mxu0 %v658
    %1125 = vmatpush1.msra.mxu0 %v657
    %1126 = vmatprep.subr.mxu0 %v662
    %1127 = vmatpush1.msra.mxu0 %v661
    %1128 = vmatprep.subr.mxu0 %v666
    %1129 = vmatpush1.msra.mxu0 %v665
    %1130 = vmatprep.subr.mxu0 %v670
    %1131 = vmatpush1.msra.mxu0 %v669
    %1132 = vmatprep.subr.mxu0 %v674
    %1133 = vmatpush1.msra.mxu0 %v673
    %1134 = vmatprep.subr.mxu0 %v678
    %1135 = vmatpush1.msra.mxu0 %v677
    %1136 = vmatprep.subr.mxu0 %v682
    %1137 = vmatpush1.msra.mxu0 %v681
    %1138 = vmatprep.subr.mxu0 %v686
    %1139 = vmatpush1.msra.mxu0 %v685
    %1140 = vmatprep.subr.mxu0 %v690
    %1141 = vmatpush1.msra.mxu0 %v689
    %1142 = vmatprep.subr.mxu0 %v694
    %1143 = vmatpush1.msra.mxu0 %v693
    %1144 = vmatprep.subr.mxu0 0.0
    %1145 = vmatpush1.msra.mxu0 0.0
    %1146 = vmatprep.subr.mxu0 0.0
    %1147 = vmatpush1.msra.mxu0 0.0
    %1148 = vmatprep.subr.mxu0 0.0
    %1149 = vmatpush1.msra.mxu0 0.0
    %1150 = vmatprep.subr.mxu0 0.0
    %1151 = vmatpush1.msra.mxu0 0.0
    %1152 = vmatprep.subr.mxu0 0.0
    %1153 = vmatpush1.msra.mxu0 0.0
    %1154 = vmatprep.subr.mxu0 0.0
    %1155 = vmatpush1.msra.mxu0 0.0
    %1156 = vmatprep.subr.mxu0 0.0
    %1157 = vmatpush1.msra.mxu0 0.0
    %1158 = vmatprep.subr.mxu0 0.0
    %1159 = vmatpush1.msra.mxu0 0.0
    %1160 = vmatprep.subr.mxu0 0.0
    %1161 = vmatpush1.msra.mxu0 0.0
    %1162 = vmatprep.subr.mxu0 0.0
    %1163 = vmatpush1.msra.mxu0 0.0
    %1164 = vmatprep.subr.mxu0 0.0
    %1165 = vmatpush1.msra.mxu0 0.0
    %1166 = vmatprep.subr.mxu0 0.0
    %1167 = vmatpush1.msra.mxu0 0.0
    %1168 = vmatprep.subr.mxu0 0.0
    %1169 = vmatpush1.msra.mxu0 0.0
    %1170 = vmatprep.subr.mxu0 0.0
    %1171 = vmatpush1.msra.mxu0 0.0
    %1172 = vmatprep.subr.mxu0 0.0
    %1173 = vmatpush1.msra.mxu0 0.0
    %1174 = vmatprep.subr.mxu0 0.0
    %1175 = vmatpush1.msra.mxu0 0.0
    %1176 = vmatprep.mubr.f32.mxu0 0.0
    %1177 = vmatmul.mubr.f32.gmra.mrb[0].mxu0 %v1039
    %v1178 = vpop.f32.mrb[0].mxu0
    %v1179 = vadd.f32 0.0, %v1178
    %v1180 = vpop.f32.mrb[0].mxu0
    %v1181 = vadd.f32 0.0, %v1180
    %1182 = vdwg.mxu0
    %v1187 = vrot.slane %v1108, 6
    %v1188 = vrot.slane %v1110, 6
    %v1189 = vrot.slane %v1179, 6
    %v1190 = vrot.slane %v1181, 6
    %v1195 = vadd.f32 %v627, %v1187
    %v1196 = vadd.f32 %v628, %v1188
    %v1197 = vadd.f32 %v629, %v1189
    %v1198 = vadd.f32 %v630, %v1190
    %v1199 = vmul.f32 %v1195, 0.5
    %v1200 = vmul.f32 %v1196, 0.5
    %v1201 = vmul.f32 %v1197, 0.5
    %v1202 = vtanh.pop %v1199
    %v1203 = vtanh.pop %v1200
    %v1204 = vtanh.pop %v1201
    %v1205 = vmul.f32 %v1202, 0.5
    %v1206 = vmul.f32 %v1203, 0.5
    %v1207 = vmul.f32 %v1204, 0.5
    %v1208 = vadd.f32 %v1205, 0.5
    %v1209 = vadd.f32 %v1206, 0.5
    %v1210 = vadd.f32 %v1207, 0.5
    %v1211 = vtanh.pop %v1198
    %v1213 = vrot.slane %v1035, 7
    %v1215 = vmul.f32 %v1209, %v1213
    %v1216 = vmul.f32 %v1208, %v1211
    %v1217 = vadd.f32 %v1215, %v1216
    %v1218 = vtanh.pop %v1217
    %v1219 = vmul.f32 %v1210, %v1218
    %v1221 = vrot.slane %v1219, 2
    %1223 = vmatprep.subr.mxu0 %v632
    %1224 = vmatpush1.msra.mxu0 %v631
    %1225 = vmatprep.subr.mxu0 %v636
    %1226 = vmatpush1.msra.mxu0 %v635
    %1227 = vmatprep.subr.mxu0 %v640
    %1228 = vmatpush1.msra.mxu0 %v639
    %1229 = vmatprep.subr.mxu0 %v644
    %1230 = vmatpush1.msra.mxu0 %v643
    %1231 = vmatprep.subr.mxu0 %v648
    %1232 = vmatpush1.msra.mxu0 %v647
    %1233 = vmatprep.subr.mxu0 %v652
    %1234 = vmatpush1.msra.mxu0 %v651
    %1235 = vmatprep.subr.mxu0 %v656
    %1236 = vmatpush1.msra.mxu0 %v655
    %1237 = vmatprep.subr.mxu0 %v660
    %1238 = vmatpush1.msra.mxu0 %v659
    %1239 = vmatprep.subr.mxu0 %v664
    %1240 = vmatpush1.msra.mxu0 %v663
    %1241 = vmatprep.subr.mxu0 %v668
    %1242 = vmatpush1.msra.mxu0 %v667
    %1243 = vmatprep.subr.mxu0 %v672
    %1244 = vmatpush1.msra.mxu0 %v671
    %1245 = vmatprep.subr.mxu0 %v676
    %1246 = vmatpush1.msra.mxu0 %v675
    %1247 = vmatprep.subr.mxu0 %v680
    %1248 = vmatpush1.msra.mxu0 %v679
    %1249 = vmatprep.subr.mxu0 %v684
    %1250 = vmatpush1.msra.mxu0 %v683
    %1251 = vmatprep.subr.mxu0 %v688
    %1252 = vmatpush1.msra.mxu0 %v687
    %1253 = vmatprep.subr.mxu0 %v692
    %1254 = vmatpush1.msra.mxu0 %v691
    %1255 = vmatprep.subr.mxu0 0.0
    %1256 = vmatpush1.msra.mxu0 0.0
    %1257 = vmatprep.subr.mxu0 0.0
    %1258 = vmatpush1.msra.mxu0 0.0
    %1259 = vmatprep.subr.mxu0 0.0
    %1260 = vmatpush1.msra.mxu0 0.0
    %1261 = vmatprep.subr.mxu0 0.0
    %1262 = vmatpush1.msra.mxu0 0.0
    %1263 = vmatprep.subr.mxu0 0.0
    %1264 = vmatpush1.msra.mxu0 0.0
    %1265 = vmatprep.subr.mxu0 0.0
    %1266 = vmatpush1.msra.mxu0 0.0
    %1267 = vmatprep.subr.mxu0 0.0
    %1268 = vmatpush1.msra.mxu0 0.0
    %1269 = vmatprep.subr.mxu0 0.0
    %1270 = vmatpush1.msra.mxu0 0.0
    %1271 = vmatprep.subr.mxu0 0.0
    %1272 = vmatpush1.msra.mxu0 0.0
    %1273 = vmatprep.subr.mxu0 0.0
    %1274 = vmatpush1.msra.mxu0 0.0
    %1275 = vmatprep.subr.mxu0 0.0
    %1276 = vmatpush1.msra.mxu0 0.0
    %1277 = vmatprep.subr.mxu0 0.0
    %1278 = vmatpush1.msra.mxu0 0.0
    %1279 = vmatprep.subr.mxu0 0.0
    %1280 = vmatpush1.msra.mxu0 0.0
    %1281 = vmatprep.subr.mxu0 0.0
    %1282 = vmatpush1.msra.mxu0 0.0
    %1283 = vmatprep.subr.mxu0 0.0
    %1284 = vmatpush1.msra.mxu0 0.0
    %1285 = vmatprep.subr.mxu0 0.0
    %1286 = vmatpush1.msra.mxu0 0.0
    %1287 = vmatprep.mubr.f32.mxu0 0.0
    %1288 = vmatmul.mubr.f32.gmra.mrb[0].mxu0 %v1221
    %v1289 = vpop.f32.mrb[0].mxu0
    %v1290 = vadd.f32 0.0, %v1289
    %v1291 = vpop.f32.mrb[0].mxu0
    %v1292 = vadd.f32 0.0, %v1291
    %1293 = vdwg.mxu0
    %1294 = vmatprep.subr.mxu0 %v634
    %1295 = vmatpush1.msra.mxu0 %v633
    %1296 = vmatprep.subr.mxu0 %v638
    %1297 = vmatpush1.msra.mxu0 %v637
    %1298 = vmatprep.subr.mxu0 %v642
    %1299 = vmatpush1.msra.mxu0 %v641
    %1300 = vmatprep.subr.mxu0 %v646
    %1301 = vmatpush1.msra.mxu0 %v645
    %1302 = vmatprep.subr.mxu0 %v650
    %1303 = vmatpush1.msra.mxu0 %v649
    %1304 = vmatprep.subr.mxu0 %v654
    %1305 = vmatpush1.msra.mxu0 %v653
    %1306 = vmatprep.subr.mxu0 %v658
    %1307 = vmatpush1.msra.mxu0 %v657
    %1308 = vmatprep.subr.mxu0 %v662
    %1309 = vmatpush1.msra.mxu0 %v661
    %1310 = vmatprep.subr.mxu0 %v666
    %1311 = vmatpush1.msra.mxu0 %v665
    %1312 = vmatprep.subr.mxu0 %v670
    %1313 = vmatpush1.msra.mxu0 %v669
    %1314 = vmatprep.subr.mxu0 %v674
    %1315 = vmatpush1.msra.mxu0 %v673
    %1316 = vmatprep.subr.mxu0 %v678
    %1317 = vmatpush1.msra.mxu0 %v677
    %1318 = vmatprep.subr.mxu0 %v682
    %1319 = vmatpush1.msra.mxu0 %v681
    %1320 = vmatprep.subr.mxu0 %v686
    %1321 = vmatpush1.msra.mxu0 %v685
    %1322 = vmatprep.subr.mxu0 %v690
    %1323 = vmatpush1.msra.mxu0 %v689
    %1324 = vmatprep.subr.mxu0 %v694
    %1325 = vmatpush1.msra.mxu0 %v693
    %1326 = vmatprep.subr.mxu0 0.0
    %1327 = vmatpush1.msra.mxu0 0.0
    %1328 = vmatprep.subr.mxu0 0.0
    %1329 = vmatpush1.msra.mxu0 0.0
    %1330 = vmatprep.subr.mxu0 0.0
    %1331 = vmatpush1.msra.mxu0 0.0
    %1332 = vmatprep.subr.mxu0 0.0
    %1333 = vmatpush1.msra.mxu0 0.0
    %1334 = vmatprep.subr.mxu0 0.0
    %1335 = vmatpush1.msra.mxu0 0.0
    %1336 = vmatprep.subr.mxu0 0.0
    %1337 = vmatpush1.msra.mxu0 0.0
    %1338 = vmatprep.subr.mxu0 0.0
    %1339 = vmatpush1.msra.mxu0 0.0
    %1340 = vmatprep.subr.mxu0 0.0
    %1341 = vmatpush1.msra.mxu0 0.0
    %1342 = vmatprep.subr.mxu0 0.0
    %1343 = vmatpush1.msra.mxu0 0.0
    %1344 = vmatprep.subr.mxu0 0.0
    %1345 = vmatpush1.msra.mxu0 0.0
    %1346 = vmatprep.subr.mxu0 0.0
    %1347 = vmatpush1.msra.mxu0 0.0
    %1348 = vmatprep.subr.mxu0 0.0
    %1349 = vmatpush1.msra.mxu0 0.0
    %1350 = vmatprep.subr.mxu0 0.0
    %1351 = vmatpush1.msra.mxu0 0.0
    %1352 = vmatprep.subr.mxu0 0.0
    %1353 = vmatpush1.msra.mxu0 0.0
    %1354 = vmatprep.subr.mxu0 0.0
    %1355 = vmatpush1.msra.mxu0 0.0
    %1356 = vmatprep.subr.mxu0 0.0
    %1357 = vmatpush1.msra.mxu0 0.0
    %1358 = vmatprep.mubr.f32.mxu0 0.0
    %1359 = vmatmul.mubr.f32.gmra.mrb[0].mxu0 %v1221
    %v1360 = vpop.f32.mrb[0].mxu0
    %v1361 = vadd.f32 0.0, %v1360
    %v1362 = vpop.f32.mrb[0].mxu0
    %v1363 = vadd.f32 0.0, %v1362
    %1364 = vdwg.mxu0
    %v1369 = vrot.slane %v1290, 5
    %v1370 = vrot.slane %v1292, 5
    %v1371 = vrot.slane %v1361, 5
    %v1372 = vrot.slane %v1363, 5
    %v1377 = vadd.f32 %v627, %v1369
    %v1378 = vadd.f32 %v628, %v1370
    %v1379 = vadd.f32 %v629, %v1371
    %v1380 = vadd.f32 %v630, %v1372
    %v1381 = vmul.f32 %v1377, 0.5
    %v1382 = vmul.f32 %v1378, 0.5
    %v1383 = vmul.f32 %v1379, 0.5
    %v1384 = vtanh.pop %v1381
    %v1385 = vtanh.pop %v1382
    %v1386 = vtanh.pop %v1383
    %v1387 = vmul.f32 %v1384, 0.5
    %v1388 = vmul.f32 %v1385, 0.5
    %v1389 = vmul.f32 %v1386, 0.5
    %v1390 = vadd.f32 %v1387, 0.5
    %v1391 = vadd.f32 %v1388, 0.5
    %v1392 = vadd.f32 %v1389, 0.5
    %v1393 = vtanh.pop %v1380
    %v1395 = vrot.slane %v1217, 7
    %v1397 = vmul.f32 %v1391, %v1395
    %v1398 = vmul.f32 %v1390, %v1393
    %v1399 = vadd.f32 %v1397, %v1398
    %v1400 = vtanh.pop %v1399
    %v1401 = vmul.f32 %v1392, %v1400
    %v1403 = vrot.slane %v1401, 3
    %1405 = vmatprep.subr.mxu0 %v632
    %1406 = vmatpush1.msra.mxu0 %v631
    %1407 = vmatprep.subr.mxu0 %v636
    %1408 = vmatpush1.msra.mxu0 %v635
    %1409 = vmatprep.subr.mxu0 %v640
    %1410 = vmatpush1.msra.mxu0 %v639
    %1411 = vmatprep.subr.mxu0 %v644
    %1412 = vmatpush1.msra.mxu0 %v643
    %1413 = vmatprep.subr.mxu0 %v648
    %1414 = vmatpush1.msra.mxu0 %v647
    %1415 = vmatprep.subr.mxu0 %v652
    %1416 = vmatpush1.msra.mxu0 %v651
    %1417 = vmatprep.subr.mxu0 %v656
    %1418 = vmatpush1.msra.mxu0 %v655
    %1419 = vmatprep.subr.mxu0 %v660
    %1420 = vmatpush1.msra.mxu0 %v659
    %1421 = vmatprep.subr.mxu0 %v664
    %1422 = vmatpush1.msra.mxu0 %v663
    %1423 = vmatprep.subr.mxu0 %v668
    %1424 = vmatpush1.msra.mxu0 %v667
    %1425 = vmatprep.subr.mxu0 %v672
    %1426 = vmatpush1.msra.mxu0 %v671
    %1427 = vmatprep.subr.mxu0 %v676
    %1428 = vmatpush1.msra.mxu0 %v675
    %1429 = vmatprep.subr.mxu0 %v680
    %1430 = vmatpush1.msra.mxu0 %v679
    %1431 = vmatprep.subr.mxu0 %v684
    %1432 = vmatpush1.msra.mxu0 %v683
    %1433 = vmatprep.subr.mxu0 %v688
    %1434 = vmatpush1.msra.mxu0 %v687
    %1435 = vmatprep.subr.mxu0 %v692
    %1436 = vmatpush1.msra.mxu0 %v691
    %1437 = vmatprep.subr.mxu0 0.0
    %1438 = vmatpush1.msra.mxu0 0.0
    %1439 = vmatprep.subr.mxu0 0.0
    %1440 = vmatpush1.msra.mxu0 0.0
    %1441 = vmatprep.subr.mxu0 0.0
    %1442 = vmatpush1.msra.mxu0 0.0
    %1443 = vmatprep.subr.mxu0 0.0
    %1444 = vmatpush1.msra.mxu0 0.0
    %1445 = vmatprep.subr.mxu0 0.0
    %1446 = vmatpush1.msra.mxu0 0.0
    %1447 = vmatprep.subr.mxu0 0.0
    %1448 = vmatpush1.msra.mxu0 0.0
    %1449 = vmatprep.subr.mxu0 0.0
    %1450 = vmatpush1.msra.mxu0 0.0
    %1451 = vmatprep.subr.mxu0 0.0
    %1452 = vmatpush1.msra.mxu0 0.0
    %1453 = vmatprep.subr.mxu0 0.0
    %1454 = vmatpush1.msra.mxu0 0.0
    %1455 = vmatprep.subr.mxu0 0.0
    %1456 = vmatpush1.msra.mxu0 0.0
    %1457 = vmatprep.subr.mxu0 0.0
    %1458 = vmatpush1.msra.mxu0 0.0
    %1459 = vmatprep.subr.mxu0 0.0
    %1460 = vmatpush1.msra.mxu0 0.0
    %1461 = vmatprep.subr.mxu0 0.0
    %1462 = vmatpush1.msra.mxu0 0.0
    %1463 = vmatprep.subr.mxu0 0.0
    %1464 = vmatpush1.msra.mxu0 0.0
    %1465 = vmatprep.subr.mxu0 0.0
    %1466 = vmatpush1.msra.mxu0 0.0
    %1467 = vmatprep.subr.mxu0 0.0
    %1468 = vmatpush1.msra.mxu0 0.0
    %1469 = vmatprep.mubr.f32.mxu0 0.0
    %1470 = vmatmul.mubr.f32.gmra.mrb[0].mxu0 %v1403
    %v1471 = vpop.f32.mrb[0].mxu0
    %v1472 = vadd.f32 0.0, %v1471
    %v1473 = vpop.f32.mrb[0].mxu0
    %v1474 = vadd.f32 0.0, %v1473
    %1475 = vdwg.mxu0
    %1476 = vmatprep.subr.mxu0 %v634
    %1477 = vmatpush1.msra.mxu0 %v633
    %1478 = vmatprep.subr.mxu0 %v638
    %1479 = vmatpush1.msra.mxu0 %v637
    %1480 = vmatprep.subr.mxu0 %v642
    %1481 = vmatpush1.msra.mxu0 %v641
    %1482 = vmatprep.subr.mxu0 %v646
    %1483 = vmatpush1.msra.mxu0 %v645
    %1484 = vmatprep.subr.mxu0 %v650
    %1485 = vmatpush1.msra.mxu0 %v649
    %1486 = vmatprep.subr.mxu0 %v654
    %1487 = vmatpush1.msra.mxu0 %v653
    %1488 = vmatprep.subr.mxu0 %v658
    %1489 = vmatpush1.msra.mxu0 %v657
    %1490 = vmatprep.subr.mxu0 %v662
    %1491 = vmatpush1.msra.mxu0 %v661
    %1492 = vmatprep.subr.mxu0 %v666
    %1493 = vmatpush1.msra.mxu0 %v665
    %1494 = vmatprep.subr.mxu0 %v670
    %1495 = vmatpush1.msra.mxu0 %v669
    %1496 = vmatprep.subr.mxu0 %v674
    %1497 = vmatpush1.msra.mxu0 %v673
    %1498 = vmatprep.subr.mxu0 %v678
    %1499 = vmatpush1.msra.mxu0 %v677
    %1500 = vmatprep.subr.mxu0 %v682
    %1501 = vmatpush1.msra.mxu0 %v681
    %1502 = vmatprep.subr.mxu0 %v686
    %1503 = vmatpush1.msra.mxu0 %v685
    %1504 = vmatprep.subr.mxu0 %v690
    %1505 = vmatpush1.msra.mxu0 %v689
    %1506 = vmatprep.subr.mxu0 %v694
    %1507 = vmatpush1.msra.mxu0 %v693
    %1508 = vmatprep.subr.mxu0 0.0
    %1509 = vmatpush1.msra.mxu0 0.0
    %1510 = vmatprep.subr.mxu0 0.0
    %1511 = vmatpush1.msra.mxu0 0.0
    %1512 = vmatprep.subr.mxu0 0.0
    %1513 = vmatpush1.msra.mxu0 0.0
    %1514 = vmatprep.subr.mxu0 0.0
    %1515 = vmatpush1.msra.mxu0 0.0
    %1516 = vmatprep.subr.mxu0 0.0
    %1517 = vmatpush1.msra.mxu0 0.0
    %1518 = vmatprep.subr.mxu0 0.0
    %1519 = vmatpush1.msra.mxu0 0.0
    %1520 = vmatprep.subr.mxu0 0.0
    %1521 = vmatpush1.msra.mxu0 0.0
    %1522 = vmatprep.subr.mxu0 0.0
    %1523 = vmatpush1.msra.mxu0 0.0
    %1524 = vmatprep.subr.mxu0 0.0
    %1525 = vmatpush1.msra.mxu0 0.0
    %1526 = vmatprep.subr.mxu0 0.0
    %1527 = vmatpush1.msra.mxu0 0.0
    %1528 = vmatprep.subr.mxu0 0.0
    %1529 = vmatpush1.msra.mxu0 0.0
    %1530 = vmatprep.subr.mxu0 0.0
    %1531 = vmatpush1.msra.mxu0 0.0
    %1532 = vmatprep.subr.mxu0 0.0
    %1533 = vmatpush1.msra.mxu0 0.0
    %1534 = vmatprep.subr.mxu0 0.0
    %1535 = vmatpush1.msra.mxu0 0.0
    %1536 = vmatprep.subr.mxu0 0.0
    %1537 = vmatpush1.msra.mxu0 0.0
    %1538 = vmatprep.subr.mxu0 0.0
    %1539 = vmatpush1.msra.mxu0 0.0
    %1540 = vmatprep.mubr.f32.mxu0 0.0
    %1541 = vmatmul.mubr.f32.gmra.mrb[0].mxu0 %v1403
    %v1542 = vpop.f32.mrb[0].mxu0
    %v1543 = vadd.f32 0.0, %v1542
    %v1544 = vpop.f32.mrb[0].mxu0
    %v1545 = vadd.f32 0.0, %v1544
    %1546 = vdwg.mxu0
    %v1551 = vrot.slane %v1472, 4
    %v1552 = vrot.slane %v1474, 4
    %v1553 = vrot.slane %v1543, 4
    %v1554 = vrot.slane %v1545, 4
    %v1559 = vadd.f32 %v627, %v1551
    %v1560 = vadd.f32 %v628, %v1552
    %v1561 = vadd.f32 %v629, %v1553
    %v1562 = vadd.f32 %v630, %v1554
    %v1563 = vmul.f32 %v1559, 0.5
    %v1564 = vmul.f32 %v1560, 0.5
    %v1565 = vmul.f32 %v1561, 0.5
    %v1566 = vtanh.pop %v1563
    %v1567 = vtanh.pop %v1564
    %v1568 = vtanh.pop %v1565
    %v1569 = vmul.f32 %v1566, 0.5
    %v1570 = vmul.f32 %v1567, 0.5
    %v1571 = vmul.f32 %v1568, 0.5
    %v1572 = vadd.f32 %v1569, 0.5
    %v1573 = vadd.f32 %v1570, 0.5
    %v1574 = vadd.f32 %v1571, 0.5
    %v1575 = vtanh.pop %v1562
    %v1577 = vrot.slane %v1399, 7
    %v1579 = vmul.f32 %v1573, %v1577
    %v1580 = vmul.f32 %v1572, %v1575
    %v1581 = vadd.f32 %v1579, %v1580
    %v1582 = vtanh.pop %v1581
    %v1583 = vmul.f32 %v1574, %v1582
    %v1585 = vrot.slane %v1583, 4
    %1587 = vmatprep.subr.mxu0 %v632
    %1588 = vmatpush1.msra.mxu0 %v631
    %1589 = vmatprep.subr.mxu0 %v636
    %1590 = vmatpush1.msra.mxu0 %v635
    %1591 = vmatprep.subr.mxu0 %v640
    %1592 = vmatpush1.msra.mxu0 %v639
    %1593 = vmatprep.subr.mxu0 %v644
    %1594 = vmatpush1.msra.mxu0 %v643
    %1595 = vmatprep.subr.mxu0 %v648
    %1596 = vmatpush1.msra.mxu0 %v647
    %1597 = vmatprep.subr.mxu0 %v652
    %1598 = vmatpush1.msra.mxu0 %v651
    %1599 = vmatprep.subr.mxu0 %v656
    %1600 = vmatpush1.msra.mxu0 %v655
    %1601 = vmatprep.subr.mxu0 %v660
    %1602 = vmatpush1.msra.mxu0 %v659
    %1603 = vmatprep.subr.mxu0 %v664
    %1604 = vmatpush1.msra.mxu0 %v663
    %1605 = vmatprep.subr.mxu0 %v668
    %1606 = vmatpush1.msra.mxu0 %v667
    %1607 = vmatprep.subr.mxu0 %v672
    %1608 = vmatpush1.msra.mxu0 %v671
    %1609 = vmatprep.subr.mxu0 %v676
    %1610 = vmatpush1.msra.mxu0 %v675
    %1611 = vmatprep.subr.mxu0 %v680
    %1612 = vmatpush1.msra.mxu0 %v679
    %1613 = vmatprep.subr.mxu0 %v684
    %1614 = vmatpush1.msra.mxu0 %v683
    %1615 = vmatprep.subr.mxu0 %v688
    %1616 = vmatpush1.msra.mxu0 %v687
    %1617 = vmatprep.subr.mxu0 %v692
    %1618 = vmatpush1.msra.mxu0 %v691
    %1619 = vmatprep.subr.mxu0 0.0
    %1620 = vmatpush1.msra.mxu0 0.0
    %1621 = vmatprep.subr.mxu0 0.0
    %1622 = vmatpush1.msra.mxu0 0.0
    %1623 = vmatprep.subr.mxu0 0.0
    %1624 = vmatpush1.msra.mxu0 0.0
    %1625 = vmatprep.subr.mxu0 0.0
    %1626 = vmatpush1.msra.mxu0 0.0
    %1627 = vmatprep.subr.mxu0 0.0
    %1628 = vmatpush1.msra.mxu0 0.0
    %1629 = vmatprep.subr.mxu0 0.0
    %1630 = vmatpush1.msra.mxu0 0.0
    %1631 = vmatprep.subr.mxu0 0.0
    %1632 = vmatpush1.msra.mxu0 0.0
    %1633 = vmatprep.subr.mxu0 0.0
    %1634 = vmatpush1.msra.mxu0 0.0
    %1635 = vmatprep.subr.mxu0 0.0
    %1636 = vmatpush1.msra.mxu0 0.0
    %1637 = vmatprep.subr.mxu0 0.0
    %1638 = vmatpush1.msra.mxu0 0.0
    %1639 = vmatprep.subr.mxu0 0.0
    %1640 = vmatpush1.msra.mxu0 0.0
    %1641 = vmatprep.subr.mxu0 0.0
    %1642 = vmatpush1.msra.mxu0 0.0
    %1643 = vmatprep.subr.mxu0 0.0
    %1644 = vmatpush1.msra.mxu0 0.0
    %1645 = vmatprep.subr.mxu0 0.0
    %1646 = vmatpush1.msra.mxu0 0.0
    %1647 = vmatprep.subr.mxu0 0.0
    %1648 = vmatpush1.msra.mxu0 0.0
    %1649 = vmatprep.subr.mxu0 0.0
    %1650 = vmatpush1.msra.mxu0 0.0
    %1651 = vmatprep.mubr.f32.mxu0 0.0
    %1652 = vmatmul.mubr.f32.gmra.mrb[0].mxu0 %v1585
    %v1653 = vpop.f32.mrb[0].mxu0
    %v1654 = vadd.f32 0.0, %v1653
    %v1655 = vpop.f32.mrb[0].mxu0
    %v1656 = vadd.f32 0.0, %v1655
    %1657 = vdwg.mxu0
    %1658 = vmatprep.subr.mxu0 %v634
    %1659 = vmatpush1.msra.mxu0 %v633
    %1660 = vmatprep.subr.mxu0 %v638
    %1661 = vmatpush1.msra.mxu0 %v637
    %1662 = vmatprep.subr.mxu0 %v642
    %1663 = vmatpush1.msra.mxu0 %v641
    %1664 = vmatprep.subr.mxu0 %v646
    %1665 = vmatpush1.msra.mxu0 %v645
    %1666 = vmatprep.subr.mxu0 %v650
    %1667 = vmatpush1.msra.mxu0 %v649
    %1668 = vmatprep.subr.mxu0 %v654
    %1669 = vmatpush1.msra.mxu0 %v653
    %1670 = vmatprep.subr.mxu0 %v658
    %1671 = vmatpush1.msra.mxu0 %v657
    %1672 = vmatprep.subr.mxu0 %v662
    %1673 = vmatpush1.msra.mxu0 %v661
    %1674 = vmatprep.subr.mxu0 %v666
    %1675 = vmatpush1.msra.mxu0 %v665
    %1676 = vmatprep.subr.mxu0 %v670
    %1677 = vmatpush1.msra.mxu0 %v669
    %1678 = vmatprep.subr.mxu0 %v674
    %1679 = vmatpush1.msra.mxu0 %v673
    %1680 = vmatprep.subr.mxu0 %v678
    %1681 = vmatpush1.msra.mxu0 %v677
    %1682 = vmatprep.subr.mxu0 %v682
    %1683 = vmatpush1.msra.mxu0 %v681
    %1684 = vmatprep.subr.mxu0 %v686
    %1685 = vmatpush1.msra.mxu0 %v685
    %1686 = vmatprep.subr.mxu0 %v690
    %1687 = vmatpush1.msra.mxu0 %v689
    %1688 = vmatprep.subr.mxu0 %v694
    %1689 = vmatpush1.msra.mxu0 %v693
    %1690 = vmatprep.subr.mxu0 0.0
    %1691 = vmatpush1.msra.mxu0 0.0
    %1692 = vmatprep.subr.mxu0 0.0
    %1693 = vmatpush1.msra.mxu0 0.0
    %1694 = vmatprep.subr.mxu0 0.0
    %1695 = vmatpush1.msra.mxu0 0.0
    %1696 = vmatprep.subr.mxu0 0.0
    %1697 = vmatpush1.msra.mxu0 0.0
    %1698 = vmatprep.subr.mxu0 0.0
    %1699 = vmatpush1.msra.mxu0 0.0
    %1700 = vmatprep.subr.mxu0 0.0
    %1701 = vmatpush1.msra.mxu0 0.0
    %1702 = vmatprep.subr.mxu0 0.0
    %1703 = vmatpush1.msra.mxu0 0.0
    %1704 = vmatprep.subr.mxu0 0.0
    %1705 = vmatpush1.msra.mxu0 0.0
    %1706 = vmatprep.subr.mxu0 0.0
    %1707 = vmatpush1.msra.mxu0 0.0
    %1708 = vmatprep.subr.mxu0 0.0
    %1709 = vmatpush1.msra.mxu0 0.0
    %1710 = vmatprep.subr.mxu0 0.0
    %1711 = vmatpush1.msra.mxu0 0.0
    %1712 = vmatprep.subr.mxu0 0.0
    %1713 = vmatpush1.msra.mxu0 0.0
    %1714 = vmatprep.subr.mxu0 0.0
    %1715 = vmatpush1.msra.mxu0 0.0
    %1716 = vmatprep.subr.mxu0 0.0
    %1717 = vmatpush1.msra.mxu0 0.0
    %1718 = vmatprep.subr.mxu0 0.0
    %1719 = vmatpush1.msra.mxu0 0.0
    %1720 = vmatprep.subr.mxu0 0.0
    %1721 = vmatpush1.msra.mxu0 0.0
    %1722 = vmatprep.mubr.f32.mxu0 0.0
    %1723 = vmatmul.mubr.f32.gmra.mrb[0].mxu0 %v1585
    %v1724 = vpop.f32.mrb[0].mxu0
    %v1725 = vadd.f32 0.0, %v1724
    %v1726 = vpop.f32.mrb[0].mxu0
    %v1727 = vadd.f32 0.0, %v1726
    %1728 = vdwg.mxu0
    %v1733 = vrot.slane %v1654, 3
    %v1734 = vrot.slane %v1656, 3
    %v1735 = vrot.slane %v1725, 3
    %v1736 = vrot.slane %v1727, 3
    %v1741 = vadd.f32 %v627, %v1733
    %v1742 = vadd.f32 %v628, %v1734
    %v1743 = vadd.f32 %v629, %v1735
    %v1744 = vadd.f32 %v630, %v1736
    %v1745 = vmul.f32 %v1741, 0.5
    %v1746 = vmul.f32 %v1742, 0.5
    %v1747 = vmul.f32 %v1743, 0.5
    %v1748 = vtanh.pop %v1745
    %v1749 = vtanh.pop %v1746
    %v1750 = vtanh.pop %v1747
    %v1751 = vmul.f32 %v1748, 0.5
    %v1752 = vmul.f32 %v1749, 0.5
    %v1753 = vmul.f32 %v1750, 0.5
    %v1754 = vadd.f32 %v1751, 0.5
    %v1755 = vadd.f32 %v1752, 0.5
    %v1756 = vadd.f32 %v1753, 0.5
    %v1757 = vtanh.pop %v1744
    %v1759 = vrot.slane %v1581, 7
    %v1761 = vmul.f32 %v1755, %v1759
    %v1762 = vmul.f32 %v1754, %v1757
    %v1763 = vadd.f32 %v1761, %v1762
    %v1764 = vtanh.pop %v1763
    %v1765 = vmul.f32 %v1756, %v1764
    %v1767 = vrot.slane %v1765, 5
    %1769 = vmatprep.subr.mxu0 %v632
    %1770 = vmatpush1.msra.mxu0 %v631
    %1771 = vmatprep.subr.mxu0 %v636
    %1772 = vmatpush1.msra.mxu0 %v635
    %1773 = vmatprep.subr.mxu0 %v640
    %1774 = vmatpush1.msra.mxu0 %v639
    %1775 = vmatprep.subr.mxu0 %v644
    %1776 = vmatpush1.msra.mxu0 %v643
    %1777 = vmatprep.subr.mxu0 %v648
    %1778 = vmatpush1.msra.mxu0 %v647
    %1779 = vmatprep.subr.mxu0 %v652
    %1780 = vmatpush1.msra.mxu0 %v651
    %1781 = vmatprep.subr.mxu0 %v656
    %1782 = vmatpush1.msra.mxu0 %v655
    %1783 = vmatprep.subr.mxu0 %v660
    %1784 = vmatpush1.msra.mxu0 %v659
    %1785 = vmatprep.subr.mxu0 %v664
    %1786 = vmatpush1.msra.mxu0 %v663
    %1787 = vmatprep.subr.mxu0 %v668
    %1788 = vmatpush1.msra.mxu0 %v667
    %1789 = vmatprep.subr.mxu0 %v672
    %1790 = vmatpush1.msra.mxu0 %v671
    %1791 = vmatprep.subr.mxu0 %v676
    %1792 = vmatpush1.msra.mxu0 %v675
    %1793 = vmatprep.subr.mxu0 %v680
    %1794 = vmatpush1.msra.mxu0 %v679
    %1795 = vmatprep.subr.mxu0 %v684
    %1796 = vmatpush1.msra.mxu0 %v683
    %1797 = vmatprep.subr.mxu0 %v688
    %1798 = vmatpush1.msra.mxu0 %v687
    %1799 = vmatprep.subr.mxu0 %v692
    %1800 = vmatpush1.msra.mxu0 %v691
    %1801 = vmatprep.subr.mxu0 0.0
    %1802 = vmatpush1.msra.mxu0 0.0
    %1803 = vmatprep.subr.mxu0 0.0
    %1804 = vmatpush1.msra.mxu0 0.0
    %1805 = vmatprep.subr.mxu0 0.0
    %1806 = vmatpush1.msra.mxu0 0.0
    %1807 = vmatprep.subr.mxu0 0.0
    %1808 = vmatpush1.msra.mxu0 0.0
    %1809 = vmatprep.subr.mxu0 0.0
    %1810 = vmatpush1.msra.mxu0 0.0
    %1811 = vmatprep.subr.mxu0 0.0
    %1812 = vmatpush1.msra.mxu0 0.0
    %1813 = vmatprep.subr.mxu0 0.0
    %1814 = vmatpush1.msra.mxu0 0.0
    %1815 = vmatprep.subr.mxu0 0.0
    %1816 = vmatpush1.msra.mxu0 0.0
    %1817 = vmatprep.subr.mxu0 0.0
    %1818 = vmatpush1.msra.mxu0 0.0
    %1819 = vmatprep.subr.mxu0 0.0
    %1820 = vmatpush1.msra.mxu0 0.0
    %1821 = vmatprep.subr.mxu0 0.0
    %1822 = vmatpush1.msra.mxu0 0.0
    %1823 = vmatprep.subr.mxu0 0.0
    %1824 = vmatpush1.msra.mxu0 0.0
    %1825 = vmatprep.subr.mxu0 0.0
    %1826 = vmatpush1.msra.mxu0 0.0
    %1827 = vmatprep.subr.mxu0 0.0
    %1828 = vmatpush1.msra.mxu0 0.0
    %1829 = vmatprep.subr.mxu0 0.0
    %1830 = vmatpush1.msra.mxu0 0.0
    %1831 = vmatprep.subr.mxu0 0.0
    %1832 = vmatpush1.msra.mxu0 0.0
    %1833 = vmatprep.mubr.f32.mxu0 0.0
    %1834 = vmatmul.mubr.f32.gmra.mrb[0].mxu0 %v1767
    %v1835 = vpop.f32.mrb[0].mxu0
    %v1836 = vadd.f32 0.0, %v1835
    %v1837 = vpop.f32.mrb[0].mxu0
    %v1838 = vadd.f32 0.0, %v1837
    %1839 = vdwg.mxu0
    %1840 = vmatprep.subr.mxu0 %v634
    %1841 = vmatpush1.msra.mxu0 %v633
    %1842 = vmatprep.subr.mxu0 %v638
    %1843 = vmatpush1.msra.mxu0 %v637
    %1844 = vmatprep.subr.mxu0 %v642
    %1845 = vmatpush1.msra.mxu0 %v641
    %1846 = vmatprep.subr.mxu0 %v646
    %1847 = vmatpush1.msra.mxu0 %v645
    %1848 = vmatprep.subr.mxu0 %v650
    %1849 = vmatpush1.msra.mxu0 %v649
    %1850 = vmatprep.subr.mxu0 %v654
    %1851 = vmatpush1.msra.mxu0 %v653
    %1852 = vmatprep.subr.mxu0 %v658
    %1853 = vmatpush1.msra.mxu0 %v657
    %1854 = vmatprep.subr.mxu0 %v662
    %1855 = vmatpush1.msra.mxu0 %v661
    %1856 = vmatprep.subr.mxu0 %v666
    %1857 = vmatpush1.msra.mxu0 %v665
    %1858 = vmatprep.subr.mxu0 %v670
    %1859 = vmatpush1.msra.mxu0 %v669
    %1860 = vmatprep.subr.mxu0 %v674
    %1861 = vmatpush1.msra.mxu0 %v673
    %1862 = vmatprep.subr.mxu0 %v678
    %1863 = vmatpush1.msra.mxu0 %v677
    %1864 = vmatprep.subr.mxu0 %v682
    %1865 = vmatpush1.msra.mxu0 %v681
    %1866 = vmatprep.subr.mxu0 %v686
    %1867 = vmatpush1.msra.mxu0 %v685
    %1868 = vmatprep.subr.mxu0 %v690
    %1869 = vmatpush1.msra.mxu0 %v689
    %1870 = vmatprep.subr.mxu0 %v694
    %1871 = vmatpush1.msra.mxu0 %v693
    %1872 = vmatprep.subr.mxu0 0.0
    %1873 = vmatpush1.msra.mxu0 0.0
    %1874 = vmatprep.subr.mxu0 0.0
    %1875 = vmatpush1.msra.mxu0 0.0
    %1876 = vmatprep.subr.mxu0 0.0
    %1877 = vmatpush1.msra.mxu0 0.0
    %1878 = vmatprep.subr.mxu0 0.0
    %1879 = vmatpush1.msra.mxu0 0.0
    %1880 = vmatprep.subr.mxu0 0.0
    %1881 = vmatpush1.msra.mxu0 0.0
    %1882 = vmatprep.subr.mxu0 0.0
    %1883 = vmatpush1.msra.mxu0 0.0
    %1884 = vmatprep.subr.mxu0 0.0
    %1885 = vmatpush1.msra.mxu0 0.0
    %1886 = vmatprep.subr.mxu0 0.0
    %1887 = vmatpush1.msra.mxu0 0.0
    %1888 = vmatprep.subr.mxu0 0.0
    %1889 = vmatpush1.msra.mxu0 0.0
    %1890 = vmatprep.subr.mxu0 0.0
    %1891 = vmatpush1.msra.mxu0 0.0
    %1892 = vmatprep.subr.mxu0 0.0
    %1893 = vmatpush1.msra.mxu0 0.0
    %1894 = vmatprep.subr.mxu0 0.0
    %1895 = vmatpush1.msra.mxu0 0.0
    %1896 = vmatprep.subr.mxu0 0.0
    %1897 = vmatpush1.msra.mxu0 0.0
    %1898 = vmatprep.subr.mxu0 0.0
    %1899 = vmatpush1.msra.mxu0 0.0
    %1900 = vmatprep.subr.mxu0 0.0
    %1901 = vmatpush1.msra.mxu0 0.0
    %1902 = vmatprep.subr.mxu0 0.0
    %1903 = vmatpush1.msra.mxu0 0.0
    %1904 = vmatprep.mubr.f32.mxu0 0.0
    %1905 = vmatmul.mubr.f32.gmra.mrb[0].mxu0 %v1767
    %v1906 = vpop.f32.mrb[0].mxu0
    %v1907 = vadd.f32 0.0, %v1906
    %v1908 = vpop.f32.mrb[0].mxu0
    %v1909 = vadd.f32 0.0, %v1908
    %1910 = vdwg.mxu0
    %v1915 = vrot.slane %v1836, 2
    %v1916 = vrot.slane %v1838, 2
    %v1917 = vrot.slane %v1907, 2
    %v1918 = vrot.slane %v1909, 2
    %v1923 = vadd.f32 %v627, %v1915
    %v1924 = vadd.f32 %v628, %v1916
    %v1925 = vadd.f32 %v629, %v1917
    %v1926 = vadd.f32 %v630, %v1918
    %v1927 = vmul.f32 %v1923, 0.5
    %v1928 = vmul.f32 %v1924, 0.5
    %v1929 = vmul.f32 %v1925, 0.5
    %v1930 = vtanh.pop %v1927
    %v1931 = vtanh.pop %v1928
    %v1932 = vtanh.pop %v1929
    %v1933 = vmul.f32 %v1930, 0.5
    %v1934 = vmul.f32 %v1931, 0.5
    %v1935 = vmul.f32 %v1932, 0.5
    %v1936 = vadd.f32 %v1933, 0.5
    %v1937 = vadd.f32 %v1934, 0.5
    %v1938 = vadd.f32 %v1935, 0.5
    %v1939 = vtanh.pop %v1926
    %v1941 = vrot.slane %v1763, 7
    %v1943 = vmul.f32 %v1937, %v1941
    %v1944 = vmul.f32 %v1936, %v1939
    %v1945 = vadd.f32 %v1943, %v1944
    %v1946 = vtanh.pop %v1945
    %v1947 = vmul.f32 %v1938, %v1946
    %v1949 = vrot.slane %v1947, 6
    %1951 = vmatprep.subr.mxu0 %v632
    %1952 = vmatpush1.msra.mxu0 %v631
    %1953 = vmatprep.subr.mxu0 %v636
    %1954 = vmatpush1.msra.mxu0 %v635
    %1955 = vmatprep.subr.mxu0 %v640
    %1956 = vmatpush1.msra.mxu0 %v639
    %1957 = vmatprep.subr.mxu0 %v644
    %1958 = vmatpush1.msra.mxu0 %v643
    %1959 = vmatprep.subr.mxu0 %v648
    %1960 = vmatpush1.msra.mxu0 %v647
    %1961 = vmatprep.subr.mxu0 %v652
    %1962 = vmatpush1.msra.mxu0 %v651
    %1963 = vmatprep.subr.mxu0 %v656
    %1964 = vmatpush1.msra.mxu0 %v655
    %1965 = vmatprep.subr.mxu0 %v660
    %1966 = vmatpush1.msra.mxu0 %v659
    %1967 = vmatprep.subr.mxu0 %v664
    %1968 = vmatpush1.msra.mxu0 %v663
    %1969 = vmatprep.subr.mxu0 %v668
    %1970 = vmatpush1.msra.mxu0 %v667
    %1971 = vmatprep.subr.mxu0 %v672
    %1972 = vmatpush1.msra.mxu0 %v671
    %1973 = vmatprep.subr.mxu0 %v676
    %1974 = vmatpush1.msra.mxu0 %v675
    %1975 = vmatprep.subr.mxu0 %v680
    %1976 = vmatpush1.msra.mxu0 %v679
    %1977 = vmatprep.subr.mxu0 %v684
    %1978 = vmatpush1.msra.mxu0 %v683
    %1979 = vmatprep.subr.mxu0 %v688
    %1980 = vmatpush1.msra.mxu0 %v687
    %1981 = vmatprep.subr.mxu0 %v692
    %1982 = vmatpush1.msra.mxu0 %v691
    %1983 = vmatprep.subr.mxu0 0.0
    %1984 = vmatpush1.msra.mxu0 0.0
    %1985 = vmatprep.subr.mxu0 0.0
    %1986 = vmatpush1.msra.mxu0 0.0
    %1987 = vmatprep.subr.mxu0 0.0
    %1988 = vmatpush1.msra.mxu0 0.0
    %1989 = vmatprep.subr.mxu0 0.0
    %1990 = vmatpush1.msra.mxu0 0.0
    %1991 = vmatprep.subr.mxu0 0.0
    %1992 = vmatpush1.msra.mxu0 0.0
    %1993 = vmatprep.subr.mxu0 0.0
    %1994 = vmatpush1.msra.mxu0 0.0
    %1995 = vmatprep.subr.mxu0 0.0
    %1996 = vmatpush1.msra.mxu0 0.0
    %1997 = vmatprep.subr.mxu0 0.0
    %1998 = vmatpush1.msra.mxu0 0.0
    %1999 = vmatprep.subr.mxu0 0.0
    %2000 = vmatpush1.msra.mxu0 0.0
    %2001 = vmatprep.subr.mxu0 0.0
    %2002 = vmatpush1.msra.mxu0 0.0
    %2003 = vmatprep.subr.mxu0 0.0
    %2004 = vmatpush1.msra.mxu0 0.0
    %2005 = vmatprep.subr.mxu0 0.0
    %2006 = vmatpush1.msra.mxu0 0.0
    %2007 = vmatprep.subr.mxu0 0.0
    %2008 = vmatpush1.msra.mxu0 0.0
    %2009 = vmatprep.subr.mxu0 0.0
    %2010 = vmatpush1.msra.mxu0 0.0
    %2011 = vmatprep.subr.mxu0 0.0
    %2012 = vmatpush1.msra.mxu0 0.0
    %2013 = vmatprep.subr.mxu0 0.0
    %2014 = vmatpush1.msra.mxu0 0.0
    %2015 = vmatprep.mubr.f32.mxu0 0.0
    %2016 = vmatmul.mubr.f32.gmra.mrb[0].mxu0 %v1949
    %v2017 = vpop.f32.mrb[0].mxu0
    %v2018 = vadd.f32 0.0, %v2017
    %v2019 = vpop.f32.mrb[0].mxu0
    %v2020 = vadd.f32 0.0, %v2019
    %2021 = vdwg.mxu0
    %2022 = vmatprep.subr.mxu0 %v634
    %2023 = vmatpush1.msra.mxu0 %v633
    %2024 = vmatprep.subr.mxu0 %v638
    %2025 = vmatpush1.msra.mxu0 %v637
    %2026 = vmatprep.subr.mxu0 %v642
    %2027 = vmatpush1.msra.mxu0 %v641
    %2028 = vmatprep.subr.mxu0 %v646
    %2029 = vmatpush1.msra.mxu0 %v645
    %2030 = vmatprep.subr.mxu0 %v650
    %2031 = vmatpush1.msra.mxu0 %v649
    %2032 = vmatprep.subr.mxu0 %v654
    %2033 = vmatpush1.msra.mxu0 %v653
    %2034 = vmatprep.subr.mxu0 %v658
    %2035 = vmatpush1.msra.mxu0 %v657
    %2036 = vmatprep.subr.mxu0 %v662
    %2037 = vmatpush1.msra.mxu0 %v661
    %2038 = vmatprep.subr.mxu0 %v666
    %2039 = vmatpush1.msra.mxu0 %v665
    %2040 = vmatprep.subr.mxu0 %v670
    %2041 = vmatpush1.msra.mxu0 %v669
    %2042 = vmatprep.subr.mxu0 %v674
    %2043 = vmatpush1.msra.mxu0 %v673
    %2044 = vmatprep.subr.mxu0 %v678
    %2045 = vmatpush1.msra.mxu0 %v677
    %2046 = vmatprep.subr.mxu0 %v682
    %2047 = vmatpush1.msra.mxu0 %v681
    %2048 = vmatprep.subr.mxu0 %v686
    %2049 = vmatpush1.msra.mxu0 %v685
    %2050 = vmatprep.subr.mxu0 %v690
    %2051 = vmatpush1.msra.mxu0 %v689
    %2052 = vmatprep.subr.mxu0 %v694
    %2053 = vmatpush1.msra.mxu0 %v693
    %2054 = vmatprep.subr.mxu0 0.0
    %2055 = vmatpush1.msra.mxu0 0.0
    %2056 = vmatprep.subr.mxu0 0.0
    %2057 = vmatpush1.msra.mxu0 0.0
    %2058 = vmatprep.subr.mxu0 0.0
    %2059 = vmatpush1.msra.mxu0 0.0
    %2060 = vmatprep.subr.mxu0 0.0
    %2061 = vmatpush1.msra.mxu0 0.0
    %2062 = vmatprep.subr.mxu0 0.0
    %2063 = vmatpush1.msra.mxu0 0.0
    %2064 = vmatprep.subr.mxu0 0.0
    %2065 = vmatpush1.msra.mxu0 0.0
    %2066 = vmatprep.subr.mxu0 0.0
    %2067 = vmatpush1.msra.mxu0 0.0
    %2068 = vmatprep.subr.mxu0 0.0
    %2069 = vmatpush1.msra.mxu0 0.0
    %2070 = vmatprep.subr.mxu0 0.0
    %2071 = vmatpush1.msra.mxu0 0.0
    %2072 = vmatprep.subr.mxu0 0.0
    %2073 = vmatpush1.msra.mxu0 0.0
    %2074 = vmatprep.subr.mxu0 0.0
    %2075 = vmatpush1.msra.mxu0 0.0
    %2076 = vmatprep.subr.mxu0 0.0
    %2077 = vmatpush1.msra.mxu0 0.0
    %2078 = vmatprep.subr.mxu0 0.0
    %2079 = vmatpush1.msra.mxu0 0.0
    %2080 = vmatprep.subr.mxu0 0.0
    %2081 = vmatpush1.msra.mxu0 0.0
    %2082 = vmatprep.subr.mxu0 0.0
    %2083 = vmatpush1.msra.mxu0 0.0
    %2084 = vmatprep.subr.mxu0 0.0
    %2085 = vmatpush1.msra.mxu0 0.0
    %2086 = vmatprep.mubr.f32.mxu0 0.0
    %2087 = vmatmul.mubr.f32.gmra.mrb[0].mxu0 %v1949
    %v2088 = vpop.f32.mrb[0].mxu0
    %v2089 = vadd.f32 0.0, %v2088
    %v2090 = vpop.f32.mrb[0].mxu0
    %v2091 = vadd.f32 0.0, %v2090
    %2092 = vdwg.mxu0
    %v2097 = vrot.slane %v2018, 1
    %v2098 = vrot.slane %v2020, 1
    %v2099 = vrot.slane %v2089, 1
    %v2100 = vrot.slane %v2091, 1
    %v2105 = vadd.f32 %v627, %v2097
    %v2106 = vadd.f32 %v628, %v2098
    %v2107 = vadd.f32 %v629, %v2099
    %v2108 = vadd.f32 %v630, %v2100
    %v2109 = vmul.f32 %v2105, 0.5
    %v2110 = vmul.f32 %v2106, 0.5
    %v2111 = vmul.f32 %v2107, 0.5
    %v2112 = vtanh.pop %v2109
    %v2113 = vtanh.pop %v2110
    %v2114 = vtanh.pop %v2111
    %v2115 = vmul.f32 %v2112, 0.5
    %v2116 = vmul.f32 %v2113, 0.5
    %v2117 = vmul.f32 %v2114, 0.5
    %v2118 = vadd.f32 %v2115, 0.5
    %v2119 = vadd.f32 %v2116, 0.5
    %v2120 = vadd.f32 %v2117, 0.5
    %v2121 = vtanh.pop %v2108
    %v2123 = vrot.slane %v1945, 7
    %v2125 = vmul.f32 %v2119, %v2123
    %v2126 = vmul.f32 %v2118, %v2121
    %v2127 = vadd.f32 %v2125, %v2126
    %v2128 = vtanh.pop %v2127
    %v2129 = vmul.f32 %v2120, %v2128
    %vm2130 = vcmask 1040384
    %v2131 = vsel %vm2130, %v858, %v1037
    %vm2132 = vcmask 1041408
    %v2133 = vsel %vm2132, %v2131, %v1219
    %vm2134 = vcmask 1042432
    %v2135 = vsel %vm2134, %v2133, %v1401
    %vm2136 = vcmask 1043456
    %v2137 = vsel %vm2136, %v2135, %v1583
    %vm2138 = vcmask 1044480
    %v2139 = vsel %vm2138, %v2137, %v1765
    %vm2140 = vcmask 1045504
    %v2141 = vsel %vm2140, %v2139, %v1947
    %vm2142 = vcmask 1046528
    %v2143 = vsel %vm2142, %v2141, %v2129
    %v2144 = vld [vmem:[#allocation12] sm:$0xff]
    %v2145 = vld [vmem:[#allocation12 + $0x8] sm:$0xff]
    %v2146 = vld [vmem:[#allocation12 + $0x10] sm:$0xff]
    %v2147 = vld [vmem:[#allocation12 + $0x18] sm:$0xff]
    %v2148 = vld [vmem:[#allocation12 + $0x20] sm:$0xff]
    %v2149 = vld [vmem:[#allocation12 + $0x28] sm:$0xff]
    %v2150 = vld [vmem:[#allocation12 + $0x30] sm:$0xff]
    %v2151 = vld [vmem:[#allocation12 + $0x38] sm:$0xff]
    %v2152 = vld [vmem:[#allocation12 + $0x40] sm:$0xff]
    %v2153 = vld [vmem:[#allocation12 + $0x48] sm:$0xff]
    %v2154 = vld [vmem:[#allocation12 + $0x50] sm:$0xff]
    %v2155 = vld [vmem:[#allocation12 + $0x58] sm:$0xff]
    %v2156 = vld [vmem:[#allocation12 + $0x60] sm:$0xff]
    %v2157 = vld [vmem:[#allocation12 + $0x68] sm:$0xff]
    %v2158 = vld [vmem:[#allocation12 + $0x70] sm:$0xff]
    %v2159 = vld [vmem:[#allocation12 + $0x78] sm:$0xff]
    %v2160 = vld [vmem:[#allocation12 + $0x80] sm:$0xff]
    %v2161 = vld [vmem:[#allocation12 + $0x88] sm:$0xff]
    %v2162 = vld [vmem:[#allocation12 + $0x90] sm:$0xff]
    %v2163 = vld [vmem:[#allocation12 + $0x98] sm:$0xff]
    %v2164 = vld [vmem:[#allocation12 + $0xa0] sm:$0xff]
    %v2165 = vld [vmem:[#allocation12 + $0xa8] sm:$0xff]
    %v2166 = vld [vmem:[#allocation12 + $0xb0] sm:$0xff]
    %v2167 = vld [vmem:[#allocation12 + $0xb8] sm:$0xff]
    %v2168 = vld [vmem:[#allocation12 + $0xc0] sm:$0xff]
    %v2169 = vld [vmem:[#allocation12 + $0xc8] sm:$0xff]
    %v2170 = vld [vmem:[#allocation12 + $0xd0] sm:$0xff]
    %v2171 = vld [vmem:[#allocation12 + $0xd8] sm:$0xff]
    %v2172 = vld [vmem:[#allocation12 + $0xe0] sm:$0xff]
    %v2173 = vld [vmem:[#allocation12 + $0xe8] sm:$0xff]
    %v2174 = vld [vmem:[#allocation12 + $0xf0] sm:$0xff]
    %v2175 = vld [vmem:[#allocation12 + $0xf8] sm:$0xff]
    %v2176 = vld [vmem:[%s7] sm:$0x3]
    %v2178 = vlaneseq
    %v2179 = vshrl.u32 %v2178, 7
    %v2180 = vsub.s32 0, %v2179
    %v2181 = vrot.slane %v2176, %v2180
    %v2182 = vlaneseq
    %v2183 = vshrl.u32 %v2182, 7
    %v2184 = vsub.s32 1, %v2183
    %v2185 = vrot.slane %v2176, %v2184
    %2188 = vmatprep.subr.mxu0 %v2145
    %2189 = vmatpush1.msra.mxu0 %v2144
    %2190 = vmatprep.subr.mxu0 %v2147
    %2191 = vmatpush1.msra.mxu0 %v2146
    %2192 = vmatprep.subr.mxu0 %v2149
    %2193 = vmatpush1.msra.mxu0 %v2148
    %2194 = vmatprep.subr.mxu0 %v2151
    %2195 = vmatpush1.msra.mxu0 %v2150
    %2196 = vmatprep.subr.mxu0 %v2153
    %2197 = vmatpush1.msra.mxu0 %v2152
    %2198 = vmatprep.subr.mxu0 %v2155
    %2199 = vmatpush1.msra.mxu0 %v2154
    %2200 = vmatprep.subr.mxu0 %v2157
    %2201 = vmatpush1.msra.mxu0 %v2156
    %2202 = vmatprep.subr.mxu0 %v2159
    %2203 = vmatpush1.msra.mxu0 %v2158
    %2204 = vmatprep.subr.mxu0 %v2161
    %2205 = vmatpush1.msra.mxu0 %v2160
    %2206 = vmatprep.subr.mxu0 %v2163
    %2207 = vmatpush1.msra.mxu0 %v2162
    %2208 = vmatprep.subr.mxu0 %v2165
    %2209 = vmatpush1.msra.mxu0 %v2164
    %2210 = vmatprep.subr.mxu0 %v2167
    %2211 = vmatpush1.msra.mxu0 %v2166
    %2212 = vmatprep.subr.mxu0 %v2169
    %2213 = vmatpush1.msra.mxu0 %v2168
    %2214 = vmatprep.subr.mxu0 %v2171
    %2215 = vmatpush1.msra.mxu0 %v2170
    %2216 = vmatprep.subr.mxu0 %v2173
    %2217 = vmatpush1.msra.mxu0 %v2172
    %2218 = vmatprep.subr.mxu0 %v2175
    %2219 = vmatpush1.msra.mxu0 %v2174
    %2220 = vmatprep.subr.mxu0 0.0
    %2221 = vmatpush1.msra.mxu0 0.0
    %2222 = vmatprep.subr.mxu0 0.0
    %2223 = vmatpush1.msra.mxu0 0.0
    %2224 = vmatprep.subr.mxu0 0.0
    %2225 = vmatpush1.msra.mxu0 0.0
    %2226 = vmatprep.subr.mxu0 0.0
    %2227 = vmatpush1.msra.mxu0 0.0
    %2228 = vmatprep.subr.mxu0 0.0
    %2229 = vmatpush1.msra.mxu0 0.0
    %2230 = vmatprep.subr.mxu0 0.0
    %2231 = vmatpush1.msra.mxu0 0.0
    %2232 = vmatprep.subr.mxu0 0.0
    %2233 = vmatpush1.msra.mxu0 0.0
    %2234 = vmatprep.subr.mxu0 0.0
    %2235 = vmatpush1.msra.mxu0 0.0
    %2236 = vmatprep.subr.mxu0 0.0
    %2237 = vmatpush1.msra.mxu0 0.0
    %2238 = vmatprep.subr.mxu0 0.0
    %2239 = vmatpush1.msra.mxu0 0.0
    %2240 = vmatprep.subr.mxu0 0.0
    %2241 = vmatpush1.msra.mxu0 0.0
    %2242 = vmatprep.subr.mxu0 0.0
    %2243 = vmatpush1.msra.mxu0 0.0
    %2244 = vmatprep.subr.mxu0 0.0
    %2245 = vmatpush1.msra.mxu0 0.0
    %2246 = vmatprep.subr.mxu0 0.0
    %2247 = vmatpush1.msra.mxu0 0.0
    %2248 = vmatprep.subr.mxu0 0.0
    %2249 = vmatpush1.msra.mxu0 0.0
    %2250 = vmatprep.subr.mxu0 0.0
    %2251 = vmatpush1.msra.mxu0 0.0
    %2252 = vmatprep.mubr.f32.mxu0 0.0
    %2253 = vmatmul.mubr.f32.gmra.mrb[0].mxu0 %v2143
    %v2254 = vpop.f32.mrb[0].mxu0
    %v2255 = vadd.f32 %v2181, %v2254
    %v2256 = vpop.f32.mrb[0].mxu0
    %v2257 = vadd.f32 %v2185, %v2256
    %2258 = vdwg.mxu0
    %v2259 = vmul.f32 %v2255, 0.5
    %v2260 = vmul.f32 %v2257, 0.5
    %v2261 = vtanh.pop %v2259
    %v2262 = vtanh.pop %v2260
    %v2263 = vmul.f32 %v2261, 0.5
    %v2264 = vmul.f32 %v2262, 0.5
    %v2265 = vadd.f32 %v2263, 0.5
    %v2266 = vadd.f32 %v2264, 0.5
    %v2267 = vmul.f32 %v2255, %v2265
    %v2268 = vmul.f32 %v2257, %v2266
    %v2269 = vld [vmem:[#allocation13] sm:$0xff]
    %v2270 = vld [vmem:[#allocation13 + $0x8] sm:$0xff]
    %v2271 = vld [vmem:[#allocation13 + $0x10] sm:$0xff]
    %v2272 = vld [vmem:[#allocation13 + $0x18] sm:$0xff]
    %v2273 = vld [vmem:[#allocation13 + $0x20] sm:$0xff]
    %v2274 = vld [vmem:[#allocation13 + $0x28] sm:$0xff]
    %v2275 = vld [vmem:[#allocation13 + $0x30] sm:$0xff]
    %v2276 = vld [vmem:[#allocation13 + $0x38] sm:$0xff]
    %v2277 = vld [vmem:[#allocation13 + $0x40] sm:$0xff]
    %v2278 = vld [vmem:[#allocation13 + $0x48] sm:$0xff]
    %v2279 = vld [vmem:[#allocation13 + $0x50] sm:$0xff]
    %v2280 = vld [vmem:[#allocation13 + $0x58] sm:$0xff]
    %v2281 = vld [vmem:[#allocation13 + $0x60] sm:$0xff]
    %v2282 = vld [vmem:[#allocation13 + $0x68] sm:$0xff]
    %v2283 = vld [vmem:[#allocation13 + $0x70] sm:$0xff]
    %v2284 = vld [vmem:[#allocation13 + $0x78] sm:$0xff]
    %v2285 = vld [vmem:[#allocation13 + $0x80] sm:$0xff]
    %v2286 = vld [vmem:[#allocation13 + $0x88] sm:$0xff]
    %v2287 = vld [vmem:[#allocation13 + $0x90] sm:$0xff]
    %v2288 = vld [vmem:[#allocation13 + $0x98] sm:$0xff]
    %v2289 = vld [vmem:[#allocation13 + $0xa0] sm:$0xff]
    %v2290 = vld [vmem:[#allocation13 + $0xa8] sm:$0xff]
    %v2291 = vld [vmem:[#allocation13 + $0xb0] sm:$0xff]
    %v2292 = vld [vmem:[#allocation13 + $0xb8] sm:$0xff]
    %v2293 = vld [vmem:[#allocation13 + $0xc0] sm:$0xff]
    %v2294 = vld [vmem:[#allocation13 + $0xc8] sm:$0xff]
    %v2295 = vld [vmem:[#allocation13 + $0xd0] sm:$0xff]
    %v2296 = vld [vmem:[#allocation13 + $0xd8] sm:$0xff]
    %v2297 = vld [vmem:[#allocation13 + $0xe0] sm:$0xff]
    %v2298 = vld [vmem:[#allocation13 + $0xe8] sm:$0xff]
    %v2299 = vld [vmem:[#allocation13 + $0xf0] sm:$0xff]
    %v2300 = vld [vmem:[#allocation13 + $0xf8] sm:$0xff]
    %v2301 = vld [vmem:[#allocation13 + $0x100] sm:$0xff]
    %v2302 = vld [vmem:[#allocation13 + $0x108] sm:$0xff]
    %v2303 = vld [vmem:[#allocation13 + $0x110] sm:$0xff]
    %v2304 = vld [vmem:[#allocation13 + $0x118] sm:$0xff]
    %v2305 = vld [vmem:[#allocation13 + $0x120] sm:$0xff]
    %v2306 = vld [vmem:[#allocation13 + $0x128] sm:$0xff]
    %v2307 = vld [vmem:[#allocation13 + $0x130] sm:$0xff]
    %v2308 = vld [vmem:[#allocation13 + $0x138] sm:$0xff]
    %v2309 = vld [vmem:[#allocation13 + $0x140] sm:$0xff]
    %v2310 = vld [vmem:[#allocation13 + $0x148] sm:$0xff]
    %v2311 = vld [vmem:[#allocation13 + $0x150] sm:$0xff]
    %v2312 = vld [vmem:[#allocation13 + $0x158] sm:$0xff]
    %v2313 = vld [vmem:[#allocation13 + $0x160] sm:$0xff]
    %v2314 = vld [vmem:[#allocation13 + $0x168] sm:$0xff]
    %v2315 = vld [vmem:[#allocation13 + $0x170] sm:$0xff]
    %v2316 = vld [vmem:[#allocation13 + $0x178] sm:$0xff]
    %v2317 = vld [vmem:[#allocation13 + $0x180] sm:$0xff]
    %v2318 = vld [vmem:[#allocation13 + $0x188] sm:$0xff]
    %v2319 = vld [vmem:[#allocation13 + $0x190] sm:$0xff]
    %v2320 = vld [vmem:[#allocation13 + $0x198] sm:$0xff]
    %v2321 = vld [vmem:[#allocation13 + $0x1a0] sm:$0xff]
    %v2322 = vld [vmem:[#allocation13 + $0x1a8] sm:$0xff]
    %v2323 = vld [vmem:[#allocation13 + $0x1b0] sm:$0xff]
    %v2324 = vld [vmem:[#allocation13 + $0x1b8] sm:$0xff]
    %v2325 = vld [vmem:[#allocation13 + $0x1c0] sm:$0xff]
    %v2326 = vld [vmem:[#allocation13 + $0x1c8] sm:$0xff]
    %v2327 = vld [vmem:[#allocation13 + $0x1d0] sm:$0xff]
    %v2328 = vld [vmem:[#allocation13 + $0x1d8] sm:$0xff]
    %v2329 = vld [vmem:[#allocation13 + $0x1e0] sm:$0xff]
    %v2330 = vld [vmem:[#allocation13 + $0x1e8] sm:$0xff]
    %v2331 = vld [vmem:[#allocation13 + $0x1f0] sm:$0xff]
    %v2332 = vld [vmem:[#allocation13 + $0x1f8] sm:$0xff]
    %v2333 = vld [vmem:[%s9] sm:$0x3]
    %v2335 = vlaneseq
    %v2336 = vshrl.u32 %v2335, 7
    %v2337 = vsub.s32 0, %v2336
    %v2338 = vrot.slane %v2333, %v2337
    %v2339 = vlaneseq
    %v2340 = vshrl.u32 %v2339, 7
    %v2341 = vsub.s32 1, %v2340
    %v2342 = vrot.slane %v2333, %v2341
    %2345 = vmatprep.subr.mxu0 %v2270
    %2346 = vmatpush1.msra.mxu0 %v2269
    %2347 = vmatprep.subr.mxu0 %v2272
    %2348 = vmatpush1.msra.mxu0 %v2271
    %2349 = vmatprep.subr.mxu0 %v2274
    %2350 = vmatpush1.msra.mxu0 %v2273
    %2351 = vmatprep.subr.mxu0 %v2276
    %2352 = vmatpush1.msra.mxu0 %v2275
    %2353 = vmatprep.subr.mxu0 %v2278
    %2354 = vmatpush1.msra.mxu0 %v2277
    %2355 = vmatprep.subr.mxu0 %v2280
    %2356 = vmatpush1.msra.mxu0 %v2279
    %2357 = vmatprep.subr.mxu0 %v2282
    %2358 = vmatpush1.msra.mxu0 %v2281
    %2359 = vmatprep.subr.mxu0 %v2284
    %2360 = vmatpush1.msra.mxu0 %v2283
    %2361 = vmatprep.subr.mxu0 %v2286
    %2362 = vmatpush1.msra.mxu0 %v2285
    %2363 = vmatprep.subr.mxu0 %v2288
    %2364 = vmatpush1.msra.mxu0 %v2287
    %2365 = vmatprep.subr.mxu0 %v2290
    %2366 = vmatpush1.msra.mxu0 %v2289
    %2367 = vmatprep.subr.mxu0 %v2292
    %2368 = vmatpush1.msra.mxu0 %v2291
    %2369 = vmatprep.subr.mxu0 %v2294
    %2370 = vmatpush1.msra.mxu0 %v2293
    %2371 = vmatprep.subr.mxu0 %v2296
    %2372 = vmatpush1.msra.mxu0 %v2295
    %2373 = vmatprep.subr.mxu0 %v2298
    %2374 = vmatpush1.msra.mxu0 %v2297
    %2375 = vmatprep.subr.mxu0 %v2300
    %2376 = vmatpush1.msra.mxu0 %v2299
    %2377 = vmatprep.subr.mxu0 %v2302
    %2378 = vmatpush1.msra.mxu0 %v2301
    %2379 = vmatprep.subr.mxu0 %v2304
    %2380 = vmatpush1.msra.mxu0 %v2303
    %2381 = vmatprep.subr.mxu0 %v2306
    %2382 = vmatpush1.msra.mxu0 %v2305
    %2383 = vmatprep.subr.mxu0 %v2308
    %2384 = vmatpush1.msra.mxu0 %v2307
    %2385 = vmatprep.subr.mxu0 %v2310
    %2386 = vmatpush1.msra.mxu0 %v2309
    %2387 = vmatprep.subr.mxu0 %v2312
    %2388 = vmatpush1.msra.mxu0 %v2311
    %2389 = vmatprep.subr.mxu0 %v2314
    %2390 = vmatpush1.msra.mxu0 %v2313
    %2391 = vmatprep.subr.mxu0 %v2316
    %2392 = vmatpush1.msra.mxu0 %v2315
    %2393 = vmatprep.subr.mxu0 %v2318
    %2394 = vmatpush1.msra.mxu0 %v2317
    %2395 = vmatprep.subr.mxu0 %v2320
    %2396 = vmatpush1.msra.mxu0 %v2319
    %2397 = vmatprep.subr.mxu0 %v2322
    %2398 = vmatpush1.msra.mxu0 %v2321
    %2399 = vmatprep.subr.mxu0 %v2324
    %2400 = vmatpush1.msra.mxu0 %v2323
    %2401 = vmatprep.subr.mxu0 %v2326
    %2402 = vmatpush1.msra.mxu0 %v2325
    %2403 = vmatprep.subr.mxu0 %v2328
    %2404 = vmatpush1.msra.mxu0 %v2327
    %2405 = vmatprep.subr.mxu0 %v2330
    %2406 = vmatpush1.msra.mxu0 %v2329
    %2407 = vmatprep.subr.mxu0 %v2332
    %2408 = vmatpush1.msra.mxu0 %v2331
    %2409 = vmatprep.mubr.f32.mxu0 %v2268
    %2410 = vmatmul.mubr.f32.gmra.mrb[0].mxu0 %v2267
    %v2411 = vpop.f32.mrb[0].mxu0
    %v2412 = vadd.f32 %v2338, %v2411
    %v2413 = vpop.f32.mrb[0].mxu0
    %v2414 = vadd.f32 %v2342, %v2413
    %2415 = vdwg.mxu0
    %v2416 = vmul.f32 %v2412, 0.5
    %v2417 = vmul.f32 %v2414, 0.5
    %v2418 = vtanh.pop %v2416
    %v2419 = vtanh.pop %v2417
    %v2420 = vmul.f32 %v2418, 0.5
    %v2421 = vmul.f32 %v2419, 0.5
    %v2422 = vadd.f32 %v2420, 0.5
    %v2423 = vadd.f32 %v2421, 0.5
    %v2424 = vmul.f32 %v2412, %v2422
    %v2425 = vmul.f32 %v2414, %v2423
    %s2426 = smul.u32 0, 2
    %s2427 = smul.addr %s2426, 8
    %s2428 = scalar_lea.vmem [#allocation3], %s2427
    %2429 = vst [vmem:[%s2428] sm:$0xff] %v2424
    %2430 = vst [vmem:[%s2428 + $0x8] sm:$0xff] %v2425
    %2431 = vst [vmem:[#allocation23 - $0x7] sm:$0x80] %v2129
    %2432 = vst [vmem:[#allocation25 - $0x7] sm:$0x80] %v2127
    %v2433 = vld [vmem:[#allocation3] sm:$0xff]
    %v2434 = vld [vmem:[#allocation3 + $0x8] sm:$0xff]
    %v2435 = vld [vmem:[#allocation15] sm:$0xff]
    %v2436 = vld [vmem:[#allocation15 + $0x8] sm:$0xff]
    %v2437 = vld [vmem:[#allocation15 + $0x10] sm:$0xff]
    %v2438 = vld [vmem:[#allocation15 + $0x18] sm:$0xff]
    %v2439 = vld [vmem:[#allocation15 + $0x20] sm:$0xff]
    %v2440 = vld [vmem:[#allocation15 + $0x28] sm:$0xff]
    %v2441 = vld [vmem:[#allocation15 + $0x30] sm:$0xff]
    %v2442 = vld [vmem:[#allocation15 + $0x38] sm:$0xff]
    %v2443 = vld [vmem:[#allocation15 + $0x40] sm:$0xff]
    %v2444 = vld [vmem:[#allocation15 + $0x48] sm:$0xff]
    %v2445 = vld [vmem:[#allocation15 + $0x50] sm:$0xff]
    %v2446 = vld [vmem:[#allocation15 + $0x58] sm:$0xff]
    %v2447 = vld [vmem:[#allocation15 + $0x60] sm:$0xff]
    %v2448 = vld [vmem:[#allocation15 + $0x68] sm:$0xff]
    %v2449 = vld [vmem:[#allocation15 + $0x70] sm:$0xff]
    %v2450 = vld [vmem:[#allocation15 + $0x78] sm:$0xff]
    %v2451 = vld [vmem:[#allocation15 + $0x80] sm:$0xff]
    %v2452 = vld [vmem:[#allocation15 + $0x88] sm:$0xff]
    %v2453 = vld [vmem:[#allocation15 + $0x90] sm:$0xff]
    %v2454 = vld [vmem:[#allocation15 + $0x98] sm:$0xff]
    %v2455 = vld [vmem:[#allocation15 + $0xa0] sm:$0xff]
    %v2456 = vld [vmem:[#allocation15 + $0xa8] sm:$0xff]
    %v2457 = vld [vmem:[#allocation15 + $0xb0] sm:$0xff]
    %v2458 = vld [vmem:[#allocation15 + $0xb8] sm:$0xff]
    %v2459 = vld [vmem:[#allocation15 + $0xc0] sm:$0xff]
    %v2460 = vld [vmem:[#allocation15 + $0xc8] sm:$0xff]
    %v2461 = vld [vmem:[#allocation15 + $0xd0] sm:$0xff]
    %v2462 = vld [vmem:[#allocation15 + $0xd8] sm:$0xff]
    %v2463 = vld [vmem:[#allocation15 + $0xe0] sm:$0xff]
    %v2464 = vld [vmem:[#allocation15 + $0xe8] sm:$0xff]
    %v2465 = vld [vmem:[#allocation15 + $0xf0] sm:$0xff]
    %v2466 = vld [vmem:[#allocation15 + $0xf8] sm:$0xff]
    %v2467 = vld [vmem:[#allocation15 + $0x100] sm:$0xff]
    %v2468 = vld [vmem:[#allocation15 + $0x108] sm:$0xff]
    %v2469 = vld [vmem:[#allocation15 + $0x110] sm:$0xff]
    %v2470 = vld [vmem:[#allocation15 + $0x118] sm:$0xff]
    %v2471 = vld [vmem:[#allocation15 + $0x120] sm:$0xff]
    %v2472 = vld [vmem:[#allocation15 + $0x128] sm:$0xff]
    %v2473 = vld [vmem:[#allocation15 + $0x130] sm:$0xff]
    %v2474 = vld [vmem:[#allocation15 + $0x138] sm:$0xff]
    %v2475 = vld [vmem:[#allocation15 + $0x140] sm:$0xff]
    %v2476 = vld [vmem:[#allocation15 + $0x148] sm:$0xff]
    %v2477 = vld [vmem:[#allocation15 + $0x150] sm:$0xff]
    %v2478 = vld [vmem:[#allocation15 + $0x158] sm:$0xff]
    %v2479 = vld [vmem:[#allocation15 + $0x160] sm:$0xff]
    %v2480 = vld [vmem:[#allocation15 + $0x168] sm:$0xff]
    %v2481 = vld [vmem:[#allocation15 + $0x170] sm:$0xff]
    %v2482 = vld [vmem:[#allocation15 + $0x178] sm:$0xff]
    %v2483 = vld [vmem:[#allocation15 + $0x180] sm:$0xff]
    %v2484 = vld [vmem:[#allocation15 + $0x188] sm:$0xff]
    %v2485 = vld [vmem:[#allocation15 + $0x190] sm:$0xff]
    %v2486 = vld [vmem:[#allocation15 + $0x198] sm:$0xff]
    %v2487 = vld [vmem:[#allocation15 + $0x1a0] sm:$0xff]
    %v2488 = vld [vmem:[#allocation15 + $0x1a8] sm:$0xff]
    %v2489 = vld [vmem:[#allocation15 + $0x1b0] sm:$0xff]
    %v2490 = vld [vmem:[#allocation15 + $0x1b8] sm:$0xff]
    %v2491 = vld [vmem:[#allocation15 + $0x1c0] sm:$0xff]
    %v2492 = vld [vmem:[#allocation15 + $0x1c8] sm:$0xff]
    %v2493 = vld [vmem:[#allocation15 + $0x1d0] sm:$0xff]
    %v2494 = vld [vmem:[#allocation15 + $0x1d8] sm:$0xff]
    %v2495 = vld [vmem:[#allocation15 + $0x1e0] sm:$0xff]
    %v2496 = vld [vmem:[#allocation15 + $0x1e8] sm:$0xff]
    %v2497 = vld [vmem:[#allocation15 + $0x1f0] sm:$0xff]
    %v2498 = vld [vmem:[#allocation15 + $0x1f8] sm:$0xff]
    %v2499 = vld [vmem:[#allocation15 + $0x200] sm:$0xff]
    %v2500 = vld [vmem:[#allocation15 + $0x208] sm:$0xff]
    %v2501 = vld [vmem:[#allocation15 + $0x210] sm:$0xff]
    %v2502 = vld [vmem:[#allocation15 + $0x218] sm:$0xff]
    %v2503 = vld [vmem:[#allocation15 + $0x220] sm:$0xff]
    %v2504 = vld [vmem:[#allocation15 + $0x228] sm:$0xff]
    %v2505 = vld [vmem:[#allocation15 + $0x230] sm:$0xff]
    %v2506 = vld [vmem:[#allocation15 + $0x238] sm:$0xff]
    %v2507 = vld [vmem:[#allocation15 + $0x240] sm:$0xff]
    %v2508 = vld [vmem:[#allocation15 + $0x248] sm:$0xff]
    %v2509 = vld [vmem:[#allocation15 + $0x250] sm:$0xff]
    %v2510 = vld [vmem:[#allocation15 + $0x258] sm:$0xff]
    %v2511 = vld [vmem:[#allocation15 + $0x260] sm:$0xff]
    %v2512 = vld [vmem:[#allocation15 + $0x268] sm:$0xff]
    %v2513 = vld [vmem:[#allocation15 + $0x270] sm:$0xff]
    %v2514 = vld [vmem:[#allocation15 + $0x278] sm:$0xff]
    %v2515 = vld [vmem:[#allocation15 + $0x280] sm:$0xff]
    %v2516 = vld [vmem:[#allocation15 + $0x288] sm:$0xff]
    %v2517 = vld [vmem:[#allocation15 + $0x290] sm:$0xff]
    %v2518 = vld [vmem:[#allocation15 + $0x298] sm:$0xff]
    %v2519 = vld [vmem:[#allocation15 + $0x2a0] sm:$0xff]
    %v2520 = vld [vmem:[#allocation15 + $0x2a8] sm:$0xff]
    %v2521 = vld [vmem:[#allocation15 + $0x2b0] sm:$0xff]
    %v2522 = vld [vmem:[#allocation15 + $0x2b8] sm:$0xff]
    %v2523 = vld [vmem:[#allocation15 + $0x2c0] sm:$0xff]
    %v2524 = vld [vmem:[#allocation15 + $0x2c8] sm:$0xff]
    %v2525 = vld [vmem:[#allocation15 + $0x2d0] sm:$0xff]
    %v2526 = vld [vmem:[#allocation15 + $0x2d8] sm:$0xff]
    %v2527 = vld [vmem:[#allocation15 + $0x2e0] sm:$0xff]
    %v2528 = vld [vmem:[#allocation15 + $0x2e8] sm:$0xff]
    %v2529 = vld [vmem:[#allocation15 + $0x2f0] sm:$0xff]
    %v2530 = vld [vmem:[#allocation15 + $0x2f8] sm:$0xff]
    %v2531 = vld [vmem:[#allocation15 + $0x300] sm:$0xff]
    %v2532 = vld [vmem:[#allocation15 + $0x308] sm:$0xff]
    %v2533 = vld [vmem:[#allocation15 + $0x310] sm:$0xff]
    %v2534 = vld [vmem:[#allocation15 + $0x318] sm:$0xff]
    %v2535 = vld [vmem:[#allocation15 + $0x320] sm:$0xff]
    %v2536 = vld [vmem:[#allocation15 + $0x328] sm:$0xff]
    %v2537 = vld [vmem:[#allocation15 + $0x330] sm:$0xff]
    %v2538 = vld [vmem:[#allocation15 + $0x338] sm:$0xff]
    %v2539 = vld [vmem:[#allocation15 + $0x340] sm:$0xff]
    %v2540 = vld [vmem:[#allocation15 + $0x348] sm:$0xff]
    %v2541 = vld [vmem:[#allocation15 + $0x350] sm:$0xff]
    %v2542 = vld [vmem:[#allocation15 + $0x358] sm:$0xff]
    %v2543 = vld [vmem:[#allocation15 + $0x360] sm:$0xff]
    %v2544 = vld [vmem:[#allocation15 + $0x368] sm:$0xff]
    %v2545 = vld [vmem:[#allocation15 + $0x370] sm:$0xff]
    %v2546 = vld [vmem:[#allocation15 + $0x378] sm:$0xff]
    %v2547 = vld [vmem:[#allocation15 + $0x380] sm:$0xff]
    %v2548 = vld [vmem:[#allocation15 + $0x388] sm:$0xff]
    %v2549 = vld [vmem:[#allocation15 + $0x390] sm:$0xff]
    %v2550 = vld [vmem:[#allocation15 + $0x398] sm:$0xff]
    %v2551 = vld [vmem:[#allocation15 + $0x3a0] sm:$0xff]
    %v2552 = vld [vmem:[#allocation15 + $0x3a8] sm:$0xff]
    %v2553 = vld [vmem:[#allocation15 + $0x3b0] sm:$0xff]
    %v2554 = vld [vmem:[#allocation15 + $0x3b8] sm:$0xff]
    %v2555 = vld [vmem:[#allocation15 + $0x3c0] sm:$0xff]
    %v2556 = vld [vmem:[#allocation15 + $0x3c8] sm:$0xff]
    %v2557 = vld [vmem:[#allocation15 + $0x3d0] sm:$0xff]
    %v2558 = vld [vmem:[#allocation15 + $0x3d8] sm:$0xff]
    %v2559 = vld [vmem:[#allocation15 + $0x3e0] sm:$0xff]
    %v2560 = vld [vmem:[#allocation15 + $0x3e8] sm:$0xff]
    %v2561 = vld [vmem:[#allocation15 + $0x3f0] sm:$0xff]
    %v2562 = vld [vmem:[#allocation15 + $0x3f8] sm:$0xff]
    %v2563 = vld [vmem:[%s11] sm:$0xf]
    %v2565 = vlaneseq
    %v2566 = vshrl.u32 %v2565, 7
    %v2567 = vsub.s32 0, %v2566
    %v2568 = vrot.slane %v2563, %v2567
    %v2569 = vlaneseq
    %v2570 = vshrl.u32 %v2569, 7
    %v2571 = vsub.s32 1, %v2570
    %v2572 = vrot.slane %v2563, %v2571
    %v2573 = vlaneseq
    %v2574 = vshrl.u32 %v2573, 7
    %v2575 = vsub.s32 2, %v2574
    %v2576 = vrot.slane %v2563, %v2575
    %v2577 = vlaneseq
    %v2578 = vshrl.u32 %v2577, 7
    %v2579 = vsub.s32 3, %v2578
    %v2580 = vrot.slane %v2563, %v2579
    %2585 = vmatprep.subr.mxu0 %v2436
    %2586 = vmatpush1.msra.mxu0 %v2435
    %2587 = vmatprep.subr.mxu0 %v2440
    %2588 = vmatpush1.msra.mxu0 %v2439
    %2589 = vmatprep.subr.mxu0 %v2444
    %2590 = vmatpush1.msra.mxu0 %v2443
    %2591 = vmatprep.subr.mxu0 %v2448
    %2592 = vmatpush1.msra.mxu0 %v2447
    %2593 = vmatprep.subr.mxu0 %v2452
    %2594 = vmatpush1.msra.mxu0 %v2451
    %2595 = vmatprep.subr.mxu0 %v2456
    %2596 = vmatpush1.msra.mxu0 %v2455
    %2597 = vmatprep.subr.mxu0 %v2460
    %2598 = vmatpush1.msra.mxu0 %v2459
    %2599 = vmatprep.subr.mxu0 %v2464
    %2600 = vmatpush1.msra.mxu0 %v2463
    %2601 = vmatprep.subr.mxu0 %v2468
    %2602 = vmatpush1.msra.mxu0 %v2467
    %2603 = vmatprep.subr.mxu0 %v2472
    %2604 = vmatpush1.msra.mxu0 %v2471
    %2605 = vmatprep.subr.mxu0 %v2476
    %2606 = vmatpush1.msra.mxu0 %v2475
    %2607 = vmatprep.subr.mxu0 %v2480
    %2608 = vmatpush1.msra.mxu0 %v2479
    %2609 = vmatprep.subr.mxu0 %v2484
    %2610 = vmatpush1.msra.mxu0 %v2483
    %2611 = vmatprep.subr.mxu0 %v2488
    %2612 = vmatpush1.msra.mxu0 %v2487
    %2613 = vmatprep.subr.mxu0 %v2492
    %2614 = vmatpush1.msra.mxu0 %v2491
    %2615 = vmatprep.subr.mxu0 %v2496
    %2616 = vmatpush1.msra.mxu0 %v2495
    %2617 = vmatprep.subr.mxu0 %v2500
    %2618 = vmatpush1.msra.mxu0 %v2499
    %2619 = vmatprep.subr.mxu0 %v2504
    %2620 = vmatpush1.msra.mxu0 %v2503
    %2621 = vmatprep.subr.mxu0 %v2508
    %2622 = vmatpush1.msra.mxu0 %v2507
    %2623 = vmatprep.subr.mxu0 %v2512
    %2624 = vmatpush1.msra.mxu0 %v2511
    %2625 = vmatprep.subr.mxu0 %v2516
    %2626 = vmatpush1.msra.mxu0 %v2515
    %2627 = vmatprep.subr.mxu0 %v2520
    %2628 = vmatpush1.msra.mxu0 %v2519
    %2629 = vmatprep.subr.mxu0 %v2524
    %2630 = vmatpush1.msra.mxu0 %v2523
    %2631 = vmatprep.subr.mxu0 %v2528
    %2632 = vmatpush1.msra.mxu0 %v2527
    %2633 = vmatprep.subr.mxu0 %v2532
    %2634 = vmatpush1.msra.mxu0 %v2531
    %2635 = vmatprep.subr.mxu0 %v2536
    %2636 = vmatpush1.msra.mxu0 %v2535
    %2637 = vmatprep.subr.mxu0 %v2540
    %2638 = vmatpush1.msra.mxu0 %v2539
    %2639 = vmatprep.subr.mxu0 %v2544
    %2640 = vmatpush1.msra.mxu0 %v2543
    %2641 = vmatprep.subr.mxu0 %v2548
    %2642 = vmatpush1.msra.mxu0 %v2547
    %2643 = vmatprep.subr.mxu0 %v2552
    %2644 = vmatpush1.msra.mxu0 %v2551
    %2645 = vmatprep.subr.mxu0 %v2556
    %2646 = vmatpush1.msra.mxu0 %v2555
    %2647 = vmatprep.subr.mxu0 %v2560
    %2648 = vmatpush1.msra.mxu0 %v2559
    %2649 = vmatprep.mubr.f32.mxu0 %v2434
    %2650 = vmatmul.mubr.f32.gmra.mrb[0].mxu0 %v2433
    %v2651 = vpop.f32.mrb[0].mxu0
    %v2652 = vadd.f32 %v2568, %v2651
    %v2653 = vpop.f32.mrb[0].mxu0
    %v2654 = vadd.f32 %v2572, %v2653
    %2655 = vdwg.mxu0
    %2656 = vmatprep.subr.mxu0 %v2438
    %2657 = vmatpush1.msra.mxu0 %v2437
    %2658 = vmatprep.subr.mxu0 %v2442
    %2659 = vmatpush1.msra.mxu0 %v2441
    %2660 = vmatprep.subr.mxu0 %v2446
    %2661 = vmatpush1.msra.mxu0 %v2445
    %2662 = vmatprep.subr.mxu0 %v2450
    %2663 = vmatpush1.msra.mxu0 %v2449
    %2664 = vmatprep.subr.mxu0 %v2454
    %2665 = vmatpush1.msra.mxu0 %v2453
    %2666 = vmatprep.subr.mxu0 %v2458
    %2667 = vmatpush1.msra.mxu0 %v2457
    %2668 = vmatprep.subr.mxu0 %v2462
    %2669 = vmatpush1.msra.mxu0 %v2461
    %2670 = vmatprep.subr.mxu0 %v2466
    %2671 = vmatpush1.msra.mxu0 %v2465
    %2672 = vmatprep.subr.mxu0 %v2470
    %2673 = vmatpush1.msra.mxu0 %v2469
    %2674 = vmatprep.subr.mxu0 %v2474
    %2675 = vmatpush1.msra.mxu0 %v2473
    %2676 = vmatprep.subr.mxu0 %v2478
    %2677 = vmatpush1.msra.mxu0 %v2477
    %2678 = vmatprep.subr.mxu0 %v2482
    %2679 = vmatpush1.msra.mxu0 %v2481
    %2680 = vmatprep.subr.mxu0 %v2486
    %2681 = vmatpush1.msra.mxu0 %v2485
    %2682 = vmatprep.subr.mxu0 %v2490
    %2683 = vmatpush1.msra.mxu0 %v2489
    %2684 = vmatprep.subr.mxu0 %v2494
    %2685 = vmatpush1.msra.mxu0 %v2493
    %2686 = vmatprep.subr.mxu0 %v2498
    %2687 = vmatpush1.msra.mxu0 %v2497
    %2688 = vmatprep.subr.mxu0 %v2502
    %2689 = vmatpush1.msra.mxu0 %v2501
    %2690 = vmatprep.subr.mxu0 %v2506
    %2691 = vmatpush1.msra.mxu0 %v2505
    %2692 = vmatprep.subr.mxu0 %v2510
    %2693 = vmatpush1.msra.mxu0 %v2509
    %2694 = vmatprep.subr.mxu0 %v2514
    %2695 = vmatpush1.msra.mxu0 %v2513
    %2696 = vmatprep.subr.mxu0 %v2518
    %2697 = vmatpush1.msra.mxu0 %v2517
    %2698 = vmatprep.subr.mxu0 %v2522
    %2699 = vmatpush1.msra.mxu0 %v2521
    %2700 = vmatprep.subr.mxu0 %v2526
    %2701 = vmatpush1.msra.mxu0 %v2525
    %2702 = vmatprep.subr.mxu0 %v2530
    %2703 = vmatpush1.msra.mxu0 %v2529
    %2704 = vmatprep.subr.mxu0 %v2534
    %2705 = vmatpush1.msra.mxu0 %v2533
    %2706 = vmatprep.subr.mxu0 %v2538
    %2707 = vmatpush1.msra.mxu0 %v2537
    %2708 = vmatprep.subr.mxu0 %v2542
    %2709 = vmatpush1.msra.mxu0 %v2541
    %2710 = vmatprep.subr.mxu0 %v2546
    %2711 = vmatpush1.msra.mxu0 %v2545
    %2712 = vmatprep.subr.mxu0 %v2550
    %2713 = vmatpush1.msra.mxu0 %v2549
    %2714 = vmatprep.subr.mxu0 %v2554
    %2715 = vmatpush1.msra.mxu0 %v2553
    %2716 = vmatprep.subr.mxu0 %v2558
    %2717 = vmatpush1.msra.mxu0 %v2557
    %2718 = vmatprep.subr.mxu0 %v2562
    %2719 = vmatpush1.msra.mxu0 %v2561
    %2720 = vmatprep.mubr.f32.mxu0 %v2434
    %2721 = vmatmul.mubr.f32.gmra.mrb[0].mxu0 %v2433
    %v2722 = vpop.f32.mrb[0].mxu0
    %v2723 = vadd.f32 %v2576, %v2722
    %v2724 = vpop.f32.mrb[0].mxu0
    %v2725 = vadd.f32 %v2580, %v2724
    %2726 = vdwg.mxu0
    %v2727 = vmul.f32 %v2652, 0.5
    %v2728 = vmul.f32 %v2654, 0.5
    %v2729 = vmul.f32 %v2723, 0.5
    %v2730 = vmul.f32 %v2725, 0.5
    %v2731 = vtanh.pop %v2727
    %v2732 = vtanh.pop %v2728
    %v2733 = vtanh.pop %v2729
    %v2734 = vtanh.pop %v2730
    %v2735 = vmul.f32 %v2731, 0.5
    %v2736 = vmul.f32 %v2732, 0.5
    %v2737 = vmul.f32 %v2733, 0.5
    %v2738 = vmul.f32 %v2734, 0.5
    %v2739 = vadd.f32 %v2735, 0.5
    %v2740 = vadd.f32 %v2736, 0.5
    %v2741 = vadd.f32 %v2737, 0.5
    %v2742 = vadd.f32 %v2738, 0.5
    %v2743 = vmul.f32 %v2652, %v2739
    %v2744 = vmul.f32 %v2654, %v2740
    %v2745 = vmul.f32 %v2723, %v2741
    %v2746 = vmul.f32 %v2725, %v2742
    %v2747 = vld [vmem:[#allocation16] sm:$0xff]
    %v2748 = vld [vmem:[#allocation16 + $0x8] sm:$0xff]
    %v2749 = vld [vmem:[#allocation16 + $0x10] sm:$0xff]
    %v2750 = vld [vmem:[#allocation16 + $0x18] sm:$0xff]
    %v2751 = vld [vmem:[#allocation16 + $0x20] sm:$0xff]
    %v2752 = vld [vmem:[#allocation16 + $0x28] sm:$0xff]
    %v2753 = vld [vmem:[#allocation16 + $0x30] sm:$0xff]
    %v2754 = vld [vmem:[#allocation16 + $0x38] sm:$0xff]
    %v2755 = vld [vmem:[#allocation16 + $0x40] sm:$0xff]
    %v2756 = vld [vmem:[#allocation16 + $0x48] sm:$0xff]
    %v2757 = vld [vmem:[#allocation16 + $0x50] sm:$0xff]
    %v2758 = vld [vmem:[#allocation16 + $0x58] sm:$0xff]
    %v2759 = vld [vmem:[#allocation16 + $0x60] sm:$0xff]
    %v2760 = vld [vmem:[#allocation16 + $0x68] sm:$0xff]
    %v2761 = vld [vmem:[#allocation16 + $0x70] sm:$0xff]
    %v2762 = vld [vmem:[#allocation16 + $0x78] sm:$0xff]
    %v2763 = vld [vmem:[#allocation16 + $0x80] sm:$0xff]
    %v2764 = vld [vmem:[#allocation16 + $0x88] sm:$0xff]
    %v2765 = vld [vmem:[#allocation16 + $0x90] sm:$0xff]
    %v2766 = vld [vmem:[#allocation16 + $0x98] sm:$0xff]
    %v2767 = vld [vmem:[#allocation16 + $0xa0] sm:$0xff]
    %v2768 = vld [vmem:[#allocation16 + $0xa8] sm:$0xff]
    %v2769 = vld [vmem:[#allocation16 + $0xb0] sm:$0xff]
    %v2770 = vld [vmem:[#allocation16 + $0xb8] sm:$0xff]
    %v2771 = vld [vmem:[#allocation16 + $0xc0] sm:$0xff]
    %v2772 = vld [vmem:[#allocation16 + $0xc8] sm:$0xff]
    %v2773 = vld [vmem:[#allocation16 + $0xd0] sm:$0xff]
    %v2774 = vld [vmem:[#allocation16 + $0xd8] sm:$0xff]
    %v2775 = vld [vmem:[#allocation16 + $0xe0] sm:$0xff]
    %v2776 = vld [vmem:[#allocation16 + $0xe8] sm:$0xff]
    %v2777 = vld [vmem:[#allocation16 + $0xf0] sm:$0xff]
    %v2778 = vld [vmem:[#allocation16 + $0xf8] sm:$0xff]
    %v2779 = vld [vmem:[#allocation16 + $0x100] sm:$0xff]
    %v2780 = vld [vmem:[#allocation16 + $0x108] sm:$0xff]
    %v2781 = vld [vmem:[#allocation16 + $0x110] sm:$0xff]
    %v2782 = vld [vmem:[#allocation16 + $0x118] sm:$0xff]
    %v2783 = vld [vmem:[#allocation16 + $0x120] sm:$0xff]
    %v2784 = vld [vmem:[#allocation16 + $0x128] sm:$0xff]
    %v2785 = vld [vmem:[#allocation16 + $0x130] sm:$0xff]
    %v2786 = vld [vmem:[#allocation16 + $0x138] sm:$0xff]
    %v2787 = vld [vmem:[#allocation16 + $0x140] sm:$0xff]
    %v2788 = vld [vmem:[#allocation16 + $0x148] sm:$0xff]
    %v2789 = vld [vmem:[#allocation16 + $0x150] sm:$0xff]
    %v2790 = vld [vmem:[#allocation16 + $0x158] sm:$0xff]
    %v2791 = vld [vmem:[#allocation16 + $0x160] sm:$0xff]
    %v2792 = vld [vmem:[#allocation16 + $0x168] sm:$0xff]
    %v2793 = vld [vmem:[#allocation16 + $0x170] sm:$0xff]
    %v2794 = vld [vmem:[#allocation16 + $0x178] sm:$0xff]
    %v2795 = vld [vmem:[#allocation16 + $0x180] sm:$0xff]
    %v2796 = vld [vmem:[#allocation16 + $0x188] sm:$0xff]
    %v2797 = vld [vmem:[#allocation16 + $0x190] sm:$0xff]
    %v2798 = vld [vmem:[#allocation16 + $0x198] sm:$0xff]
    %v2799 = vld [vmem:[#allocation16 + $0x1a0] sm:$0xff]
    %v2800 = vld [vmem:[#allocation16 + $0x1a8] sm:$0xff]
    %v2801 = vld [vmem:[#allocation16 + $0x1b0] sm:$0xff]
    %v2802 = vld [vmem:[#allocation16 + $0x1b8] sm:$0xff]
    %v2803 = vld [vmem:[#allocation16 + $0x1c0] sm:$0xff]
    %v2804 = vld [vmem:[#allocation16 + $0x1c8] sm:$0xff]
    %v2805 = vld [vmem:[#allocation16 + $0x1d0] sm:$0xff]
    %v2806 = vld [vmem:[#allocation16 + $0x1d8] sm:$0xff]
    %v2807 = vld [vmem:[#allocation16 + $0x1e0] sm:$0xff]
    %v2808 = vld [vmem:[#allocation16 + $0x1e8] sm:$0xff]
    %v2809 = vld [vmem:[#allocation16 + $0x1f0] sm:$0xff]
    %v2810 = vld [vmem:[#allocation16 + $0x1f8] sm:$0xff]
    %v2811 = vld [vmem:[%s13] sm:$0x3]
    %v2813 = vlaneseq
    %v2814 = vshrl.u32 %v2813, 7
    %v2815 = vsub.s32 0, %v2814
    %v2816 = vrot.slane %v2811, %v2815
    %v2817 = vlaneseq
    %v2818 = vshrl.u32 %v2817, 7
    %v2819 = vsub.s32 1, %v2818
    %v2820 = vrot.slane %v2811, %v2819
    %2823 = vmatprep.subr.mxu0 %v2748
    %2824 = vmatpush1.msra.mxu0 %v2747
    %2825 = vmatprep.subr.mxu0 %v2750
    %2826 = vmatpush1.msra.mxu0 %v2749
    %2827 = vmatprep.subr.mxu0 %v2752
    %2828 = vmatpush1.msra.mxu0 %v2751
    %2829 = vmatprep.subr.mxu0 %v2754
    %2830 = vmatpush1.msra.mxu0 %v2753
    %2831 = vmatprep.subr.mxu0 %v2756
    %2832 = vmatpush1.msra.mxu0 %v2755
    %2833 = vmatprep.subr.mxu0 %v2758
    %2834 = vmatpush1.msra.mxu0 %v2757
    %2835 = vmatprep.subr.mxu0 %v2760
    %2836 = vmatpush1.msra.mxu0 %v2759
    %2837 = vmatprep.subr.mxu0 %v2762
    %2838 = vmatpush1.msra.mxu0 %v2761
    %2839 = vmatprep.subr.mxu0 %v2764
    %2840 = vmatpush1.msra.mxu0 %v2763
    %2841 = vmatprep.subr.mxu0 %v2766
    %2842 = vmatpush1.msra.mxu0 %v2765
    %2843 = vmatprep.subr.mxu0 %v2768
    %2844 = vmatpush1.msra.mxu0 %v2767
    %2845 = vmatprep.subr.mxu0 %v2770
    %2846 = vmatpush1.msra.mxu0 %v2769
    %2847 = vmatprep.subr.mxu0 %v2772
    %2848 = vmatpush1.msra.mxu0 %v2771
    %2849 = vmatprep.subr.mxu0 %v2774
    %2850 = vmatpush1.msra.mxu0 %v2773
    %2851 = vmatprep.subr.mxu0 %v2776
    %2852 = vmatpush1.msra.mxu0 %v2775
    %2853 = vmatprep.subr.mxu0 %v2778
    %2854 = vmatpush1.msra.mxu0 %v2777
    %2855 = vmatprep.subr.mxu0 %v2780
    %2856 = vmatpush1.msra.mxu0 %v2779
    %2857 = vmatprep.subr.mxu0 %v2782
    %2858 = vmatpush1.msra.mxu0 %v2781
    %2859 = vmatprep.subr.mxu0 %v2784
    %2860 = vmatpush1.msra.mxu0 %v2783
    %2861 = vmatprep.subr.mxu0 %v2786
    %2862 = vmatpush1.msra.mxu0 %v2785
    %2863 = vmatprep.subr.mxu0 %v2788
    %2864 = vmatpush1.msra.mxu0 %v2787
    %2865 = vmatprep.subr.mxu0 %v2790
    %2866 = vmatpush1.msra.mxu0 %v2789
    %2867 = vmatprep.subr.mxu0 %v2792
    %2868 = vmatpush1.msra.mxu0 %v2791
    %2869 = vmatprep.subr.mxu0 %v2794
    %2870 = vmatpush1.msra.mxu0 %v2793
    %2871 = vmatprep.subr.mxu0 %v2796
    %2872 = vmatpush1.msra.mxu0 %v2795
    %2873 = vmatprep.subr.mxu0 %v2798
    %2874 = vmatpush1.msra.mxu0 %v2797
    %2875 = vmatprep.subr.mxu0 %v2800
    %2876 = vmatpush1.msra.mxu0 %v2799
    %2877 = vmatprep.subr.mxu0 %v2802
    %2878 = vmatpush1.msra.mxu0 %v2801
    %2879 = vmatprep.subr.mxu0 %v2804
    %2880 = vmatpush1.msra.mxu0 %v2803
    %2881 = vmatprep.subr.mxu0 %v2806
    %2882 = vmatpush1.msra.mxu0 %v2805
    %2883 = vmatprep.subr.mxu0 %v2808
    %2884 = vmatpush1.msra.mxu0 %v2807
    %2885 = vmatprep.subr.mxu0 %v2810
    %2886 = vmatpush1.msra.mxu0 %v2809
    %2887 = vmatprep.mubr.f32.mxu0 %v2744
    %2888 = vmatmul.mubr.f32.gmra.mrb[0].mxu0 %v2743
    %v2889 = vpop.f32.mrb[0].mxu0
    %v2890 = vadd.f32 %v2816, %v2889
    %v2891 = vpop.f32.mrb[0].mxu0
    %v2892 = vadd.f32 %v2820, %v2891
    %2893 = vdwg.mxu0
    %v2894 = vmul.f32 %v2890, 0.5
    %v2895 = vmul.f32 %v2892, 0.5
    %v2896 = vtanh.pop %v2894
    %v2897 = vtanh.pop %v2895
    %v2898 = vmul.f32 %v2896, 0.5
    %v2899 = vmul.f32 %v2897, 0.5
    %v2900 = vadd.f32 %v2898, 0.5
    %v2901 = vadd.f32 %v2899, 0.5
    %v2902 = vmul.f32 %v2890, %v2900
    %v2903 = vmul.f32 %v2892, %v2901
    %v2904 = vld [vmem:[#allocation18] sm:$0xff]
    %v2905 = vld [vmem:[#allocation18 + $0x8] sm:$0xff]
    %v2906 = vld [vmem:[#allocation18 + $0x10] sm:$0xff]
    %v2907 = vld [vmem:[#allocation18 + $0x18] sm:$0xff]
    %v2908 = vld [vmem:[#allocation18 + $0x20] sm:$0xff]
    %v2909 = vld [vmem:[#allocation18 + $0x28] sm:$0xff]
    %v2910 = vld [vmem:[#allocation18 + $0x30] sm:$0xff]
    %v2911 = vld [vmem:[#allocation18 + $0x38] sm:$0xff]
    %v2912 = vld [vmem:[#allocation18 + $0x40] sm:$0xff]
    %v2913 = vld [vmem:[#allocation18 + $0x48] sm:$0xff]
    %v2914 = vld [vmem:[#allocation18 + $0x50] sm:$0xff]
    %v2915 = vld [vmem:[#allocation18 + $0x58] sm:$0xff]
    %v2916 = vld [vmem:[#allocation18 + $0x60] sm:$0xff]
    %v2917 = vld [vmem:[#allocation18 + $0x68] sm:$0xff]
    %v2918 = vld [vmem:[#allocation18 + $0x70] sm:$0xff]
    %v2919 = vld [vmem:[#allocation18 + $0x78] sm:$0xff]
    %v2920 = vld [vmem:[#allocation18 + $0x80] sm:$0xff]
    %v2921 = vld [vmem:[#allocation18 + $0x88] sm:$0xff]
    %v2922 = vld [vmem:[#allocation18 + $0x90] sm:$0xff]
    %v2923 = vld [vmem:[#allocation18 + $0x98] sm:$0xff]
    %v2924 = vld [vmem:[#allocation18 + $0xa0] sm:$0xff]
    %v2925 = vld [vmem:[#allocation18 + $0xa8] sm:$0xff]
    %v2926 = vld [vmem:[#allocation18 + $0xb0] sm:$0xff]
    %v2927 = vld [vmem:[#allocation18 + $0xb8] sm:$0xff]
    %v2928 = vld [vmem:[#allocation18 + $0xc0] sm:$0xff]
    %v2929 = vld [vmem:[#allocation18 + $0xc8] sm:$0xff]
    %v2930 = vld [vmem:[#allocation18 + $0xd0] sm:$0xff]
    %v2931 = vld [vmem:[#allocation18 + $0xd8] sm:$0xff]
    %v2932 = vld [vmem:[#allocation18 + $0xe0] sm:$0xff]
    %v2933 = vld [vmem:[#allocation18 + $0xe8] sm:$0xff]
    %v2934 = vld [vmem:[#allocation18 + $0xf0] sm:$0xff]
    %v2935 = vld [vmem:[#allocation18 + $0xf8] sm:$0xff]
    %v2936 = vld [vmem:[#allocation18 + $0x100] sm:$0xff]
    %v2937 = vld [vmem:[#allocation18 + $0x108] sm:$0xff]
    %v2938 = vld [vmem:[#allocation18 + $0x110] sm:$0xff]
    %v2939 = vld [vmem:[#allocation18 + $0x118] sm:$0xff]
    %v2940 = vld [vmem:[#allocation18 + $0x120] sm:$0xff]
    %v2941 = vld [vmem:[#allocation18 + $0x128] sm:$0xff]
    %v2942 = vld [vmem:[#allocation18 + $0x130] sm:$0xff]
    %v2943 = vld [vmem:[#allocation18 + $0x138] sm:$0xff]
    %v2944 = vld [vmem:[#allocation18 + $0x140] sm:$0xff]
    %v2945 = vld [vmem:[#allocation18 + $0x148] sm:$0xff]
    %v2946 = vld [vmem:[#allocation18 + $0x150] sm:$0xff]
    %v2947 = vld [vmem:[#allocation18 + $0x158] sm:$0xff]
    %v2948 = vld [vmem:[#allocation18 + $0x160] sm:$0xff]
    %v2949 = vld [vmem:[#allocation18 + $0x168] sm:$0xff]
    %v2950 = vld [vmem:[#allocation18 + $0x170] sm:$0xff]
    %v2951 = vld [vmem:[#allocation18 + $0x178] sm:$0xff]
    %v2952 = vld [vmem:[#allocation18 + $0x180] sm:$0xff]
    %v2953 = vld [vmem:[#allocation18 + $0x188] sm:$0xff]
    %v2954 = vld [vmem:[#allocation18 + $0x190] sm:$0xff]
    %v2955 = vld [vmem:[#allocation18 + $0x198] sm:$0xff]
    %v2956 = vld [vmem:[#allocation18 + $0x1a0] sm:$0xff]
    %v2957 = vld [vmem:[#allocation18 + $0x1a8] sm:$0xff]
    %v2958 = vld [vmem:[#allocation18 + $0x1b0] sm:$0xff]
    %v2959 = vld [vmem:[#allocation18 + $0x1b8] sm:$0xff]
    %v2960 = vld [vmem:[#allocation18 + $0x1c0] sm:$0xff]
    %v2961 = vld [vmem:[#allocation18 + $0x1c8] sm:$0xff]
    %v2962 = vld [vmem:[#allocation18 + $0x1d0] sm:$0xff]
    %v2963 = vld [vmem:[#allocation18 + $0x1d8] sm:$0xff]
    %v2964 = vld [vmem:[#allocation18 + $0x1e0] sm:$0xff]
    %v2965 = vld [vmem:[#allocation18 + $0x1e8] sm:$0xff]
    %v2966 = vld [vmem:[#allocation18 + $0x1f0] sm:$0xff]
    %v2967 = vld [vmem:[#allocation18 + $0x1f8] sm:$0xff]
    %v2968 = vld [vmem:[%s15] sm:$0x3]
    %v2970 = vlaneseq
    %v2971 = vshrl.u32 %v2970, 7
    %v2972 = vsub.s32 0, %v2971
    %v2973 = vrot.slane %v2968, %v2972
    %v2974 = vlaneseq
    %v2975 = vshrl.u32 %v2974, 7
    %v2976 = vsub.s32 1, %v2975
    %v2977 = vrot.slane %v2968, %v2976
    %2980 = vmatprep.subr.mxu0 %v2905
    %2981 = vmatpush1.msra.mxu0 %v2904
    %2982 = vmatprep.subr.mxu0 %v2907
    %2983 = vmatpush1.msra.mxu0 %v2906
    %2984 = vmatprep.subr.mxu0 %v2909
    %2985 = vmatpush1.msra.mxu0 %v2908
    %2986 = vmatprep.subr.mxu0 %v2911
    %2987 = vmatpush1.msra.mxu0 %v2910
    %2988 = vmatprep.subr.mxu0 %v2913
    %2989 = vmatpush1.msra.mxu0 %v2912
    %2990 = vmatprep.subr.mxu0 %v2915
    %2991 = vmatpush1.msra.mxu0 %v2914
    %2992 = vmatprep.subr.mxu0 %v2917
    %2993 = vmatpush1.msra.mxu0 %v2916
    %2994 = vmatprep.subr.mxu0 %v2919
    %2995 = vmatpush1.msra.mxu0 %v2918
    %2996 = vmatprep.subr.mxu0 %v2921
    %2997 = vmatpush1.msra.mxu0 %v2920
    %2998 = vmatprep.subr.mxu0 %v2923
    %2999 = vmatpush1.msra.mxu0 %v2922
    %3000 = vmatprep.subr.mxu0 %v2925
    %3001 = vmatpush1.msra.mxu0 %v2924
    %3002 = vmatprep.subr.mxu0 %v2927
    %3003 = vmatpush1.msra.mxu0 %v2926
    %3004 = vmatprep.subr.mxu0 %v2929
    %3005 = vmatpush1.msra.mxu0 %v2928
    %3006 = vmatprep.subr.mxu0 %v2931
    %3007 = vmatpush1.msra.mxu0 %v2930
    %3008 = vmatprep.subr.mxu0 %v2933
    %3009 = vmatpush1.msra.mxu0 %v2932
    %3010 = vmatprep.subr.mxu0 %v2935
    %3011 = vmatpush1.msra.mxu0 %v2934
    %3012 = vmatprep.subr.mxu0 %v2937
    %3013 = vmatpush1.msra.mxu0 %v2936
    %3014 = vmatprep.subr.mxu0 %v2939
    %3015 = vmatpush1.msra.mxu0 %v2938
    %3016 = vmatprep.subr.mxu0 %v2941
    %3017 = vmatpush1.msra.mxu0 %v2940
    %3018 = vmatprep.subr.mxu0 %v2943
    %3019 = vmatpush1.msra.mxu0 %v2942
    %3020 = vmatprep.subr.mxu0 %v2945
    %3021 = vmatpush1.msra.mxu0 %v2944
    %3022 = vmatprep.subr.mxu0 %v2947
    %3023 = vmatpush1.msra.mxu0 %v2946
    %3024 = vmatprep.subr.mxu0 %v2949
    %3025 = vmatpush1.msra.mxu0 %v2948
    %3026 = vmatprep.subr.mxu0 %v2951
    %3027 = vmatpush1.msra.mxu0 %v2950
    %3028 = vmatprep.subr.mxu0 %v2953
    %3029 = vmatpush1.msra.mxu0 %v2952
    %3030 = vmatprep.subr.mxu0 %v2955
    %3031 = vmatpush1.msra.mxu0 %v2954
    %3032 = vmatprep.subr.mxu0 %v2957
    %3033 = vmatpush1.msra.mxu0 %v2956
    %3034 = vmatprep.subr.mxu0 %v2959
    %3035 = vmatpush1.msra.mxu0 %v2958
    %3036 = vmatprep.subr.mxu0 %v2961
    %3037 = vmatpush1.msra.mxu0 %v2960
    %3038 = vmatprep.subr.mxu0 %v2963
    %3039 = vmatpush1.msra.mxu0 %v2962
    %3040 = vmatprep.subr.mxu0 %v2965
    %3041 = vmatpush1.msra.mxu0 %v2964
    %3042 = vmatprep.subr.mxu0 %v2967
    %3043 = vmatpush1.msra.mxu0 %v2966
    %3044 = vmatprep.mubr.f32.mxu0 %v2746
    %3045 = vmatmul.mubr.f32.gmra.mrb[0].mxu0 %v2745
    %v3046 = vpop.f32.mrb[0].mxu0
    %v3047 = vadd.f32 %v2973, %v3046
    %v3048 = vpop.f32.mrb[0].mxu0
    %v3049 = vadd.f32 %v2977, %v3048
    %3050 = vdwg.mxu0
    %v3051 = vmul.f32 %v3047, 0.5
    %v3052 = vmul.f32 %v3049, 0.5
    %v3053 = vtanh.pop %v3051
    %v3054 = vtanh.pop %v3052
    %v3055 = vmul.f32 %v3053, 0.5
    %v3056 = vmul.f32 %v3054, 0.5
    %v3057 = vadd.f32 %v3055, 0.5
    %v3058 = vadd.f32 %v3056, 0.5
    %v3059 = vmul.f32 %v3047, %v3057
    %v3060 = vmul.f32 %v3049, %v3058
    %v3061 = vld [vmem:[#allocation19] sm:$0xff]
    %v3062 = vld [vmem:[#allocation19 + $0x8] sm:$0xff]
    %v3063 = vld [vmem:[#allocation19 + $0x10] sm:$0xff]
    %v3064 = vld [vmem:[#allocation19 + $0x18] sm:$0xff]
    %v3065 = vld [vmem:[#allocation19 + $0x20] sm:$0xff]
    %v3066 = vld [vmem:[#allocation19 + $0x28] sm:$0xff]
    %v3067 = vld [vmem:[#allocation19 + $0x30] sm:$0xff]
    %v3068 = vld [vmem:[#allocation19 + $0x38] sm:$0xff]
    %v3069 = vld [vmem:[#allocation19 + $0x40] sm:$0xff]
    %v3070 = vld [vmem:[#allocation19 + $0x48] sm:$0xff]
    %v3071 = vld [vmem:[#allocation19 + $0x50] sm:$0xff]
    %v3072 = vld [vmem:[#allocation19 + $0x58] sm:$0xff]
    %v3073 = vld [vmem:[#allocation19 + $0x60] sm:$0xff]
    %v3074 = vld [vmem:[#allocation19 + $0x68] sm:$0xff]
    %v3075 = vld [vmem:[#allocation19 + $0x70] sm:$0xff]
    %v3076 = vld [vmem:[#allocation19 + $0x78] sm:$0xff]
    %v3077 = vld [vmem:[#allocation19 + $0x80] sm:$0xff]
    %v3078 = vld [vmem:[#allocation19 + $0x88] sm:$0xff]
    %v3079 = vld [vmem:[#allocation19 + $0x90] sm:$0xff]
    %v3080 = vld [vmem:[#allocation19 + $0x98] sm:$0xff]
    %v3081 = vld [vmem:[#allocation19 + $0xa0] sm:$0xff]
    %v3082 = vld [vmem:[#allocation19 + $0xa8] sm:$0xff]
    %v3083 = vld [vmem:[#allocation19 + $0xb0] sm:$0xff]
    %v3084 = vld [vmem:[#allocation19 + $0xb8] sm:$0xff]
    %v3085 = vld [vmem:[#allocation19 + $0xc0] sm:$0xff]
    %v3086 = vld [vmem:[#allocation19 + $0xc8] sm:$0xff]
    %v3087 = vld [vmem:[#allocation19 + $0xd0] sm:$0xff]
    %v3088 = vld [vmem:[#allocation19 + $0xd8] sm:$0xff]
    %v3089 = vld [vmem:[#allocation19 + $0xe0] sm:$0xff]
    %v3090 = vld [vmem:[#allocation19 + $0xe8] sm:$0xff]
    %v3091 = vld [vmem:[#allocation19 + $0xf0] sm:$0xff]
    %v3092 = vld [vmem:[#allocation19 + $0xf8] sm:$0xff]
    %v3093 = vld [vmem:[#allocation21] sm:$0xff]
    %v3094 = vld [vmem:[#allocation21 + $0x8] sm:$0xff]
    %v3095 = vld [vmem:[#allocation21 + $0x10] sm:$0xff]
    %v3096 = vld [vmem:[#allocation21 + $0x18] sm:$0xff]
    %v3097 = vld [vmem:[#allocation21 + $0x20] sm:$0xff]
    %v3098 = vld [vmem:[#allocation21 + $0x28] sm:$0xff]
    %v3099 = vld [vmem:[#allocation21 + $0x30] sm:$0xff]
    %v3100 = vld [vmem:[#allocation21 + $0x38] sm:$0xff]
    %v3101 = vld [vmem:[#allocation21 + $0x40] sm:$0xff]
    %v3102 = vld [vmem:[#allocation21 + $0x48] sm:$0xff]
    %v3103 = vld [vmem:[#allocation21 + $0x50] sm:$0xff]
    %v3104 = vld [vmem:[#allocation21 + $0x58] sm:$0xff]
    %v3105 = vld [vmem:[#allocation21 + $0x60] sm:$0xff]
    %v3106 = vld [vmem:[#allocation21 + $0x68] sm:$0xff]
    %v3107 = vld [vmem:[#allocation21 + $0x70] sm:$0xff]
    %v3108 = vld [vmem:[#allocation21 + $0x78] sm:$0xff]
    %v3109 = vld [vmem:[#allocation21 + $0x80] sm:$0xff]
    %v3110 = vld [vmem:[#allocation21 + $0x88] sm:$0xff]
    %v3111 = vld [vmem:[#allocation21 + $0x90] sm:$0xff]
    %v3112 = vld [vmem:[#allocation21 + $0x98] sm:$0xff]
    %v3113 = vld [vmem:[#allocation21 + $0xa0] sm:$0xff]
    %v3114 = vld [vmem:[#allocation21 + $0xa8] sm:$0xff]
    %v3115 = vld [vmem:[#allocation21 + $0xb0] sm:$0xff]
    %v3116 = vld [vmem:[#allocation21 + $0xb8] sm:$0xff]
    %v3117 = vld [vmem:[#allocation21 + $0xc0] sm:$0xff]
    %v3118 = vld [vmem:[#allocation21 + $0xc8] sm:$0xff]
    %v3119 = vld [vmem:[#allocation21 + $0xd0] sm:$0xff]
    %v3120 = vld [vmem:[#allocation21 + $0xd8] sm:$0xff]
    %v3121 = vld [vmem:[#allocation21 + $0xe0] sm:$0xff]
    %v3122 = vld [vmem:[#allocation21 + $0xe8] sm:$0xff]
    %v3123 = vld [vmem:[#allocation21 + $0xf0] sm:$0xff]
    %v3124 = vld [vmem:[#allocation21 + $0xf8] sm:$0xff]
    %3125 = vmatprep.subr.mxu0 0.0
    %3126 = vmatpush1.msra.mxu0 %v3093
    %3127 = vmatprep.subr.mxu0 0.0
    %3128 = vmatpush1.msra.mxu0 %v3094
    %3129 = vmatprep.subr.mxu0 0.0
    %3130 = vmatpush1.msra.mxu0 %v3095
    %3131 = vmatprep.subr.mxu0 0.0
    %3132 = vmatpush1.msra.mxu0 %v3096
    %3133 = vmatprep.subr.mxu0 0.0
    %3134 = vmatpush1.msra.mxu0 %v3097
    %3135 = vmatprep.subr.mxu0 0.0
    %3136 = vmatpush1.msra.mxu0 %v3098
    %3137 = vmatprep.subr.mxu0 0.0
    %3138 = vmatpush1.msra.mxu0 %v3099
    %3139 = vmatprep.subr.mxu0 0.0
    %3140 = vmatpush1.msra.mxu0 %v3100
    %3141 = vmatprep.subr.mxu0 0.0
    %3142 = vmatpush1.msra.mxu0 %v3101
    %3143 = vmatprep.subr.mxu0 0.0
    %3144 = vmatpush1.msra.mxu0 %v3102
    %3145 = vmatprep.subr.mxu0 0.0
    %3146 = vmatpush1.msra.mxu0 %v3103
    %3147 = vmatprep.subr.mxu0 0.0
    %3148 = vmatpush1.msra.mxu0 %v3104
    %3149 = vmatprep.subr.mxu0 0.0
    %3150 = vmatpush1.msra.mxu0 %v3105
    %3151 = vmatprep.subr.mxu0 0.0
    %3152 = vmatpush1.msra.mxu0 %v3106
    %3153 = vmatprep.subr.mxu0 0.0
    %3154 = vmatpush1.msra.mxu0 %v3107
    %3155 = vmatprep.subr.mxu0 0.0
    %3156 = vmatpush1.msra.mxu0 %v3108
    %3157 = vmatprep.subr.mxu0 0.0
    %3158 = vmatpush1.msra.mxu0 %v3109
    %3159 = vmatprep.subr.mxu0 0.0
    %3160 = vmatpush1.msra.mxu0 %v3110
    %3161 = vmatprep.subr.mxu0 0.0
    %3162 = vmatpush1.msra.mxu0 %v3111
    %3163 = vmatprep.subr.mxu0 0.0
    %3164 = vmatpush1.msra.mxu0 %v3112
    %3165 = vmatprep.subr.mxu0 0.0
    %3166 = vmatpush1.msra.mxu0 %v3113
    %3167 = vmatprep.subr.mxu0 0.0
    %3168 = vmatpush1.msra.mxu0 %v3114
    %3169 = vmatprep.subr.mxu0 0.0
    %3170 = vmatpush1.msra.mxu0 %v3115
    %3171 = vmatprep.subr.mxu0 0.0
    %3172 = vmatpush1.msra.mxu0 %v3116
    %3173 = vmatprep.subr.mxu0 0.0
    %3174 = vmatpush1.msra.mxu0 %v3117
    %3175 = vmatprep.subr.mxu0 0.0
    %3176 = vmatpush1.msra.mxu0 %v3118
    %3177 = vmatprep.subr.mxu0 0.0
    %3178 = vmatpush1.msra.mxu0 %v3119
    %3179 = vmatprep.subr.mxu0 0.0
    %3180 = vmatpush1.msra.mxu0 %v3120
    %3181 = vmatprep.subr.mxu0 0.0
    %3182 = vmatpush1.msra.mxu0 %v3121
    %3183 = vmatprep.subr.mxu0 0.0
    %3184 = vmatpush1.msra.mxu0 %v3122
    %3185 = vmatprep.subr.mxu0 0.0
    %3186 = vmatpush1.msra.mxu0 %v3123
    %3187 = vmatprep.subr.mxu0 0.0
    %3188 = vmatpush1.msra.mxu0 %v3124
    %3189 = vmatprep.mubr.f32.mxu0 %v3060
    %3190 = vmatmul.mubr.f32.gmra.mrb[0].mxu0 %v3059
    %v3191 = vpop.f32.mrb[0].mxu0
    %v3192 = vadd.f32 0.0, %v3191
    %v3193 = vpop.f32.mrb[0].mxu0
    %3194 = vdwg.mxu0
    %3195 = vmatprep.subr.mxu0 0.0
    %3196 = vmatpush1.msra.mxu0 %v3061
    %3197 = vmatprep.subr.mxu0 0.0
    %3198 = vmatpush1.msra.mxu0 %v3062
    %3199 = vmatprep.subr.mxu0 0.0
    %3200 = vmatpush1.msra.mxu0 %v3063
    %3201 = vmatprep.subr.mxu0 0.0
    %3202 = vmatpush1.msra.mxu0 %v3064
    %3203 = vmatprep.subr.mxu0 0.0
    %3204 = vmatpush1.msra.mxu0 %v3065
    %3205 = vmatprep.subr.mxu0 0.0
    %3206 = vmatpush1.msra.mxu0 %v3066
    %3207 = vmatprep.subr.mxu0 0.0
    %3208 = vmatpush1.msra.mxu0 %v3067
    %3209 = vmatprep.subr.mxu0 0.0
    %3210 = vmatpush1.msra.mxu0 %v3068
    %3211 = vmatprep.subr.mxu0 0.0
    %3212 = vmatpush1.msra.mxu0 %v3069
    %3213 = vmatprep.subr.mxu0 0.0
    %3214 = vmatpush1.msra.mxu0 %v3070
    %3215 = vmatprep.subr.mxu0 0.0
    %3216 = vmatpush1.msra.mxu0 %v3071
    %3217 = vmatprep.subr.mxu0 0.0
    %3218 = vmatpush1.msra.mxu0 %v3072
    %3219 = vmatprep.subr.mxu0 0.0
    %3220 = vmatpush1.msra.mxu0 %v3073
    %3221 = vmatprep.subr.mxu0 0.0
    %3222 = vmatpush1.msra.mxu0 %v3074
    %3223 = vmatprep.subr.mxu0 0.0
    %3224 = vmatpush1.msra.mxu0 %v3075
    %3225 = vmatprep.subr.mxu0 0.0
    %3226 = vmatpush1.msra.mxu0 %v3076
    %3227 = vmatprep.subr.mxu0 0.0
    %3228 = vmatpush1.msra.mxu0 %v3077
    %3229 = vmatprep.subr.mxu0 0.0
    %3230 = vmatpush1.msra.mxu0 %v3078
    %3231 = vmatprep.subr.mxu0 0.0
    %3232 = vmatpush1.msra.mxu0 %v3079
    %3233 = vmatprep.subr.mxu0 0.0
    %3234 = vmatpush1.msra.mxu0 %v3080
    %3235 = vmatprep.subr.mxu0 0.0
    %3236 = vmatpush1.msra.mxu0 %v3081
    %3237 = vmatprep.subr.mxu0 0.0
    %3238 = vmatpush1.msra.mxu0 %v3082
    %3239 = vmatprep.subr.mxu0 0.0
    %3240 = vmatpush1.msra.mxu0 %v3083
    %3241 = vmatprep.subr.mxu0 0.0
    %3242 = vmatpush1.msra.mxu0 %v3084
    %3243 = vmatprep.subr.mxu0 0.0
    %3244 = vmatpush1.msra.mxu0 %v3085
    %3245 = vmatprep.subr.mxu0 0.0
    %3246 = vmatpush1.msra.mxu0 %v3086
    %3247 = vmatprep.subr.mxu0 0.0
    %3248 = vmatpush1.msra.mxu0 %v3087
    %3249 = vmatprep.subr.mxu0 0.0
    %3250 = vmatpush1.msra.mxu0 %v3088
    %3251 = vmatprep.subr.mxu0 0.0
    %3252 = vmatpush1.msra.mxu0 %v3089
    %3253 = vmatprep.subr.mxu0 0.0
    %3254 = vmatpush1.msra.mxu0 %v3090
    %3255 = vmatprep.subr.mxu0 0.0
    %3256 = vmatpush1.msra.mxu0 %v3091
    %3257 = vmatprep.subr.mxu0 0.0
    %3258 = vmatpush1.msra.mxu0 %v3092
    %3259 = vmatprep.mubr.f32.mxu0 %v2903
    %3260 = vmatmul.mubr.f32.gmra.mrb[0].mxu0 %v2902
    %v3261 = vpop.f32.mrb[0].mxu0
    %v3262 = vadd.f32 %v3192, %v3261
    %v3263 = vpop.f32.mrb[0].mxu0
    %3264 = vdwg.mxu0
    %v3265 = vld [vmem:[%s18] sm:$0x1]
    %v3267 = vlaneseq
    %v3268 = vshrl.u32 %v3267, 7
    %v3269 = vsub.s32 0, %v3268
    %v3270 = vrot.slane %v3265, %v3269
    %v3272 = vadd.f32 %v3262, %v3270
    %3273 = vst [vmem:[#allocation22] sm:$0xff] %v3272
    // Predicated region
    $region130: #{tpu_custom_call.1} parent=1 // pred_check
      _
    $region131: #{tpu_custom_call.1} parent=1 // pred_check_branch
      %3275 = sbr.rel (0) target = $region133
    $region132: #{tpu_custom_call.1} parent=1 // pred_region
      %s3277 = ssub.s32 128, 128
      %3278 = vsyncadd [#allocation6], %s3277
      %s3280 = sshll.u32 [#allocation22], 4
      %s3281 = int_to_ptr.vmem [resolvable:$true] %s3280
      %3283 = dma.vmem_to_hbm [thread:$0]  %s3281, 128, %s21, [#allocation6]
    $region133: #{tpu_custom_call.1} parent=1 // pred_fallthru
      _
    // Predicated region
    $region134: #{tpu_custom_call.1} parent=1 // pred_check
      _
    $region135: #{tpu_custom_call.1} parent=1 // pred_check_branch
      %3285 = sbr.rel (0) target = $region137
    $region136: #{tpu_custom_call.1} parent=1 // pred_region
      %s3287 = ssub.s32 16, 16
      %3288 = vsyncadd [#allocation24], %s3287
      %s3290 = sshll.u32 [#allocation23], 4
      %s3291 = int_to_ptr.vmem [resolvable:$true] %s3290
      %3293 = dma.vmem_to_hbm [thread:$0]  %s3291, 16, %s22, [#allocation24]
    $region137: #{tpu_custom_call.1} parent=1 // pred_fallthru
      _
    // Predicated region
    $region138: #{tpu_custom_call.1} parent=1 // pred_check
      _
    $region139: #{tpu_custom_call.1} parent=1 // pred_check_branch
      %3295 = sbr.rel (0) target = $region141
    $region140: #{tpu_custom_call.1} parent=1 // pred_region
      %s3297 = ssub.s32 16, 16
      %3298 = vsyncadd [#allocation24], %s3297
      %s3300 = sshll.u32 [#allocation25], 4
      %s3301 = int_to_ptr.vmem [resolvable:$true] %s3300
      %3303 = dma.vmem_to_hbm [thread:$0]  %s3301, 16, %s23, [#allocation24]
    $region141: #{tpu_custom_call.1} parent=1 // pred_fallthru
      _
    // Predicated region
    $region142: #{tpu_custom_call.1} parent=1 // pred_check
      _
    $region143: #{tpu_custom_call.1} parent=1 // pred_check_branch
      %3305 = sbr.rel (0) target = $region145
    $region144: #{tpu_custom_call.1} parent=1 // pred_region
      %3306 = dma.done [#allocation6], 128
    $region145: #{tpu_custom_call.1} parent=1 // pred_fallthru
      _
    // Predicated region
    $region146: #{tpu_custom_call.1} parent=1 // pred_check
      _
    $region147: #{tpu_custom_call.1} parent=1 // pred_check_branch
      %3308 = sbr.rel (0) target = $region149
    $region148: #{tpu_custom_call.1} parent=1 // pred_region
      %3309 = dma.done [#allocation24], 16
    $region149: #{tpu_custom_call.1} parent=1 // pred_fallthru
      _
    // Predicated region
    $region150: #{tpu_custom_call.1} parent=1 // pred_check
      _
    $region151: #{tpu_custom_call.1} parent=1 // pred_check_branch
      %3311 = sbr.rel (0) target = $region153
    $region152: #{tpu_custom_call.1} parent=1 // pred_region
      %3312 = dma.done [#allocation24], 16
    $region153: #{tpu_custom_call.1} parent=1 // pred_fallthru
      _
    %3313 = vsyncpa [#allocation5], 1
    %3314 = vsyncpa [#allocation8], 1
    %3315 = vsyncpa [#allocation11], 1
    %3316 = vsyncpa [#allocation14], 1
    %3317 = vsyncpa [#allocation17], 1
    %3318 = vsyncpa [#allocation20], 1
    %3319 = vsyncpa [#allocation6], 1
    %3320 = vsyncpa [#allocation24], 1

</llo_original>
